<compile_context>
chip_gen: v5e
topology: v5e:2x2
jax: 0.10.0
libtpu: 0.0.40
codegen_flags: <defaults>
</compile_context>

<pallas_src>
import functools

import jax
import jax.numpy as jnp
from jax.experimental import pallas as pl
from jax.experimental.pallas import tpu as pltpu


def lawin_attn_kernel(q_ref, c_ref, pmw_ref, pmb_ref, wgp_ref, bgp_ref,
                      wth_ref, bth_ref, wout_ref, bns_ref, bnb_ref,
                      out_ref, *, head):
    qry = q_ref[0]                      # (N, C)  query tokens
    ctx = c_ref[0]                      # (N, C)  context tokens
    N, C = ctx.shape
    cg = C // head                      # channels per position-mixing group
    inter = wth_ref.shape[1]            # inter_channels
    dim = inter // head                 # per-head dim
    scale = float(dim) ** -0.5

    # ---- fused g / phi projection of the (position-mixed) context -----------
    # (ctx + concat_h(mix_h)) @ W_gphi  ==  ctx @ W_gphi + sum_h mix_h @ W_gphi[rows_h]
    gp = jnp.dot(ctx, wgp_ref[...], preferred_element_type=jnp.float32) + bgp_ref[...]
    for h in range(head):               # static, small head loop
        grp = ctx[:, h * cg:(h + 1) * cg]                                   # (N, cg)
        mix = jnp.dot(pmw_ref[h], grp,
                      preferred_element_type=jnp.float32) + pmb_ref[h]      # (N, cg)
        gp = gp + jnp.dot(mix, wgp_ref[h * cg:(h + 1) * cg, :],
                          preferred_element_type=jnp.float32)               # (N, 2*inter)

    g_x = gp[:, :inter]                 # (N, inter)
    phi = gp[:, inter:]                 # (N, inter)

    # ---- theta projection of the query (1/sqrt(dim) scale folded in) --------
    th = (jnp.dot(qry, wth_ref[...], preferred_element_type=jnp.float32)
          + bth_ref[...]) * scale                                           # (N, inter)

    # ---- per-head attention; head outputs accumulate directly into conv_out -
    o = jnp.zeros((N, C), dtype=jnp.float32)
    for h in range(head):
        th_h = th[:, h * dim:(h + 1) * dim]                                 # (N, dim)
        ph_h = phi[:, h * dim:(h + 1) * dim]                                # (N, dim)
        g_h = g_x[:, h * dim:(h + 1) * dim]                                 # (N, dim)
        s = jax.lax.dot_general(th_h, ph_h, (((1,), (1,)), ((), ())),
                                preferred_element_type=jnp.float32)          # (N, N)
        s = s - jnp.max(s, axis=-1, keepdims=True)
        e = jnp.exp(s)
        inv = 1.0 / jnp.sum(e, axis=-1, keepdims=True)                      # one recip / row
        p = e * inv
        y_h = jnp.dot(p, g_h, preferred_element_type=jnp.float32)           # (N, dim)
        o = o + jnp.dot(y_h, wout_ref[h * dim:(h + 1) * dim, :],
                        preferred_element_type=jnp.float32)                  # (N, C)

    # ---- folded eval-mode BatchNorm + residual with the query ---------------
    out_ref[0] = qry + o * bns_ref[...] + bnb_ref[...]


def lawin_attn_forward(query, context, params, head):
    """query/context: (B, C, H, W) float32; returns (B, C, H, W)."""
    B, C, H, W = query.shape
    N = H * W
    inter = params['w_th'].shape[1]

    # token-major layout: (B, N, C) with channels on the lane axis
    q_t = query.reshape(B, C, N).transpose(0, 2, 1)
    c_t = context.reshape(B, C, N).transpose(0, 2, 1)

    def full_spec(shape):
        nd = len(shape)
        return pl.BlockSpec(shape, lambda b, nd=nd: (0,) * nd)

    in_specs = [
        pl.BlockSpec((1, N, C), lambda b: (b, 0, 0)),          # query tokens
        pl.BlockSpec((1, N, C), lambda b: (b, 0, 0)),          # context tokens
        full_spec((head, N, N)),                               # position-mixing weights
        full_spec((head, N, 1)),                               # position-mixing biases
        full_spec((C, 2 * inter)), full_spec((1, 2 * inter)),  # fused g|phi 1x1 conv
        full_spec((C, inter)), full_spec((1, inter)),          # theta 1x1 conv
        full_spec((inter, C)),                                 # conv_out 1x1 (no bias)
        full_spec((1, C)), full_spec((1, C)),                  # folded BN scale / shift
    ]
    out_spec = pl.BlockSpec((1, N, C), lambda b: (b, 0, 0))

    out_t = pl.pallas_call(
        functools.partial(lawin_attn_kernel, head=head),
        out_shape=jax.ShapeDtypeStruct((B, N, C), jnp.float32),
        grid_spec=pltpu.PrefetchScalarGridSpec(
            num_scalar_prefetch=0,
            grid=(B,),
            in_specs=in_specs,
            out_specs=out_spec,
        ),
        compiler_params=pltpu.CompilerParams(dimension_semantics=("parallel",)),
    )(q_t, c_t, params['pm_w'], params['pm_b'], params['w_gp'], params['b_gp'],
      params['w_th'], params['b_th'], params['w_out'],
      params['bn_scale'], params['bn_shift'])

    return out_t.transpose(0, 2, 1).reshape(B, C, H, W)


def lawin_attn_reference(query, context, params, head):
    """Pure-JAX mirror of the torch forward (eval-mode BatchNorm)."""
    B, C, H, W = context.shape
    N = H * W
    inter = params['w_th'].shape[1]
    dim = inter // head
    cg = C // head

    ctx = context.reshape(B, C, N)
    parts = []
    for h in range(head):
        grp = ctx[:, h * cg:(h + 1) * cg, :]                                # (B, cg, N)
        parts.append(jnp.einsum('bcn,mn->bcm', grp, params['pm_w'][h])
                     + params['pm_b'][h][:, 0][None, None, :])
    ctx2 = ctx + jnp.concatenate(parts, axis=1)                             # (B, C, N)

    wg, wphi = params['w_gp'][:, :inter], params['w_gp'][:, inter:]
    bg, bphi = params['b_gp'][0, :inter], params['b_gp'][0, inter:]
    qf = query.reshape(B, C, N)

    g_x = jnp.einsum('bcn,ci->bin', ctx2, wg) + bg[None, :, None]           # (B, inter, N)
    phi_x = jnp.einsum('bcn,ci->bin', ctx2, wphi) + bphi[None, :, None]
    th_x = jnp.einsum('bcn,ci->bin', qf, params['w_th']) + params['b_th'][0][None, :, None]

    g_h = g_x.reshape(B, head, dim, N).transpose(0, 1, 3, 2)                # (B, h, N, d)
    th_h = th_x.reshape(B, head, dim, N).transpose(0, 1, 3, 2)              # (B, h, N, d)
    phi_h = phi_x.reshape(B, head, dim, N)                                  # (B, h, d, N)

    pw = jnp.einsum('bhnd,bhdm->bhnm', th_h, phi_h) / (dim ** 0.5)
    pw = jax.nn.softmax(pw, axis=-1)
    y = jnp.einsum('bhnm,bhmd->bhnd', pw, g_h)                              # (B, h, N, d)
    y = y.transpose(0, 2, 1, 3).reshape(B, N, inter).transpose(0, 2, 1)     # (B, inter, N)

    o = jnp.einsum('bin,ic->bcn', y, params['w_out'])
    o = o * params['bn_scale'][0][None, :, None] + params['bn_shift'][0][None, :, None]
    return (qf + o).reshape(B, C, H, W)


if __name__ == "__main__":
    # LawinAttn(in_ch=64, head=4, patch_size=8, reduction=2), small shapes.
    B, head = 2, 4
    in_ch, reduction, patch = 64, 2, 8
    H = W = patch                      # position_mixing requires H*W == patch_size**2
    N = H * W
    C = in_ch
    inter = max(in_ch // reduction, 1)

    key = jax.random.PRNGKey(0)
    ks = jax.random.split(key, 16)

    def rnd(k, shape, scale=0.05):
        return jax.random.normal(k, shape, dtype=jnp.float32) * scale

    # Eval-mode BatchNorm folded into a per-channel scale/shift.
    eps = 1e-5
    gamma = 1.0 + rnd(ks[8], (C,), 0.1)
    beta = rnd(ks[9], (C,), 0.1)
    r_mean = rnd(ks[10], (C,), 0.1)
    r_var = jnp.abs(rnd(ks[11], (C,), 0.1)) + 1.0
    bn_scale = gamma / jnp.sqrt(r_var + eps)
    bn_shift = beta - r_mean * bn_scale

    # Linear/conv weights stored pre-transposed for token-major matmuls:
    #   1x1 conv (out, in, 1, 1) -> (in, out); position-mixing Linear kept as
    #   the torch (N_out, N_in) matrix (applied as a left matmul over tokens).
    params = dict(
        pm_w=rnd(ks[0], (head, N, N), 0.05),
        pm_b=rnd(ks[1], (head, N, 1), 0.02),
        w_gp=rnd(ks[2], (C, 2 * inter), 0.05),      # [g | phi] fused
        b_gp=rnd(ks[3], (1, 2 * inter), 0.02),
        w_th=rnd(ks[4], (C, inter), 0.05),
        b_th=rnd(ks[5], (1, inter), 0.02),
        w_out=rnd(ks[6], (inter, C), 0.05),         # conv_out (bias-free)
        bn_scale=bn_scale.reshape(1, C),
        bn_shift=bn_shift.reshape(1, C),
    )

    query = jax.random.normal(ks[12], (B, C, H, W), dtype=jnp.float32)
    context = jax.random.normal(ks[13], (B, C, H, W), dtype=jnp.float32)

    out = jax.block_until_ready(lawin_attn_forward(query, context, params, head))
    ref = lawin_attn_reference(query, context, params, head)

    assert out.shape == (B, C, H, W)
    max_err = float(jnp.max(jnp.abs(out - ref)))
    assert jnp.allclose(out, ref, atol=1e-3, rtol=1e-3), max_err
    print("KERNEL_OK")
</pallas_src>

<mosaic_0001>
module attributes {stable_mosaic.version = 11 : i64} {
  func.func @lawin_attn_kernel(%arg0: i32, %arg1: memref<1x64x64xf32, #tpu.memory_space<vmem>>, %arg2: memref<1x64x64xf32, #tpu.memory_space<vmem>>, %arg3: memref<4x64x64xf32, #tpu.memory_space<vmem>>, %arg4: memref<4x64x1xf32, #tpu.memory_space<vmem>>, %arg5: memref<64x64xf32, #tpu.memory_space<vmem>>, %arg6: memref<1x64xf32, #tpu.memory_space<vmem>>, %arg7: memref<64x32xf32, #tpu.memory_space<vmem>>, %arg8: memref<1x32xf32, #tpu.memory_space<vmem>>, %arg9: memref<32x64xf32, #tpu.memory_space<vmem>>, %arg10: memref<1x64xf32, #tpu.memory_space<vmem>>, %arg11: memref<1x64xf32, #tpu.memory_space<vmem>>, %arg12: memref<1x64x64xf32, #tpu.memory_space<vmem>>) attributes {dimension_semantics = [#tpu.dimension_semantics<parallel>], iteration_bounds = array<i64: 2>, scalar_prefetch = 0 : i64, scratch_operands = 0 : i64, tpu.core_type = #tpu.core_type<tc>, window_params = [{transform_indices = @transform_0, window_bounds = array<i64: 1, 64, 64>}, {transform_indices = @transform_1, window_bounds = array<i64: 1, 64, 64>}, {pipeline_mode = #tpu.pipeline_mode<synchronous>, transform_indices = @transform_2, window_bounds = array<i64: 4, 64, 64>}, {pipeline_mode = #tpu.pipeline_mode<synchronous>, transform_indices = @transform_3, window_bounds = array<i64: 4, 64, 1>}, {pipeline_mode = #tpu.pipeline_mode<synchronous>, transform_indices = @transform_4, window_bounds = array<i64: 64, 64>}, {pipeline_mode = #tpu.pipeline_mode<synchronous>, transform_indices = @transform_5, window_bounds = array<i64: 1, 64>}, {pipeline_mode = #tpu.pipeline_mode<synchronous>, transform_indices = @transform_6, window_bounds = array<i64: 64, 32>}, {pipeline_mode = #tpu.pipeline_mode<synchronous>, transform_indices = @transform_7, window_bounds = array<i64: 1, 32>}, {pipeline_mode = #tpu.pipeline_mode<synchronous>, transform_indices = @transform_8, window_bounds = array<i64: 32, 64>}, {pipeline_mode = #tpu.pipeline_mode<synchronous>, transform_indices = @transform_9, window_bounds = array<i64: 1, 64>}, {pipeline_mode = #tpu.pipeline_mode<synchronous>, transform_indices = @transform_10, window_bounds = array<i64: 1, 64>}, {transform_indices = @transform_11, window_bounds = array<i64: 1, 64, 64>}]} {
    %c0 = arith.constant 0 : index
    %c0_0 = arith.constant 0 : index
    %c0_1 = arith.constant 0 : index
    %0 = vector.load %arg1[%c0, %c0_0, %c0_1] : memref<1x64x64xf32, #tpu.memory_space<vmem>>, vector<1x64x64xf32>
    %1 = vector.shape_cast %0 : vector<1x64x64xf32> to vector<64x64xf32>
    %c0_2 = arith.constant 0 : index
    %c0_3 = arith.constant 0 : index
    %c0_4 = arith.constant 0 : index
    %2 = vector.load %arg2[%c0_2, %c0_3, %c0_4] : memref<1x64x64xf32, #tpu.memory_space<vmem>>, vector<1x64x64xf32>
    %3 = vector.shape_cast %2 : vector<1x64x64xf32> to vector<64x64xf32>
    %c0_5 = arith.constant 0 : index
    %c0_6 = arith.constant 0 : index
    %4 = vector.load %arg5[%c0_5, %c0_6] : memref<64x64xf32, #tpu.memory_space<vmem>>, vector<64x64xf32>
    %cst = arith.constant dense<0.000000e+00> : vector<64x64xf32>
    %5 = tpu.matmul %3, %4, %cst {dimension_numbers = #tpu.dot_dimension_numbers<[1], [0], [0], [1], [0, 0, 1, 1], [], []>} : vector<64x64xf32>, vector<64x64xf32>, vector<64x64xf32> -> vector<64x64xf32>
    %c0_7 = arith.constant 0 : index
    %c0_8 = arith.constant 0 : index
    %6 = vector.load %arg6[%c0_7, %c0_8] : memref<1x64xf32, #tpu.memory_space<vmem>>, vector<1x64xf32>
    %7 = vector.broadcast %6 : vector<1x64xf32> to vector<64x64xf32>
    %8 = arith.addf %5, %7 : vector<64x64xf32>
    %9 = vector.extract_strided_slice %3 {offsets = [0, 0], sizes = [64, 16], strides = [1, 1]} : vector<64x64xf32> to vector<64x16xf32>
    %c0_9 = arith.constant 0 : index
    %c0_10 = arith.constant 0 : index
    %c0_11 = arith.constant 0 : index
    %10 = vector.load %arg3[%c0_9, %c0_10, %c0_11] : memref<4x64x64xf32, #tpu.memory_space<vmem>>, vector<1x64x64xf32>
    %11 = vector.shape_cast %10 : vector<1x64x64xf32> to vector<64x64xf32>
    %cst_12 = arith.constant dense<0.000000e+00> : vector<64x16xf32>
    %12 = tpu.matmul %11, %9, %cst_12 {dimension_numbers = #tpu.dot_dimension_numbers<[1], [0], [0], [1], [0, 0, 1, 1], [], []>} : vector<64x64xf32>, vector<64x16xf32>, vector<64x16xf32> -> vector<64x16xf32>
    %c0_13 = arith.constant 0 : index
    %c0_14 = arith.constant 0 : index
    %c0_15 = arith.constant 0 : index
    %13 = vector.load %arg4[%c0_13, %c0_14, %c0_15] : memref<4x64x1xf32, #tpu.memory_space<vmem>>, vector<1x64x1xf32>
    %14 = vector.shape_cast %13 : vector<1x64x1xf32> to vector<64x1xf32>
    %15 = vector.broadcast %14 : vector<64x1xf32> to vector<64x16xf32>
    %16 = arith.addf %12, %15 : vector<64x16xf32>
    %c0_16 = arith.constant 0 : index
    %c0_17 = arith.constant 0 : index
    %17 = vector.load %arg5[%c0_16, %c0_17] : memref<64x64xf32, #tpu.memory_space<vmem>>, vector<16x64xf32>
    %cst_18 = arith.constant dense<0.000000e+00> : vector<64x64xf32>
    %18 = tpu.matmul %16, %17, %cst_18 {dimension_numbers = #tpu.dot_dimension_numbers<[1], [0], [0], [1], [0, 0, 1, 1], [], []>} : vector<64x16xf32>, vector<16x64xf32>, vector<64x64xf32> -> vector<64x64xf32>
    %19 = arith.addf %8, %18 : vector<64x64xf32>
    %20 = vector.extract_strided_slice %3 {offsets = [0, 16], sizes = [64, 16], strides = [1, 1]} : vector<64x64xf32> to vector<64x16xf32>
    %c1 = arith.constant 1 : index
    %c0_19 = arith.constant 0 : index
    %c0_20 = arith.constant 0 : index
    %21 = vector.load %arg3[%c1, %c0_19, %c0_20] : memref<4x64x64xf32, #tpu.memory_space<vmem>>, vector<1x64x64xf32>
    %22 = vector.shape_cast %21 : vector<1x64x64xf32> to vector<64x64xf32>
    %cst_21 = arith.constant dense<0.000000e+00> : vector<64x16xf32>
    %23 = tpu.matmul %22, %20, %cst_21 {dimension_numbers = #tpu.dot_dimension_numbers<[1], [0], [0], [1], [0, 0, 1, 1], [], []>} : vector<64x64xf32>, vector<64x16xf32>, vector<64x16xf32> -> vector<64x16xf32>
    %c1_22 = arith.constant 1 : index
    %c0_23 = arith.constant 0 : index
    %c0_24 = arith.constant 0 : index
    %24 = vector.load %arg4[%c1_22, %c0_23, %c0_24] : memref<4x64x1xf32, #tpu.memory_space<vmem>>, vector<1x64x1xf32>
    %25 = vector.shape_cast %24 : vector<1x64x1xf32> to vector<64x1xf32>
    %26 = vector.broadcast %25 : vector<64x1xf32> to vector<64x16xf32>
    %27 = arith.addf %23, %26 : vector<64x16xf32>
    %c16 = arith.constant 16 : index
    %c0_25 = arith.constant 0 : index
    %28 = vector.load %arg5[%c16, %c0_25] : memref<64x64xf32, #tpu.memory_space<vmem>>, vector<16x64xf32>
    %cst_26 = arith.constant dense<0.000000e+00> : vector<64x64xf32>
    %29 = tpu.matmul %27, %28, %cst_26 {dimension_numbers = #tpu.dot_dimension_numbers<[1], [0], [0], [1], [0, 0, 1, 1], [], []>} : vector<64x16xf32>, vector<16x64xf32>, vector<64x64xf32> -> vector<64x64xf32>
    %30 = arith.addf %19, %29 : vector<64x64xf32>
    %31 = vector.extract_strided_slice %3 {offsets = [0, 32], sizes = [64, 16], strides = [1, 1]} : vector<64x64xf32> to vector<64x16xf32>
    %c2 = arith.constant 2 : index
    %c0_27 = arith.constant 0 : index
    %c0_28 = arith.constant 0 : index
    %32 = vector.load %arg3[%c2, %c0_27, %c0_28] : memref<4x64x64xf32, #tpu.memory_space<vmem>>, vector<1x64x64xf32>
    %33 = vector.shape_cast %32 : vector<1x64x64xf32> to vector<64x64xf32>
    %cst_29 = arith.constant dense<0.000000e+00> : vector<64x16xf32>
    %34 = tpu.matmul %33, %31, %cst_29 {dimension_numbers = #tpu.dot_dimension_numbers<[1], [0], [0], [1], [0, 0, 1, 1], [], []>} : vector<64x64xf32>, vector<64x16xf32>, vector<64x16xf32> -> vector<64x16xf32>
    %c2_30 = arith.constant 2 : index
    %c0_31 = arith.constant 0 : index
    %c0_32 = arith.constant 0 : index
    %35 = vector.load %arg4[%c2_30, %c0_31, %c0_32] : memref<4x64x1xf32, #tpu.memory_space<vmem>>, vector<1x64x1xf32>
    %36 = vector.shape_cast %35 : vector<1x64x1xf32> to vector<64x1xf32>
    %37 = vector.broadcast %36 : vector<64x1xf32> to vector<64x16xf32>
    %38 = arith.addf %34, %37 : vector<64x16xf32>
    %c32 = arith.constant 32 : index
    %c0_33 = arith.constant 0 : index
    %39 = vector.load %arg5[%c32, %c0_33] : memref<64x64xf32, #tpu.memory_space<vmem>>, vector<16x64xf32>
    %cst_34 = arith.constant dense<0.000000e+00> : vector<64x64xf32>
    %40 = tpu.matmul %38, %39, %cst_34 {dimension_numbers = #tpu.dot_dimension_numbers<[1], [0], [0], [1], [0, 0, 1, 1], [], []>} : vector<64x16xf32>, vector<16x64xf32>, vector<64x64xf32> -> vector<64x64xf32>
    %41 = arith.addf %30, %40 : vector<64x64xf32>
    %42 = vector.extract_strided_slice %3 {offsets = [0, 48], sizes = [64, 16], strides = [1, 1]} : vector<64x64xf32> to vector<64x16xf32>
    %c3 = arith.constant 3 : index
    %c0_35 = arith.constant 0 : index
    %c0_36 = arith.constant 0 : index
    %43 = vector.load %arg3[%c3, %c0_35, %c0_36] : memref<4x64x64xf32, #tpu.memory_space<vmem>>, vector<1x64x64xf32>
    %44 = vector.shape_cast %43 : vector<1x64x64xf32> to vector<64x64xf32>
    %cst_37 = arith.constant dense<0.000000e+00> : vector<64x16xf32>
    %45 = tpu.matmul %44, %42, %cst_37 {dimension_numbers = #tpu.dot_dimension_numbers<[1], [0], [0], [1], [0, 0, 1, 1], [], []>} : vector<64x64xf32>, vector<64x16xf32>, vector<64x16xf32> -> vector<64x16xf32>
    %c3_38 = arith.constant 3 : index
    %c0_39 = arith.constant 0 : index
    %c0_40 = arith.constant 0 : index
    %46 = vector.load %arg4[%c3_38, %c0_39, %c0_40] : memref<4x64x1xf32, #tpu.memory_space<vmem>>, vector<1x64x1xf32>
    %47 = vector.shape_cast %46 : vector<1x64x1xf32> to vector<64x1xf32>
    %48 = vector.broadcast %47 : vector<64x1xf32> to vector<64x16xf32>
    %49 = arith.addf %45, %48 : vector<64x16xf32>
    %c48 = arith.constant 48 : index
    %c0_41 = arith.constant 0 : index
    %50 = vector.load %arg5[%c48, %c0_41] : memref<64x64xf32, #tpu.memory_space<vmem>>, vector<16x64xf32>
    %cst_42 = arith.constant dense<0.000000e+00> : vector<64x64xf32>
    %51 = tpu.matmul %49, %50, %cst_42 {dimension_numbers = #tpu.dot_dimension_numbers<[1], [0], [0], [1], [0, 0, 1, 1], [], []>} : vector<64x16xf32>, vector<16x64xf32>, vector<64x64xf32> -> vector<64x64xf32>
    %52 = arith.addf %41, %51 : vector<64x64xf32>
    %53 = vector.extract_strided_slice %52 {offsets = [0, 0], sizes = [64, 32], strides = [1, 1]} : vector<64x64xf32> to vector<64x32xf32>
    %54 = vector.extract_strided_slice %52 {offsets = [0, 32], sizes = [64, 32], strides = [1, 1]} : vector<64x64xf32> to vector<64x32xf32>
    %c0_43 = arith.constant 0 : index
    %c0_44 = arith.constant 0 : index
    %55 = vector.load %arg7[%c0_43, %c0_44] : memref<64x32xf32, #tpu.memory_space<vmem>>, vector<64x32xf32>
    %cst_45 = arith.constant dense<0.000000e+00> : vector<64x32xf32>
    %56 = tpu.matmul %1, %55, %cst_45 {dimension_numbers = #tpu.dot_dimension_numbers<[1], [0], [0], [1], [0, 0, 1, 1], [], []>} : vector<64x64xf32>, vector<64x32xf32>, vector<64x32xf32> -> vector<64x32xf32>
    %c0_46 = arith.constant 0 : index
    %c0_47 = arith.constant 0 : index
    %57 = vector.load %arg8[%c0_46, %c0_47] : memref<1x32xf32, #tpu.memory_space<vmem>>, vector<1x32xf32>
    %58 = vector.broadcast %57 : vector<1x32xf32> to vector<64x32xf32>
    %59 = arith.addf %56, %58 : vector<64x32xf32>
    %cst_48 = arith.constant 0.353553385 : f32
    %60 = vector.broadcast %cst_48 : f32 to vector<64x32xf32>
    %61 = arith.mulf %59, %60 : vector<64x32xf32>
    %cst_49 = arith.constant 0.000000e+00 : f32
    %62 = vector.broadcast %cst_49 : f32 to vector<64x64xf32>
    %63 = vector.extract_strided_slice %61 {offsets = [0, 0], sizes = [64, 8], strides = [1, 1]} : vector<64x32xf32> to vector<64x8xf32>
    %64 = vector.extract_strided_slice %54 {offsets = [0, 0], sizes = [64, 8], strides = [1, 1]} : vector<64x32xf32> to vector<64x8xf32>
    %65 = vector.extract_strided_slice %53 {offsets = [0, 0], sizes = [64, 8], strides = [1, 1]} : vector<64x32xf32> to vector<64x8xf32>
    %cst_50 = arith.constant dense<0.000000e+00> : vector<64x64xf32>
    %66 = tpu.matmul %63, %64, %cst_50 {dimension_numbers = #tpu.dot_dimension_numbers<[1], [1], [0], [0], [0, 0, 1, 0], [], []>} : vector<64x8xf32>, vector<64x8xf32>, vector<64x64xf32> -> vector<64x64xf32>
    %cst_51 = arith.constant dense<0xFF800000> : vector<64xf32>
    %67 = vector.multi_reduction <maximumf>, %66, %cst_51 [1] : vector<64x64xf32> to vector<64xf32>
    %68 = vector.shape_cast %67 : vector<64xf32> to vector<64x1xf32>
    %69 = vector.broadcast %68 : vector<64x1xf32> to vector<64x64xf32>
    %70 = arith.subf %66, %69 : vector<64x64xf32>
    %71 = math.exp %70 : vector<64x64xf32>
    %cst_52 = arith.constant dense<0.000000e+00> : vector<64xf32>
    %72 = vector.multi_reduction <add>, %71, %cst_52 [1] : vector<64x64xf32> to vector<64xf32>
    %73 = vector.shape_cast %72 : vector<64xf32> to vector<64x1xf32>
    %cst_53 = arith.constant 1.000000e+00 : f32
    %74 = vector.broadcast %cst_53 : f32 to vector<64x1xf32>
    %75 = arith.divf %74, %73 : vector<64x1xf32>
    %76 = vector.broadcast %75 : vector<64x1xf32> to vector<64x64xf32>
    %77 = arith.mulf %71, %76 : vector<64x64xf32>
    %cst_54 = arith.constant dense<0.000000e+00> : vector<64x8xf32>
    %78 = tpu.matmul %77, %65, %cst_54 {dimension_numbers = #tpu.dot_dimension_numbers<[1], [0], [0], [1], [0, 0, 1, 1], [], []>} : vector<64x64xf32>, vector<64x8xf32>, vector<64x8xf32> -> vector<64x8xf32>
    %c0_55 = arith.constant 0 : index
    %c0_56 = arith.constant 0 : index
    %79 = vector.load %arg9[%c0_55, %c0_56] : memref<32x64xf32, #tpu.memory_space<vmem>>, vector<8x64xf32>
    %cst_57 = arith.constant dense<0.000000e+00> : vector<64x64xf32>
    %80 = tpu.matmul %78, %79, %cst_57 {dimension_numbers = #tpu.dot_dimension_numbers<[1], [0], [0], [1], [0, 0, 1, 1], [], []>} : vector<64x8xf32>, vector<8x64xf32>, vector<64x64xf32> -> vector<64x64xf32>
    %81 = arith.addf %62, %80 : vector<64x64xf32>
    %82 = vector.extract_strided_slice %61 {offsets = [0, 8], sizes = [64, 8], strides = [1, 1]} : vector<64x32xf32> to vector<64x8xf32>
    %83 = vector.extract_strided_slice %54 {offsets = [0, 8], sizes = [64, 8], strides = [1, 1]} : vector<64x32xf32> to vector<64x8xf32>
    %84 = vector.extract_strided_slice %53 {offsets = [0, 8], sizes = [64, 8], strides = [1, 1]} : vector<64x32xf32> to vector<64x8xf32>
    %cst_58 = arith.constant dense<0.000000e+00> : vector<64x64xf32>
    %85 = tpu.matmul %82, %83, %cst_58 {dimension_numbers = #tpu.dot_dimension_numbers<[1], [1], [0], [0], [0, 0, 1, 0], [], []>} : vector<64x8xf32>, vector<64x8xf32>, vector<64x64xf32> -> vector<64x64xf32>
    %cst_59 = arith.constant dense<0xFF800000> : vector<64xf32>
    %86 = vector.multi_reduction <maximumf>, %85, %cst_59 [1] : vector<64x64xf32> to vector<64xf32>
    %87 = vector.shape_cast %86 : vector<64xf32> to vector<64x1xf32>
    %88 = vector.broadcast %87 : vector<64x1xf32> to vector<64x64xf32>
    %89 = arith.subf %85, %88 : vector<64x64xf32>
    %90 = math.exp %89 : vector<64x64xf32>
    %cst_60 = arith.constant dense<0.000000e+00> : vector<64xf32>
    %91 = vector.multi_reduction <add>, %90, %cst_60 [1] : vector<64x64xf32> to vector<64xf32>
    %92 = vector.shape_cast %91 : vector<64xf32> to vector<64x1xf32>
    %cst_61 = arith.constant 1.000000e+00 : f32
    %93 = vector.broadcast %cst_61 : f32 to vector<64x1xf32>
    %94 = arith.divf %93, %92 : vector<64x1xf32>
    %95 = vector.broadcast %94 : vector<64x1xf32> to vector<64x64xf32>
    %96 = arith.mulf %90, %95 : vector<64x64xf32>
    %cst_62 = arith.constant dense<0.000000e+00> : vector<64x8xf32>
    %97 = tpu.matmul %96, %84, %cst_62 {dimension_numbers = #tpu.dot_dimension_numbers<[1], [0], [0], [1], [0, 0, 1, 1], [], []>} : vector<64x64xf32>, vector<64x8xf32>, vector<64x8xf32> -> vector<64x8xf32>
    %c8 = arith.constant 8 : index
    %c0_63 = arith.constant 0 : index
    %98 = vector.load %arg9[%c8, %c0_63] : memref<32x64xf32, #tpu.memory_space<vmem>>, vector<8x64xf32>
    %cst_64 = arith.constant dense<0.000000e+00> : vector<64x64xf32>
    %99 = tpu.matmul %97, %98, %cst_64 {dimension_numbers = #tpu.dot_dimension_numbers<[1], [0], [0], [1], [0, 0, 1, 1], [], []>} : vector<64x8xf32>, vector<8x64xf32>, vector<64x64xf32> -> vector<64x64xf32>
    %100 = arith.addf %81, %99 : vector<64x64xf32>
    %101 = vector.extract_strided_slice %61 {offsets = [0, 16], sizes = [64, 8], strides = [1, 1]} : vector<64x32xf32> to vector<64x8xf32>
    %102 = vector.extract_strided_slice %54 {offsets = [0, 16], sizes = [64, 8], strides = [1, 1]} : vector<64x32xf32> to vector<64x8xf32>
    %103 = vector.extract_strided_slice %53 {offsets = [0, 16], sizes = [64, 8], strides = [1, 1]} : vector<64x32xf32> to vector<64x8xf32>
    %cst_65 = arith.constant dense<0.000000e+00> : vector<64x64xf32>
    %104 = tpu.matmul %101, %102, %cst_65 {dimension_numbers = #tpu.dot_dimension_numbers<[1], [1], [0], [0], [0, 0, 1, 0], [], []>} : vector<64x8xf32>, vector<64x8xf32>, vector<64x64xf32> -> vector<64x64xf32>
    %cst_66 = arith.constant dense<0xFF800000> : vector<64xf32>
    %105 = vector.multi_reduction <maximumf>, %104, %cst_66 [1] : vector<64x64xf32> to vector<64xf32>
    %106 = vector.shape_cast %105 : vector<64xf32> to vector<64x1xf32>
    %107 = vector.broadcast %106 : vector<64x1xf32> to vector<64x64xf32>
    %108 = arith.subf %104, %107 : vector<64x64xf32>
    %109 = math.exp %108 : vector<64x64xf32>
    %cst_67 = arith.constant dense<0.000000e+00> : vector<64xf32>
    %110 = vector.multi_reduction <add>, %109, %cst_67 [1] : vector<64x64xf32> to vector<64xf32>
    %111 = vector.shape_cast %110 : vector<64xf32> to vector<64x1xf32>
    %cst_68 = arith.constant 1.000000e+00 : f32
    %112 = vector.broadcast %cst_68 : f32 to vector<64x1xf32>
    %113 = arith.divf %112, %111 : vector<64x1xf32>
    %114 = vector.broadcast %113 : vector<64x1xf32> to vector<64x64xf32>
    %115 = arith.mulf %109, %114 : vector<64x64xf32>
    %cst_69 = arith.constant dense<0.000000e+00> : vector<64x8xf32>
    %116 = tpu.matmul %115, %103, %cst_69 {dimension_numbers = #tpu.dot_dimension_numbers<[1], [0], [0], [1], [0, 0, 1, 1], [], []>} : vector<64x64xf32>, vector<64x8xf32>, vector<64x8xf32> -> vector<64x8xf32>
    %c16_70 = arith.constant 16 : index
    %c0_71 = arith.constant 0 : index
    %117 = vector.load %arg9[%c16_70, %c0_71] : memref<32x64xf32, #tpu.memory_space<vmem>>, vector<8x64xf32>
    %cst_72 = arith.constant dense<0.000000e+00> : vector<64x64xf32>
    %118 = tpu.matmul %116, %117, %cst_72 {dimension_numbers = #tpu.dot_dimension_numbers<[1], [0], [0], [1], [0, 0, 1, 1], [], []>} : vector<64x8xf32>, vector<8x64xf32>, vector<64x64xf32> -> vector<64x64xf32>
    %119 = arith.addf %100, %118 : vector<64x64xf32>
    %120 = vector.extract_strided_slice %61 {offsets = [0, 24], sizes = [64, 8], strides = [1, 1]} : vector<64x32xf32> to vector<64x8xf32>
    %121 = vector.extract_strided_slice %54 {offsets = [0, 24], sizes = [64, 8], strides = [1, 1]} : vector<64x32xf32> to vector<64x8xf32>
    %122 = vector.extract_strided_slice %53 {offsets = [0, 24], sizes = [64, 8], strides = [1, 1]} : vector<64x32xf32> to vector<64x8xf32>
    %cst_73 = arith.constant dense<0.000000e+00> : vector<64x64xf32>
    %123 = tpu.matmul %120, %121, %cst_73 {dimension_numbers = #tpu.dot_dimension_numbers<[1], [1], [0], [0], [0, 0, 1, 0], [], []>} : vector<64x8xf32>, vector<64x8xf32>, vector<64x64xf32> -> vector<64x64xf32>
    %cst_74 = arith.constant dense<0xFF800000> : vector<64xf32>
    %124 = vector.multi_reduction <maximumf>, %123, %cst_74 [1] : vector<64x64xf32> to vector<64xf32>
    %125 = vector.shape_cast %124 : vector<64xf32> to vector<64x1xf32>
    %126 = vector.broadcast %125 : vector<64x1xf32> to vector<64x64xf32>
    %127 = arith.subf %123, %126 : vector<64x64xf32>
    %128 = math.exp %127 : vector<64x64xf32>
    %cst_75 = arith.constant dense<0.000000e+00> : vector<64xf32>
    %129 = vector.multi_reduction <add>, %128, %cst_75 [1] : vector<64x64xf32> to vector<64xf32>
    %130 = vector.shape_cast %129 : vector<64xf32> to vector<64x1xf32>
    %cst_76 = arith.constant 1.000000e+00 : f32
    %131 = vector.broadcast %cst_76 : f32 to vector<64x1xf32>
    %132 = arith.divf %131, %130 : vector<64x1xf32>
    %133 = vector.broadcast %132 : vector<64x1xf32> to vector<64x64xf32>
    %134 = arith.mulf %128, %133 : vector<64x64xf32>
    %cst_77 = arith.constant dense<0.000000e+00> : vector<64x8xf32>
    %135 = tpu.matmul %134, %122, %cst_77 {dimension_numbers = #tpu.dot_dimension_numbers<[1], [0], [0], [1], [0, 0, 1, 1], [], []>} : vector<64x64xf32>, vector<64x8xf32>, vector<64x8xf32> -> vector<64x8xf32>
    %c24 = arith.constant 24 : index
    %c0_78 = arith.constant 0 : index
    %136 = vector.load %arg9[%c24, %c0_78] : memref<32x64xf32, #tpu.memory_space<vmem>>, vector<8x64xf32>
    %cst_79 = arith.constant dense<0.000000e+00> : vector<64x64xf32>
    %137 = tpu.matmul %135, %136, %cst_79 {dimension_numbers = #tpu.dot_dimension_numbers<[1], [0], [0], [1], [0, 0, 1, 1], [], []>} : vector<64x8xf32>, vector<8x64xf32>, vector<64x64xf32> -> vector<64x64xf32>
    %138 = arith.addf %119, %137 : vector<64x64xf32>
    %c0_80 = arith.constant 0 : index
    %c0_81 = arith.constant 0 : index
    %139 = vector.load %arg10[%c0_80, %c0_81] : memref<1x64xf32, #tpu.memory_space<vmem>>, vector<1x64xf32>
    %140 = vector.broadcast %139 : vector<1x64xf32> to vector<64x64xf32>
    %141 = arith.mulf %138, %140 : vector<64x64xf32>
    %142 = arith.addf %1, %141 : vector<64x64xf32>
    %c0_82 = arith.constant 0 : index
    %c0_83 = arith.constant 0 : index
    %143 = vector.load %arg11[%c0_82, %c0_83] : memref<1x64xf32, #tpu.memory_space<vmem>>, vector<1x64xf32>
    %144 = vector.broadcast %143 : vector<1x64xf32> to vector<64x64xf32>
    %145 = arith.addf %142, %144 : vector<64x64xf32>
    %c0_84 = arith.constant 0 : index
    %c0_85 = arith.constant 0 : index
    %c0_86 = arith.constant 0 : index
    %146 = vector.load %arg12[%c0_84, %c0_85, %c0_86] : memref<1x64x64xf32, #tpu.memory_space<vmem>>, vector<1x64x64xf32>
    %147 = vector.shape_cast %146 : vector<1x64x64xf32> to vector<64x64xf32>
    %148 = vector.shape_cast %145 : vector<64x64xf32> to vector<1x64x64xf32>
    tpu.vector_store %arg12[%c0_84, %c0_85, %c0_86], %148 {strides = array<i32>} : memref<1x64x64xf32, #tpu.memory_space<vmem>>, vector<1x64x64xf32>,
    return
  }
  func.func @transform_0(%arg0: i32) -> (i32, i32, i32) {
    %c0_i32 = arith.constant 0 : i32
    %c0_i32_0 = arith.constant 0 : i32
    %c0_i32_1 = arith.constant 0 : i32
    return %arg0, %c0_i32, %c0_i32_0 : i32, i32, i32
  }
  func.func @transform_1(%arg0: i32) -> (i32, i32, i32) {
    %c0_i32 = arith.constant 0 : i32
    %c0_i32_0 = arith.constant 0 : i32
    %c0_i32_1 = arith.constant 0 : i32
    return %arg0, %c0_i32, %c0_i32_0 : i32, i32, i32
  }
  func.func @transform_2(%arg0: i32) -> (i32, i32, i32) {
    %c0_i32 = arith.constant 0 : i32
    %c0_i32_0 = arith.constant 0 : i32
    %c0_i32_1 = arith.constant 0 : i32
    %c0_i32_2 = arith.constant 0 : i32
    return %c0_i32, %c0_i32_0, %c0_i32_1 : i32, i32, i32
  }
  func.func @transform_3(%arg0: i32) -> (i32, i32, i32) {
    %c0_i32 = arith.constant 0 : i32
    %c0_i32_0 = arith.constant 0 : i32
    %c0_i32_1 = arith.constant 0 : i32
    %c0_i32_2 = arith.constant 0 : i32
    return %c0_i32, %c0_i32_0, %c0_i32_1 : i32, i32, i32
  }
  func.func @transform_4(%arg0: i32) -> (i32, i32) {
    %c0_i32 = arith.constant 0 : i32
    %c0_i32_0 = arith.constant 0 : i32
    %c0_i32_1 = arith.constant 0 : i32
    return %c0_i32, %c0_i32_0 : i32, i32
  }
  func.func @transform_5(%arg0: i32) -> (i32, i32) {
    %c0_i32 = arith.constant 0 : i32
    %c0_i32_0 = arith.constant 0 : i32
    %c0_i32_1 = arith.constant 0 : i32
    return %c0_i32, %c0_i32_0 : i32, i32
  }
  func.func @transform_6(%arg0: i32) -> (i32, i32) {
    %c0_i32 = arith.constant 0 : i32
    %c0_i32_0 = arith.constant 0 : i32
    %c0_i32_1 = arith.constant 0 : i32
    return %c0_i32, %c0_i32_0 : i32, i32
  }
  func.func @transform_7(%arg0: i32) -> (i32, i32) {
    %c0_i32 = arith.constant 0 : i32
    %c0_i32_0 = arith.constant 0 : i32
    %c0_i32_1 = arith.constant 0 : i32
    return %c0_i32, %c0_i32_0 : i32, i32
  }
  func.func @transform_8(%arg0: i32) -> (i32, i32) {
    %c0_i32 = arith.constant 0 : i32
    %c0_i32_0 = arith.constant 0 : i32
    %c0_i32_1 = arith.constant 0 : i32
    return %c0_i32, %c0_i32_0 : i32, i32
  }
  func.func @transform_9(%arg0: i32) -> (i32, i32) {
    %c0_i32 = arith.constant 0 : i32
    %c0_i32_0 = arith.constant 0 : i32
    %c0_i32_1 = arith.constant 0 : i32
    return %c0_i32, %c0_i32_0 : i32, i32
  }
  func.func @transform_10(%arg0: i32) -> (i32, i32) {
    %c0_i32 = arith.constant 0 : i32
    %c0_i32_0 = arith.constant 0 : i32
    %c0_i32_1 = arith.constant 0 : i32
    return %c0_i32, %c0_i32_0 : i32, i32
  }
  func.func @transform_11(%arg0: i32) -> (i32, i32, i32) {
    %c0_i32 = arith.constant 0 : i32
    %c0_i32_0 = arith.constant 0 : i32
    %c0_i32_1 = arith.constant 0 : i32
    return %arg0, %c0_i32, %c0_i32_0 : i32, i32, i32
  }
}

</mosaic_0001>

<llo_original>
// kernel: tpu_custom_call.1
$region0: #{tpu_custom_call.1}
  #allocation0 [shape = 'u32[]', space=smem, size = 0x4, offset = 0x4, fixed_abs, tag = 'smem constant byte address 0x4 - core index']
  #allocation1 [shape = 'u32[72,128]{1,0:T(1,128)}', space=vmem, size = 0x9000, scoped, tag = 'internal scratch']
  %s0 = inlined_call_operand.hbm [shape: f32[2,64,64], index: 0, kind: input, shape index: {}]
  %s1 = inlined_call_operand.hbm [shape: f32[2,64,64], index: 1, kind: input, shape index: {}]
  %s2 = inlined_call_operand.vmem [shape: f32[4,64,64], index: 2, kind: input, shape index: {}]
  %s3 = inlined_call_operand.vmem [shape: f32[4,64,1], index: 3, kind: input, shape index: {}]
  %s4 = inlined_call_operand.vmem [shape: f32[64,64], index: 4, kind: input, shape index: {}]
  %s5 = inlined_call_operand.vmem [shape: f32[1,64], index: 5, kind: input, shape index: {}]
  %s6 = inlined_call_operand.vmem [shape: f32[64,32], index: 6, kind: input, shape index: {}]
  %s7 = inlined_call_operand.vmem [shape: f32[1,32], index: 7, kind: input, shape index: {}]
  %s8 = inlined_call_operand.vmem [shape: f32[32,64], index: 8, kind: input, shape index: {}]
  %s9 = inlined_call_operand.vmem [shape: f32[1,64], index: 9, kind: input, shape index: {}]
  %s10 = inlined_call_operand.vmem [shape: f32[1,64], index: 10, kind: input, shape index: {}]
  %s11 = inlined_call_operand.hbm [shape: f32[2,64,64], index: 11, kind: output, shape index: {}]
  %s12 = sld [smem:[#allocation0]]
  $region85: #{tpu_custom_call.1} parent=0
    _
  %s14 = ssub.s32 1, %s12
  %s15 = scalar_select 0, %s14, %s12
  $region1: #{tpu_custom_call.1} parent=0
    #allocation2 [shape = 'u8[65536]{0}', space=vmem, size = 0x10000, scoped, tag = 'input window, operand 0']
    #allocation3 [shape = 's32[2]{0}', space=sflag, size = 0x8, scoped, tag = 'scoped memory for tpu_custom_call.1']
    #allocation4 [shape = 's32[2]{0}', space=sflag, size = 0x8, scoped, tag = 'scoped memory for tpu_custom_call.1']
    #allocation5 [shape = 'u8[65536]{0}', space=vmem, size = 0x10000, scoped, tag = 'input window, operand 1']
    #allocation6 [shape = 's32[2]{0}', space=sflag, size = 0x8, scoped, tag = 'scoped memory for tpu_custom_call.1']
    #allocation7 [shape = 'u8[65536]{0}', space=vmem, size = 0x10000, scoped, tag = 'output window, operand 0']
    %16 = vsyncpa [#allocation3], 0
    %s17 = scalar_lea.sflag [#allocation3], 1
    %18 = vsyncpa %s17, 0
    %19 = vsyncpa [#allocation6], 0
    %s20 = scalar_lea.sflag [#allocation6], 1
    %21 = vsyncpa %s20, 0
    %22 = vsyncpa [#allocation4], 0
    %s23 = scalar_lea.sflag [#allocation4], 1
    %24 = vsyncpa %s23, 0
    loop: start=0, step=1, limit=4
    $region2: #{tpu_custom_call.1} parent=1 // loop_pre_header
      _
    $region3: #{tpu_custom_call.1} parent=1 // loop_header
      %s26 = sphi 0, %s30
      %p27 = scmp.ge.s32.totalorder %s26, 4
      %s36 = sphi 0, %s38
      %s39 = sphi 0, %s36
      %s40 = sphi 0, %s39
      %s56 = sphi 0, %s40
      %s62 = sphi 0, %s64
      %s65 = sphi 0, %s62
      %s66 = sphi 0, %s65
      %s82 = sphi 0, %s66
      %s86 = sphi 0, %s86
      %s88 = sphi 0, %s86
      %s89 = sphi 0, %s88
      %s103 = sphi 0, %s89
      %s107 = sphi 0, %s107
      %s109 = sphi 0, %s107
      %s110 = sphi 0, %s109
      %s124 = sphi 0, %s110
      %s128 = sphi 0, %s128
      %s130 = sphi 0, %s128
      %s131 = sphi 0, %s130
      %s145 = sphi 0, %s131
      %s149 = sphi 0, %s149
      %s151 = sphi 0, %s149
      %s152 = sphi 0, %s151
      %s166 = sphi 0, %s152
      %s170 = sphi 0, %s170
      %s172 = sphi 0, %s170
      %s173 = sphi 0, %s172
      %s187 = sphi 0, %s173
      %s191 = sphi 0, %s191
      %s193 = sphi 0, %s191
      %s194 = sphi 0, %s193
      %s208 = sphi 0, %s194
      %s212 = sphi 0, %s212
      %s214 = sphi 0, %s212
      %s215 = sphi 0, %s214
      %s229 = sphi 0, %s215
      %s233 = sphi 0, %s233
      %s235 = sphi 0, %s233
      %s236 = sphi 0, %s235
      %s250 = sphi 0, %s236
      %s254 = sphi 0, %s254
      %s256 = sphi 0, %s254
      %s257 = sphi 0, %s256
      %s271 = sphi 0, %s257
      %s277 = sphi 0, %s279
      %s280 = sphi 0, %s277
      %s281 = sphi 0, %s280
      %s297 = sphi 0, %s281
    $region4: #{tpu_custom_call.1} parent=1 // loop_header_branch
      %29 = sbr.rel (%p27) target = $region8
    $region5: #{tpu_custom_call.1} parent=1 // loop_body
      %s31 = ssub.s32 %s26, 1
      %s32 = ssub.s32 %s26, 2
      %s33 = sadd.s32 %s26, 1
      %s34 = ssub.s32 %s26, %s33
      %p35 = scmp.eq.s32.totalorder %s34, 0
      %s37 = sadd.s32 %s36, 1
      %s38 = scalar_select %p35, %s36, %s37
      %p41 = pneg %p35
      %p42 = scmp.eq.s32.totalorder %s26, 1
      %p43 = por %p41, %p42
      %p44 = scmp.ne.s32.totalorder %s36, %s39
      %p45 = scmp.eq.s32.totalorder %s26, 0
      %p46 = por %p44, %p45
      %p47 = scmp.ne.s32.totalorder %s36, %s39
      %p48 = scmp.eq.s32.totalorder %s31, 1
      %p49 = por %p47, %p48
      %p50 = scmp.ne.s32.totalorder %s39, %s40
      %p51 = scmp.eq.s32.totalorder %s31, 0
      %p52 = por %p50, %p51
      %p53 = scmp.ne.s32.totalorder %s39, %s40
      %p54 = scmp.eq.s32.totalorder %s32, 1
      %p55 = por %p53, %p54
      %p57 = scmp.ne.s32.totalorder %s40, %s56
      %p58 = scmp.eq.s32.totalorder %s32, 0
      %p59 = por %p57, %p58
      %s60 = ssub.s32 %s26, %s33
      %p61 = scmp.eq.s32.totalorder %s60, 0
      %s63 = sadd.s32 %s62, 1
      %s64 = scalar_select %p61, %s62, %s63
      %p67 = pneg %p61
      %p68 = scmp.eq.s32.totalorder %s26, 1
      %p69 = por %p67, %p68
      %p70 = scmp.ne.s32.totalorder %s62, %s65
      %p71 = scmp.eq.s32.totalorder %s26, 0
      %p72 = por %p70, %p71
      %p73 = scmp.ne.s32.totalorder %s62, %s65
      %p74 = scmp.eq.s32.totalorder %s31, 1
      %p75 = por %p73, %p74
      %p76 = scmp.ne.s32.totalorder %s65, %s66
      %p77 = scmp.eq.s32.totalorder %s31, 0
      %p78 = por %p76, %p77
      %p79 = scmp.ne.s32.totalorder %s65, %s66
      %p80 = scmp.eq.s32.totalorder %s32, 1
      %p81 = por %p79, %p80
      %p83 = scmp.ne.s32.totalorder %s66, %s82
      %p84 = scmp.eq.s32.totalorder %s32, 0
      %p85 = por %p83, %p84
      %s87 = sadd.s32 %s86, 1
      %p90 = scmp.eq.s32.totalorder %s26, 1
      %p91 = scmp.ne.s32.totalorder %s86, %s88
      %p92 = scmp.eq.s32.totalorder %s26, 0
      %p93 = por %p91, %p92
      %p94 = scmp.ne.s32.totalorder %s86, %s88
      %p95 = scmp.eq.s32.totalorder %s31, 1
      %p96 = por %p94, %p95
      %p97 = scmp.ne.s32.totalorder %s88, %s89
      %p98 = scmp.eq.s32.totalorder %s31, 0
      %p99 = por %p97, %p98
      %p100 = scmp.ne.s32.totalorder %s88, %s89
      %p101 = scmp.eq.s32.totalorder %s32, 1
      %p102 = por %p100, %p101
      %p104 = scmp.ne.s32.totalorder %s89, %s103
      %p105 = scmp.eq.s32.totalorder %s32, 0
      %p106 = por %p104, %p105
      %s108 = sadd.s32 %s107, 1
      %p111 = scmp.eq.s32.totalorder %s26, 1
      %p112 = scmp.ne.s32.totalorder %s107, %s109
      %p113 = scmp.eq.s32.totalorder %s26, 0
      %p114 = por %p112, %p113
      %p115 = scmp.ne.s32.totalorder %s107, %s109
      %p116 = scmp.eq.s32.totalorder %s31, 1
      %p117 = por %p115, %p116
      %p118 = scmp.ne.s32.totalorder %s109, %s110
      %p119 = scmp.eq.s32.totalorder %s31, 0
      %p120 = por %p118, %p119
      %p121 = scmp.ne.s32.totalorder %s109, %s110
      %p122 = scmp.eq.s32.totalorder %s32, 1
      %p123 = por %p121, %p122
      %p125 = scmp.ne.s32.totalorder %s110, %s124
      %p126 = scmp.eq.s32.totalorder %s32, 0
      %p127 = por %p125, %p126
      %s129 = sadd.s32 %s128, 1
      %p132 = scmp.eq.s32.totalorder %s26, 1
      %p133 = scmp.ne.s32.totalorder %s128, %s130
      %p134 = scmp.eq.s32.totalorder %s26, 0
      %p135 = por %p133, %p134
      %p136 = scmp.ne.s32.totalorder %s128, %s130
      %p137 = scmp.eq.s32.totalorder %s31, 1
      %p138 = por %p136, %p137
      %p139 = scmp.ne.s32.totalorder %s130, %s131
      %p140 = scmp.eq.s32.totalorder %s31, 0
      %p141 = por %p139, %p140
      %p142 = scmp.ne.s32.totalorder %s130, %s131
      %p143 = scmp.eq.s32.totalorder %s32, 1
      %p144 = por %p142, %p143
      %p146 = scmp.ne.s32.totalorder %s131, %s145
      %p147 = scmp.eq.s32.totalorder %s32, 0
      %p148 = por %p146, %p147
      %s150 = sadd.s32 %s149, 1
      %p153 = scmp.eq.s32.totalorder %s26, 1
      %p154 = scmp.ne.s32.totalorder %s149, %s151
      %p155 = scmp.eq.s32.totalorder %s26, 0
      %p156 = por %p154, %p155
      %p157 = scmp.ne.s32.totalorder %s149, %s151
      %p158 = scmp.eq.s32.totalorder %s31, 1
      %p159 = por %p157, %p158
      %p160 = scmp.ne.s32.totalorder %s151, %s152
      %p161 = scmp.eq.s32.totalorder %s31, 0
      %p162 = por %p160, %p161
      %p163 = scmp.ne.s32.totalorder %s151, %s152
      %p164 = scmp.eq.s32.totalorder %s32, 1
      %p165 = por %p163, %p164
      %p167 = scmp.ne.s32.totalorder %s152, %s166
      %p168 = scmp.eq.s32.totalorder %s32, 0
      %p169 = por %p167, %p168
      %s171 = sadd.s32 %s170, 1
      %p174 = scmp.eq.s32.totalorder %s26, 1
      %p175 = scmp.ne.s32.totalorder %s170, %s172
      %p176 = scmp.eq.s32.totalorder %s26, 0
      %p177 = por %p175, %p176
      %p178 = scmp.ne.s32.totalorder %s170, %s172
      %p179 = scmp.eq.s32.totalorder %s31, 1
      %p180 = por %p178, %p179
      %p181 = scmp.ne.s32.totalorder %s172, %s173
      %p182 = scmp.eq.s32.totalorder %s31, 0
      %p183 = por %p181, %p182
      %p184 = scmp.ne.s32.totalorder %s172, %s173
      %p185 = scmp.eq.s32.totalorder %s32, 1
      %p186 = por %p184, %p185
      %p188 = scmp.ne.s32.totalorder %s173, %s187
      %p189 = scmp.eq.s32.totalorder %s32, 0
      %p190 = por %p188, %p189
      %s192 = sadd.s32 %s191, 1
      %p195 = scmp.eq.s32.totalorder %s26, 1
      %p196 = scmp.ne.s32.totalorder %s191, %s193
      %p197 = scmp.eq.s32.totalorder %s26, 0
      %p198 = por %p196, %p197
      %p199 = scmp.ne.s32.totalorder %s191, %s193
      %p200 = scmp.eq.s32.totalorder %s31, 1
      %p201 = por %p199, %p200
      %p202 = scmp.ne.s32.totalorder %s193, %s194
      %p203 = scmp.eq.s32.totalorder %s31, 0
      %p204 = por %p202, %p203
      %p205 = scmp.ne.s32.totalorder %s193, %s194
      %p206 = scmp.eq.s32.totalorder %s32, 1
      %p207 = por %p205, %p206
      %p209 = scmp.ne.s32.totalorder %s194, %s208
      %p210 = scmp.eq.s32.totalorder %s32, 0
      %p211 = por %p209, %p210
      %s213 = sadd.s32 %s212, 1
      %p216 = scmp.eq.s32.totalorder %s26, 1
      %p217 = scmp.ne.s32.totalorder %s212, %s214
      %p218 = scmp.eq.s32.totalorder %s26, 0
      %p219 = por %p217, %p218
      %p220 = scmp.ne.s32.totalorder %s212, %s214
      %p221 = scmp.eq.s32.totalorder %s31, 1
      %p222 = por %p220, %p221
      %p223 = scmp.ne.s32.totalorder %s214, %s215
      %p224 = scmp.eq.s32.totalorder %s31, 0
      %p225 = por %p223, %p224
      %p226 = scmp.ne.s32.totalorder %s214, %s215
      %p227 = scmp.eq.s32.totalorder %s32, 1
      %p228 = por %p226, %p227
      %p230 = scmp.ne.s32.totalorder %s215, %s229
      %p231 = scmp.eq.s32.totalorder %s32, 0
      %p232 = por %p230, %p231
      %s234 = sadd.s32 %s233, 1
      %p237 = scmp.eq.s32.totalorder %s26, 1
      %p238 = scmp.ne.s32.totalorder %s233, %s235
      %p239 = scmp.eq.s32.totalorder %s26, 0
      %p240 = por %p238, %p239
      %p241 = scmp.ne.s32.totalorder %s233, %s235
      %p242 = scmp.eq.s32.totalorder %s31, 1
      %p243 = por %p241, %p242
      %p244 = scmp.ne.s32.totalorder %s235, %s236
      %p245 = scmp.eq.s32.totalorder %s31, 0
      %p246 = por %p244, %p245
      %p247 = scmp.ne.s32.totalorder %s235, %s236
      %p248 = scmp.eq.s32.totalorder %s32, 1
      %p249 = por %p247, %p248
      %p251 = scmp.ne.s32.totalorder %s236, %s250
      %p252 = scmp.eq.s32.totalorder %s32, 0
      %p253 = por %p251, %p252
      %s255 = sadd.s32 %s254, 1
      %p258 = scmp.eq.s32.totalorder %s26, 1
      %p259 = scmp.ne.s32.totalorder %s254, %s256
      %p260 = scmp.eq.s32.totalorder %s26, 0
      %p261 = por %p259, %p260
      %p262 = scmp.ne.s32.totalorder %s254, %s256
      %p263 = scmp.eq.s32.totalorder %s31, 1
      %p264 = por %p262, %p263
      %p265 = scmp.ne.s32.totalorder %s256, %s257
      %p266 = scmp.eq.s32.totalorder %s31, 0
      %p267 = por %p265, %p266
      %p268 = scmp.ne.s32.totalorder %s256, %s257
      %p269 = scmp.eq.s32.totalorder %s32, 1
      %p270 = por %p268, %p269
      %p272 = scmp.ne.s32.totalorder %s257, %s271
      %p273 = scmp.eq.s32.totalorder %s32, 0
      %p274 = por %p272, %p273
      %s275 = ssub.s32 %s26, %s33
      %p276 = scmp.eq.s32.totalorder %s275, 0
      %s278 = sadd.s32 %s277, 1
      %s279 = scalar_select %p276, %s277, %s278
      %p282 = pneg %p276
      %p283 = scmp.eq.s32.totalorder %s26, 1
      %p284 = por %p282, %p283
      %p285 = scmp.ne.s32.totalorder %s277, %s280
      %p286 = scmp.eq.s32.totalorder %s26, 0
      %p287 = por %p285, %p286
      %p288 = scmp.ne.s32.totalorder %s277, %s280
      %p289 = scmp.eq.s32.totalorder %s31, 1
      %p290 = por %p288, %p289
      %p291 = scmp.ne.s32.totalorder %s280, %s281
      %p292 = scmp.eq.s32.totalorder %s31, 0
      %p293 = por %p291, %p292
      %p294 = scmp.ne.s32.totalorder %s280, %s281
      %p295 = scmp.eq.s32.totalorder %s32, 1
      %p296 = por %p294, %p295
      %p298 = scmp.ne.s32.totalorder %s281, %s297
      %p299 = scmp.eq.s32.totalorder %s32, 0
      %p300 = por %p298, %p299
      %p301 = scmp.le.s32.totalorder 1, %s26
      %p302 = scmp.lt.s32.totalorder %s26, 3
      %p303 = pnand %p301, %p302
      %p304 = pneg %p303
      // Predicated region
      $region9: #{tpu_custom_call.1} parent=5 // pred_check
        _
      $region10: #{tpu_custom_call.1} parent=5 // pred_check_branch
        %306 = sbr.rel (%p303) target = $region12
      $region11: #{tpu_custom_call.1} parent=5 // pred_region
        %s307 = ssub.s32 %s26, 1
        // Predicated region
        $region13: #{tpu_custom_call.1} parent=11 // pred_check
          %p308 = pneg %p99
        $region14: #{tpu_custom_call.1} parent=11 // pred_check_branch
          %310 = sbr.rel (%p308) target = $region16
        $region15: #{tpu_custom_call.1} parent=11 // pred_region
          _
        $region16: #{tpu_custom_call.1} parent=11 // pred_fallthru
          _
        // Predicated region
        $region17: #{tpu_custom_call.1} parent=11 // pred_check
          %p311 = pneg %p120
        $region18: #{tpu_custom_call.1} parent=11 // pred_check_branch
          %313 = sbr.rel (%p311) target = $region20
        $region19: #{tpu_custom_call.1} parent=11 // pred_region
          _
        $region20: #{tpu_custom_call.1} parent=11 // pred_fallthru
          _
        // Predicated region
        $region21: #{tpu_custom_call.1} parent=11 // pred_check
          %p314 = pneg %p141
        $region22: #{tpu_custom_call.1} parent=11 // pred_check_branch
          %316 = sbr.rel (%p314) target = $region24
        $region23: #{tpu_custom_call.1} parent=11 // pred_region
          _
        $region24: #{tpu_custom_call.1} parent=11 // pred_fallthru
          _
        // Predicated region
        $region25: #{tpu_custom_call.1} parent=11 // pred_check
          %p317 = pneg %p162
        $region26: #{tpu_custom_call.1} parent=11 // pred_check_branch
          %319 = sbr.rel (%p317) target = $region28
        $region27: #{tpu_custom_call.1} parent=11 // pred_region
          _
        $region28: #{tpu_custom_call.1} parent=11 // pred_fallthru
          _
        // Predicated region
        $region29: #{tpu_custom_call.1} parent=11 // pred_check
          %p320 = pneg %p183
        $region30: #{tpu_custom_call.1} parent=11 // pred_check_branch
          %322 = sbr.rel (%p320) target = $region32
        $region31: #{tpu_custom_call.1} parent=11 // pred_region
          _
        $region32: #{tpu_custom_call.1} parent=11 // pred_fallthru
          _
        // Predicated region
        $region33: #{tpu_custom_call.1} parent=11 // pred_check
          %p323 = pneg %p204
        $region34: #{tpu_custom_call.1} parent=11 // pred_check_branch
          %325 = sbr.rel (%p323) target = $region36
        $region35: #{tpu_custom_call.1} parent=11 // pred_region
          _
        $region36: #{tpu_custom_call.1} parent=11 // pred_fallthru
          _
        // Predicated region
        $region37: #{tpu_custom_call.1} parent=11 // pred_check
          %p326 = pneg %p225
        $region38: #{tpu_custom_call.1} parent=11 // pred_check_branch
          %328 = sbr.rel (%p326) target = $region40
        $region39: #{tpu_custom_call.1} parent=11 // pred_region
          _
        $region40: #{tpu_custom_call.1} parent=11 // pred_fallthru
          _
        // Predicated region
        $region41: #{tpu_custom_call.1} parent=11 // pred_check
          %p329 = pneg %p246
        $region42: #{tpu_custom_call.1} parent=11 // pred_check_branch
          %331 = sbr.rel (%p329) target = $region44
        $region43: #{tpu_custom_call.1} parent=11 // pred_region
          _
        $region44: #{tpu_custom_call.1} parent=11 // pred_fallthru
          _
        // Predicated region
        $region45: #{tpu_custom_call.1} parent=11 // pred_check
          %p332 = pneg %p267
        $region46: #{tpu_custom_call.1} parent=11 // pred_check_branch
          %334 = sbr.rel (%p332) target = $region48
        $region47: #{tpu_custom_call.1} parent=11 // pred_region
          _
        $region48: #{tpu_custom_call.1} parent=11 // pred_fallthru
          _
      $region12: #{tpu_custom_call.1} parent=5 // pred_fallthru
        _
      %p335 = scmp.lt.s32.totalorder %s26, 2
      // Predicated region
      $region49: #{tpu_custom_call.1} parent=5 // pred_check
        %p336 = pneg %p335
      $region50: #{tpu_custom_call.1} parent=5 // pred_check_branch
        %338 = sbr.rel (%p336) target = $region52
      $region51: #{tpu_custom_call.1} parent=5 // pred_region
        // Predicated region
        $region53: #{tpu_custom_call.1} parent=51 // pred_check
          %p339 = pneg %p46
        $region54: #{tpu_custom_call.1} parent=51 // pred_check_branch
          %341 = sbr.rel (%p339) target = $region56
        $region55: #{tpu_custom_call.1} parent=51 // pred_region
          %s342 = sand.u32 %s36, 1
          %s343 = scalar_lea.sflag [#allocation3], %s342
          %s344 = sand.u32 %s36, 1
          %s345 = smul.addr %s344, 64
          %s346 = scalar_lea.vmem [#allocation2], %s345
          %348 = vsyncadd %s343, 0
          %s349 = smul.addr %s26, 8
          %s350 = smul.addr %s349, 8
          %s351 = scalar_lea.hbm %s0, %s350
          %s352 = sshll.u32 %s351, 4
          %s353 = int_to_ptr.hbm [resolvable:$true] %s352
          %s354 = sshll.u32 %s346, 4
          %s355 = int_to_ptr.vmem [resolvable:$true] %s354
          %360 = dma.hbm_to_vmem [thread:$0]  %s353, 1024, %s355, %s343, 128, 128, 8
        $region56: #{tpu_custom_call.1} parent=51 // pred_fallthru
          _
        // Predicated region
        $region57: #{tpu_custom_call.1} parent=51 // pred_check
          %p361 = pneg %p72
        $region58: #{tpu_custom_call.1} parent=51 // pred_check_branch
          %363 = sbr.rel (%p361) target = $region60
        $region59: #{tpu_custom_call.1} parent=51 // pred_region
          %s364 = sand.u32 %s62, 1
          %s365 = scalar_lea.sflag [#allocation6], %s364
          %s366 = sand.u32 %s62, 1
          %s367 = smul.addr %s366, 64
          %s368 = scalar_lea.vmem [#allocation5], %s367
          %370 = vsyncadd %s365, 0
          %s371 = smul.addr %s26, 8
          %s372 = smul.addr %s371, 8
          %s373 = scalar_lea.hbm %s1, %s372
          %s374 = sshll.u32 %s373, 4
          %s375 = int_to_ptr.hbm [resolvable:$true] %s374
          %s376 = sshll.u32 %s368, 4
          %s377 = int_to_ptr.vmem [resolvable:$true] %s376
          %382 = dma.hbm_to_vmem [thread:$0]  %s375, 1024, %s377, %s365, 128, 128, 8
        $region60: #{tpu_custom_call.1} parent=51 // pred_fallthru
          _
      $region52: #{tpu_custom_call.1} parent=5 // pred_fallthru
        _
      %p383 = scmp.le.s32.totalorder 1, %s26
      %p384 = scmp.lt.s32.totalorder %s26, 3
      %p385 = pnand %p383, %p384
      %p386 = pneg %p385
      // Predicated region
      $region61: #{tpu_custom_call.1} parent=5 // pred_check
        _
      $region62: #{tpu_custom_call.1} parent=5 // pred_check_branch
        %388 = sbr.rel (%p385) target = $region64
      $region63: #{tpu_custom_call.1} parent=5 // pred_region
        %s389 = ssub.s32 %s26, 1
        %s390 = sand.u32 %s39, 1
        %s391 = scalar_lea.sflag [#allocation3], %s390
        %s392 = sand.u32 %s39, 1
        %s393 = smul.addr %s392, 64
        %s394 = scalar_lea.vmem [#allocation2], %s393
        // Predicated region
        $region65: #{tpu_custom_call.1} parent=63 // pred_check
          %p395 = pneg %p52
        $region66: #{tpu_custom_call.1} parent=63 // pred_check_branch
          %397 = sbr.rel (%p395) target = $region68
        $region67: #{tpu_custom_call.1} parent=63 // pred_region
          %399 = dma.done %s391, 1024
        $region68: #{tpu_custom_call.1} parent=63 // pred_fallthru
          _
        %s400 = sand.u32 %s65, 1
        %s401 = scalar_lea.sflag [#allocation6], %s400
        %s402 = sand.u32 %s65, 1
        %s403 = smul.addr %s402, 64
        %s404 = scalar_lea.vmem [#allocation5], %s403
        // Predicated region
        $region69: #{tpu_custom_call.1} parent=63 // pred_check
          %p405 = pneg %p78
        $region70: #{tpu_custom_call.1} parent=63 // pred_check_branch
          %407 = sbr.rel (%p405) target = $region72
        $region71: #{tpu_custom_call.1} parent=63 // pred_region
          %409 = dma.done %s401, 1024
        $region72: #{tpu_custom_call.1} parent=63 // pred_fallthru
          _
        %s410 = sand.u32 %s39, 1
        %s411 = scalar_lea.sflag [#allocation3], %s410
        %s412 = sand.u32 %s39, 1
        %s413 = smul.addr %s412, 64
        %s414 = scalar_lea.vmem [#allocation2], %s413
        %p415 = pneg %p52
        %p416 = pneg %p49
        %s417 = sand.u32 %s65, 1
        %s418 = scalar_lea.sflag [#allocation6], %s417
        %s419 = sand.u32 %s65, 1
        %s420 = smul.addr %s419, 64
        %s421 = scalar_lea.vmem [#allocation5], %s420
        %p422 = pneg %p78
        %p423 = pneg %p75
        %p424 = pneg %p99
        %p425 = pneg %p96
        %p426 = pneg %p120
        %p427 = pneg %p117
        %p428 = pneg %p141
        %p429 = pneg %p138
        %p430 = pneg %p162
        %p431 = pneg %p159
        %p432 = pneg %p183
        %p433 = pneg %p180
        %p434 = pneg %p204
        %p435 = pneg %p201
        %p436 = pneg %p225
        %p437 = pneg %p222
        %p438 = pneg %p246
        %p439 = pneg %p243
        %p440 = pneg %p267
        %p441 = pneg %p264
        %p442 = pneg %p293
        %p443 = pneg %p290
        %s444 = sand.u32 %s280, 1
        %s445 = scalar_lea.sflag [#allocation4], %s444
        %s446 = sand.u32 %s280, 1
        %s447 = smul.addr %s446, 64
        %s448 = scalar_lea.vmem [#allocation7], %s447
        %v449 = vld [vmem:[%s394] sm:$0xff]
        %v450 = vld [vmem:[%s394 + $0x8] sm:$0xff]
        %v451 = vld [vmem:[%s394 + $0x10] sm:$0xff]
        %v452 = vld [vmem:[%s394 + $0x18] sm:$0xff]
        %v453 = vld [vmem:[%s394 + $0x20] sm:$0xff]
        %v454 = vld [vmem:[%s394 + $0x28] sm:$0xff]
        %v455 = vld [vmem:[%s394 + $0x30] sm:$0xff]
        %v456 = vld [vmem:[%s394 + $0x38] sm:$0xff]
        %v457 = vld [vmem:[%s404] sm:$0xff]
        %v458 = vld [vmem:[%s404 + $0x8] sm:$0xff]
        %v459 = vld [vmem:[%s404 + $0x10] sm:$0xff]
        %v460 = vld [vmem:[%s404 + $0x18] sm:$0xff]
        %v461 = vld [vmem:[%s404 + $0x20] sm:$0xff]
        %v462 = vld [vmem:[%s404 + $0x28] sm:$0xff]
        %v463 = vld [vmem:[%s404 + $0x30] sm:$0xff]
        %v464 = vld [vmem:[%s404 + $0x38] sm:$0xff]
        %v465 = vld [vmem:[%s4] sm:$0xff]
        %v466 = vld [vmem:[%s4 + $0x8] sm:$0xff]
        %v467 = vld [vmem:[%s4 + $0x10] sm:$0xff]
        %v468 = vld [vmem:[%s4 + $0x18] sm:$0xff]
        %v469 = vld [vmem:[%s4 + $0x20] sm:$0xff]
        %v470 = vld [vmem:[%s4 + $0x28] sm:$0xff]
        %v471 = vld [vmem:[%s4 + $0x30] sm:$0xff]
        %v472 = vld [vmem:[%s4 + $0x38] sm:$0xff]
        %v473 = vld [vmem:[%s5] sm:$0x1]
        %v475 = vperm.slane %v473, 0
        %vm477 = vcmask 523264
        %v479 = vsel %vm477, %v457, 0
        %v482 = vsel %vm477, %v458, 0
        %v485 = vsel %vm477, %v459, 0
        %v488 = vsel %vm477, %v460, 0
        %v491 = vsel %vm477, %v461, 0
        %v494 = vsel %vm477, %v462, 0
        %v497 = vsel %vm477, %v463, 0
        %v500 = vsel %vm477, %v464, 0
        %502 = vmatpush.msra.mxu0 0.0
        %503 = vmatpush.msra.mxu0 0.0
        %504 = vmatpush.msra.mxu0 0.0
        %505 = vmatpush.msra.mxu0 0.0
        %506 = vmatpush.msra.mxu0 0.0
        %507 = vmatpush.msra.mxu0 0.0
        %508 = vmatpush.msra.mxu0 0.0
        %509 = vmatpush.msra.mxu0 0.0
        %510 = vmatpush.msra.mxu0 %v472
        %511 = vmatpush.msra.mxu0 %v471
        %512 = vmatpush.msra.mxu0 %v470
        %513 = vmatpush.msra.mxu0 %v469
        %514 = vmatpush.msra.mxu0 %v468
        %515 = vmatpush.msra.mxu0 %v467
        %516 = vmatpush.msra.mxu0 %v466
        %517 = vmatpush.msra.mxu0 %v465
        %518 = vmatmul.f32.gmra.mxu0 %v479
        %v519 = vpop.f32.mrf.mxu0
        %v520 = vadd.f32 %v475, %v519
        %521 = vmatmul.f32.gmra.mxu0 %v482
        %v522 = vpop.f32.mrf.mxu0
        %v523 = vadd.f32 %v475, %v522
        %524 = vmatmul.f32.gmra.mxu0 %v485
        %v525 = vpop.f32.mrf.mxu0
        %v526 = vadd.f32 %v475, %v525
        %527 = vmatmul.f32.gmra.mxu0 %v488
        %v528 = vpop.f32.mrf.mxu0
        %v529 = vadd.f32 %v475, %v528
        %530 = vmatmul.f32.gmra.mxu0 %v491
        %v531 = vpop.f32.mrf.mxu0
        %v532 = vadd.f32 %v475, %v531
        %533 = vmatmul.f32.gmra.mxu0 %v494
        %v534 = vpop.f32.mrf.mxu0
        %v535 = vadd.f32 %v475, %v534
        %536 = vmatmul.f32.gmra.mxu0 %v497
        %v537 = vpop.f32.mrf.mxu0
        %v538 = vadd.f32 %v475, %v537
        %539 = vmatmul.f32.gmra.mxu0 %v500
        %v540 = vpop.f32.mrf.mxu0
        %v541 = vadd.f32 %v475, %v540
        %542 = vdwg.mxu0
        %v543 = vld [vmem:[%s2] sm:$0xff]
        %v544 = vld [vmem:[%s2 + $0x8] sm:$0xff]
        %v545 = vld [vmem:[%s2 + $0x10] sm:$0xff]
        %v546 = vld [vmem:[%s2 + $0x18] sm:$0xff]
        %v547 = vld [vmem:[%s2 + $0x20] sm:$0xff]
        %v548 = vld [vmem:[%s2 + $0x28] sm:$0xff]
        %v549 = vld [vmem:[%s2 + $0x30] sm:$0xff]
        %v550 = vld [vmem:[%s2 + $0x38] sm:$0xff]
        %v551 = vld [vmem:[%s3] sm:$0xff]
        %v552 = vld [vmem:[%s3 + $0x8] sm:$0xff]
        %v553 = vld [vmem:[%s3 + $0x10] sm:$0xff]
        %v554 = vld [vmem:[%s3 + $0x18] sm:$0xff]
        %v555 = vld [vmem:[%s3 + $0x20] sm:$0xff]
        %v556 = vld [vmem:[%s3 + $0x28] sm:$0xff]
        %v557 = vld [vmem:[%s3 + $0x30] sm:$0xff]
        %v558 = vld [vmem:[%s3 + $0x38] sm:$0xff]
        %560 = vset.pattern.permute.xlu0 0
        %561 = vperm.xlu0 %560, %v551
        %v562 = vpop.permute.xlu0 %561
        %565 = vset.pattern.permute.xlu0 0
        %566 = vperm.xlu0 %565, %v552
        %v567 = vpop.permute.xlu0 %566
        %570 = vset.pattern.permute.xlu0 0
        %571 = vperm.xlu0 %570, %v553
        %v572 = vpop.permute.xlu0 %571
        %575 = vset.pattern.permute.xlu0 0
        %576 = vperm.xlu0 %575, %v554
        %v577 = vpop.permute.xlu0 %576
        %580 = vset.pattern.permute.xlu0 0
        %581 = vperm.xlu0 %580, %v555
        %v582 = vpop.permute.xlu0 %581
        %585 = vset.pattern.permute.xlu0 0
        %586 = vperm.xlu0 %585, %v556
        %v587 = vpop.permute.xlu0 %586
        %590 = vset.pattern.permute.xlu0 0
        %591 = vperm.xlu0 %590, %v557
        %v592 = vpop.permute.xlu0 %591
        %595 = vset.pattern.permute.xlu0 0
        %596 = vperm.xlu0 %595, %v558
        %v597 = vpop.permute.xlu0 %596
        %v600 = vsel %vm477, %v543, 0
        %v603 = vsel %vm477, %v544, 0
        %v606 = vsel %vm477, %v545, 0
        %v609 = vsel %vm477, %v546, 0
        %v612 = vsel %vm477, %v547, 0
        %v615 = vsel %vm477, %v548, 0
        %v618 = vsel %vm477, %v549, 0
        %v621 = vsel %vm477, %v550, 0
        %623 = vmatpush.msra.mxu0 0.0
        %624 = vmatpush.msra.mxu0 0.0
        %625 = vmatpush.msra.mxu0 0.0
        %626 = vmatpush.msra.mxu0 0.0
        %627 = vmatpush.msra.mxu0 0.0
        %628 = vmatpush.msra.mxu0 0.0
        %629 = vmatpush.msra.mxu0 0.0
        %630 = vmatpush.msra.mxu0 0.0
        %631 = vmatpush.msra.mxu0 %v464
        %632 = vmatpush.msra.mxu0 %v463
        %633 = vmatpush.msra.mxu0 %v462
        %634 = vmatpush.msra.mxu0 %v461
        %635 = vmatpush.msra.mxu0 %v460
        %636 = vmatpush.msra.mxu0 %v459
        %637 = vmatpush.msra.mxu0 %v458
        %638 = vmatpush.msra.mxu0 %v457
        %639 = vmatmul.f32.gmra.mxu0 %v600
        %v640 = vpop.f32.mrf.mxu0
        %v641 = vadd.f32 %v562, %v640
        %642 = vmatmul.f32.gmra.mxu0 %v603
        %v643 = vpop.f32.mrf.mxu0
        %v644 = vadd.f32 %v567, %v643
        %645 = vmatmul.f32.gmra.mxu0 %v606
        %v646 = vpop.f32.mrf.mxu0
        %v647 = vadd.f32 %v572, %v646
        %648 = vmatmul.f32.gmra.mxu0 %v609
        %v649 = vpop.f32.mrf.mxu0
        %v650 = vadd.f32 %v577, %v649
        %651 = vmatmul.f32.gmra.mxu0 %v612
        %v652 = vpop.f32.mrf.mxu0
        %v653 = vadd.f32 %v582, %v652
        %654 = vmatmul.f32.gmra.mxu0 %v615
        %v655 = vpop.f32.mrf.mxu0
        %v656 = vadd.f32 %v587, %v655
        %657 = vmatmul.f32.gmra.mxu0 %v618
        %v658 = vpop.f32.mrf.mxu0
        %v659 = vadd.f32 %v592, %v658
        %660 = vmatmul.f32.gmra.mxu0 %v621
        %v661 = vpop.f32.mrf.mxu0
        %v662 = vadd.f32 %v597, %v661
        %663 = vdwg.mxu0
        %v664 = vld [vmem:[%s4] sm:$0xff]
        %v665 = vld [vmem:[%s4 + $0x8] sm:$0xff]
        %vm666 = vcmask 130048
        %v668 = vsel %vm666, %v641, 0
        %v671 = vsel %vm666, %v644, 0
        %v674 = vsel %vm666, %v647, 0
        %v677 = vsel %vm666, %v650, 0
        %v680 = vsel %vm666, %v653, 0
        %v683 = vsel %vm666, %v656, 0
        %v686 = vsel %vm666, %v659, 0
        %v689 = vsel %vm666, %v662, 0
        %691 = vmatpush.msra.mxu0 0.0
        %692 = vmatpush.msra.mxu0 0.0
        %693 = vmatpush.msra.mxu0 0.0
        %694 = vmatpush.msra.mxu0 0.0
        %695 = vmatpush.msra.mxu0 0.0
        %696 = vmatpush.msra.mxu0 0.0
        %697 = vmatpush.msra.mxu0 0.0
        %698 = vmatpush.msra.mxu0 0.0
        %699 = vmatpush.msra.mxu0 0.0
        %700 = vmatpush.msra.mxu0 0.0
        %701 = vmatpush.msra.mxu0 0.0
        %702 = vmatpush.msra.mxu0 0.0
        %703 = vmatpush.msra.mxu0 0.0
        %704 = vmatpush.msra.mxu0 0.0
        %705 = vmatpush.msra.mxu0 %v665
        %706 = vmatpush.msra.mxu0 %v664
        %707 = vmatmul.f32.gmra.mxu0 %v668
        %v708 = vpop.f32.mrf.mxu0
        %v709 = vadd.f32 0.0, %v708
        %710 = vmatmul.f32.gmra.mxu0 %v671
        %v711 = vpop.f32.mrf.mxu0
        %v712 = vadd.f32 0.0, %v711
        %713 = vmatmul.f32.gmra.mxu0 %v674
        %v714 = vpop.f32.mrf.mxu0
        %v715 = vadd.f32 0.0, %v714
        %716 = vmatmul.f32.gmra.mxu0 %v677
        %v717 = vpop.f32.mrf.mxu0
        %v718 = vadd.f32 0.0, %v717
        %719 = vmatmul.f32.gmra.mxu0 %v680
        %v720 = vpop.f32.mrf.mxu0
        %v721 = vadd.f32 0.0, %v720
        %722 = vmatmul.f32.gmra.mxu0 %v683
        %v723 = vpop.f32.mrf.mxu0
        %v724 = vadd.f32 0.0, %v723
        %725 = vmatmul.f32.gmra.mxu0 %v686
        %v726 = vpop.f32.mrf.mxu0
        %v727 = vadd.f32 0.0, %v726
        %728 = vmatmul.f32.gmra.mxu0 %v689
        %v729 = vpop.f32.mrf.mxu0
        %v730 = vadd.f32 0.0, %v729
        %731 = vdwg.mxu0
        %v732 = vadd.f32 %v520, %v709
        %v733 = vadd.f32 %v523, %v712
        %v734 = vadd.f32 %v526, %v715
        %v735 = vadd.f32 %v529, %v718
        %v736 = vadd.f32 %v532, %v721
        %v737 = vadd.f32 %v535, %v724
        %v738 = vadd.f32 %v538, %v727
        %v739 = vadd.f32 %v541, %v730
        %s740 = scalar_lea.vmem %s2, 64
        %v741 = vld [vmem:[%s740] sm:$0xff]
        %v742 = vld [vmem:[%s740 + $0x8] sm:$0xff]
        %v743 = vld [vmem:[%s740 + $0x10] sm:$0xff]
        %v744 = vld [vmem:[%s740 + $0x18] sm:$0xff]
        %v745 = vld [vmem:[%s740 + $0x20] sm:$0xff]
        %v746 = vld [vmem:[%s740 + $0x28] sm:$0xff]
        %v747 = vld [vmem:[%s740 + $0x30] sm:$0xff]
        %v748 = vld [vmem:[%s740 + $0x38] sm:$0xff]
        %s749 = scalar_lea.vmem %s3, 64
        %v750 = vld [vmem:[%s749] sm:$0xff]
        %v751 = vld [vmem:[%s749 + $0x8] sm:$0xff]
        %v752 = vld [vmem:[%s749 + $0x10] sm:$0xff]
        %v753 = vld [vmem:[%s749 + $0x18] sm:$0xff]
        %v754 = vld [vmem:[%s749 + $0x20] sm:$0xff]
        %v755 = vld [vmem:[%s749 + $0x28] sm:$0xff]
        %v756 = vld [vmem:[%s749 + $0x30] sm:$0xff]
        %v757 = vld [vmem:[%s749 + $0x38] sm:$0xff]
        %759 = vset.pattern.permute.xlu0 0
        %760 = vperm.xlu0 %759, %v750
        %v761 = vpop.permute.xlu0 %760
        %764 = vset.pattern.permute.xlu0 0
        %765 = vperm.xlu0 %764, %v751
        %v766 = vpop.permute.xlu0 %765
        %769 = vset.pattern.permute.xlu0 0
        %770 = vperm.xlu0 %769, %v752
        %v771 = vpop.permute.xlu0 %770
        %774 = vset.pattern.permute.xlu0 0
        %775 = vperm.xlu0 %774, %v753
        %v776 = vpop.permute.xlu0 %775
        %779 = vset.pattern.permute.xlu0 0
        %780 = vperm.xlu0 %779, %v754
        %v781 = vpop.permute.xlu0 %780
        %784 = vset.pattern.permute.xlu0 0
        %785 = vperm.xlu0 %784, %v755
        %v786 = vpop.permute.xlu0 %785
        %789 = vset.pattern.permute.xlu0 0
        %790 = vperm.xlu0 %789, %v756
        %v791 = vpop.permute.xlu0 %790
        %794 = vset.pattern.permute.xlu0 0
        %795 = vperm.xlu0 %794, %v757
        %v796 = vpop.permute.xlu0 %795
        %798 = vrot.lane.b32.xlu0 %v457, 112
        %v799 = vpop.permute.xlu0 %798
        %800 = vrot.lane.b32.xlu0 %v458, 112
        %v801 = vpop.permute.xlu0 %800
        %802 = vrot.lane.b32.xlu0 %v459, 112
        %v803 = vpop.permute.xlu0 %802
        %804 = vrot.lane.b32.xlu0 %v460, 112
        %v805 = vpop.permute.xlu0 %804
        %806 = vrot.lane.b32.xlu0 %v461, 112
        %v807 = vpop.permute.xlu0 %806
        %808 = vrot.lane.b32.xlu0 %v462, 112
        %v809 = vpop.permute.xlu0 %808
        %810 = vrot.lane.b32.xlu0 %v463, 112
        %v811 = vpop.permute.xlu0 %810
        %812 = vrot.lane.b32.xlu0 %v464, 112
        %v813 = vpop.permute.xlu0 %812
        %v823 = vsel %vm477, %v741, 0
        %v826 = vsel %vm477, %v742, 0
        %v829 = vsel %vm477, %v743, 0
        %v832 = vsel %vm477, %v744, 0
        %v835 = vsel %vm477, %v745, 0
        %v838 = vsel %vm477, %v746, 0
        %v841 = vsel %vm477, %v747, 0
        %v844 = vsel %vm477, %v748, 0
        %846 = vmatpush.msra.mxu0 0.0
        %847 = vmatpush.msra.mxu0 0.0
        %848 = vmatpush.msra.mxu0 0.0
        %849 = vmatpush.msra.mxu0 0.0
        %850 = vmatpush.msra.mxu0 0.0
        %851 = vmatpush.msra.mxu0 0.0
        %852 = vmatpush.msra.mxu0 0.0
        %853 = vmatpush.msra.mxu0 0.0
        %854 = vmatpush.msra.mxu0 %v813
        %855 = vmatpush.msra.mxu0 %v811
        %856 = vmatpush.msra.mxu0 %v809
        %857 = vmatpush.msra.mxu0 %v807
        %858 = vmatpush.msra.mxu0 %v805
        %859 = vmatpush.msra.mxu0 %v803
        %860 = vmatpush.msra.mxu0 %v801
        %861 = vmatpush.msra.mxu0 %v799
        %862 = vmatmul.f32.gmra.mxu0 %v823
        %v863 = vpop.f32.mrf.mxu0
        %v864 = vadd.f32 %v761, %v863
        %865 = vmatmul.f32.gmra.mxu0 %v826
        %v866 = vpop.f32.mrf.mxu0
        %v867 = vadd.f32 %v766, %v866
        %868 = vmatmul.f32.gmra.mxu0 %v829
        %v869 = vpop.f32.mrf.mxu0
        %v870 = vadd.f32 %v771, %v869
        %871 = vmatmul.f32.gmra.mxu0 %v832
        %v872 = vpop.f32.mrf.mxu0
        %v873 = vadd.f32 %v776, %v872
        %874 = vmatmul.f32.gmra.mxu0 %v835
        %v875 = vpop.f32.mrf.mxu0
        %v876 = vadd.f32 %v781, %v875
        %877 = vmatmul.f32.gmra.mxu0 %v838
        %v878 = vpop.f32.mrf.mxu0
        %v879 = vadd.f32 %v786, %v878
        %880 = vmatmul.f32.gmra.mxu0 %v841
        %v881 = vpop.f32.mrf.mxu0
        %v882 = vadd.f32 %v791, %v881
        %883 = vmatmul.f32.gmra.mxu0 %v844
        %v884 = vpop.f32.mrf.mxu0
        %v885 = vadd.f32 %v796, %v884
        %886 = vdwg.mxu0
        %v887 = vld [vmem:[%s4 + $0x10] sm:$0xff]
        %v888 = vld [vmem:[%s4 + $0x18] sm:$0xff]
        %v890 = vsel %vm666, %v864, 0
        %v893 = vsel %vm666, %v867, 0
        %v896 = vsel %vm666, %v870, 0
        %v899 = vsel %vm666, %v873, 0
        %v902 = vsel %vm666, %v876, 0
        %v905 = vsel %vm666, %v879, 0
        %v908 = vsel %vm666, %v882, 0
        %v911 = vsel %vm666, %v885, 0
        %913 = vmatpush.msra.mxu0 0.0
        %914 = vmatpush.msra.mxu0 0.0
        %915 = vmatpush.msra.mxu0 0.0
        %916 = vmatpush.msra.mxu0 0.0
        %917 = vmatpush.msra.mxu0 0.0
        %918 = vmatpush.msra.mxu0 0.0
        %919 = vmatpush.msra.mxu0 0.0
        %920 = vmatpush.msra.mxu0 0.0
        %921 = vmatpush.msra.mxu0 0.0
        %922 = vmatpush.msra.mxu0 0.0
        %923 = vmatpush.msra.mxu0 0.0
        %924 = vmatpush.msra.mxu0 0.0
        %925 = vmatpush.msra.mxu0 0.0
        %926 = vmatpush.msra.mxu0 0.0
        %927 = vmatpush.msra.mxu0 %v888
        %928 = vmatpush.msra.mxu0 %v887
        %929 = vmatmul.f32.gmra.mxu0 %v890
        %v930 = vpop.f32.mrf.mxu0
        %v931 = vadd.f32 0.0, %v930
        %932 = vmatmul.f32.gmra.mxu0 %v893
        %v933 = vpop.f32.mrf.mxu0
        %v934 = vadd.f32 0.0, %v933
        %935 = vmatmul.f32.gmra.mxu0 %v896
        %v936 = vpop.f32.mrf.mxu0
        %v937 = vadd.f32 0.0, %v936
        %938 = vmatmul.f32.gmra.mxu0 %v899
        %v939 = vpop.f32.mrf.mxu0
        %v940 = vadd.f32 0.0, %v939
        %941 = vmatmul.f32.gmra.mxu0 %v902
        %v942 = vpop.f32.mrf.mxu0
        %v943 = vadd.f32 0.0, %v942
        %944 = vmatmul.f32.gmra.mxu0 %v905
        %v945 = vpop.f32.mrf.mxu0
        %v946 = vadd.f32 0.0, %v945
        %947 = vmatmul.f32.gmra.mxu0 %v908
        %v948 = vpop.f32.mrf.mxu0
        %v949 = vadd.f32 0.0, %v948
        %950 = vmatmul.f32.gmra.mxu0 %v911
        %v951 = vpop.f32.mrf.mxu0
        %v952 = vadd.f32 0.0, %v951
        %953 = vdwg.mxu0
        %v954 = vadd.f32 %v732, %v931
        %v955 = vadd.f32 %v733, %v934
        %v956 = vadd.f32 %v734, %v937
        %v957 = vadd.f32 %v735, %v940
        %v958 = vadd.f32 %v736, %v943
        %v959 = vadd.f32 %v737, %v946
        %v960 = vadd.f32 %v738, %v949
        %v961 = vadd.f32 %v739, %v952
        %s962 = scalar_lea.vmem %s2, 128
        %v963 = vld [vmem:[%s962] sm:$0xff]
        %v964 = vld [vmem:[%s962 + $0x8] sm:$0xff]
        %v965 = vld [vmem:[%s962 + $0x10] sm:$0xff]
        %v966 = vld [vmem:[%s962 + $0x18] sm:$0xff]
        %v967 = vld [vmem:[%s962 + $0x20] sm:$0xff]
        %v968 = vld [vmem:[%s962 + $0x28] sm:$0xff]
        %v969 = vld [vmem:[%s962 + $0x30] sm:$0xff]
        %v970 = vld [vmem:[%s962 + $0x38] sm:$0xff]
        %s971 = scalar_lea.vmem %s3, 128
        %v972 = vld [vmem:[%s971] sm:$0xff]
        %v973 = vld [vmem:[%s971 + $0x8] sm:$0xff]
        %v974 = vld [vmem:[%s971 + $0x10] sm:$0xff]
        %v975 = vld [vmem:[%s971 + $0x18] sm:$0xff]
        %v976 = vld [vmem:[%s971 + $0x20] sm:$0xff]
        %v977 = vld [vmem:[%s971 + $0x28] sm:$0xff]
        %v978 = vld [vmem:[%s971 + $0x30] sm:$0xff]
        %v979 = vld [vmem:[%s971 + $0x38] sm:$0xff]
        %981 = vset.pattern.permute.xlu0 0
        %982 = vperm.xlu0 %981, %v972
        %v983 = vpop.permute.xlu0 %982
        %986 = vset.pattern.permute.xlu0 0
        %987 = vperm.xlu0 %986, %v973
        %v988 = vpop.permute.xlu0 %987
        %991 = vset.pattern.permute.xlu0 0
        %992 = vperm.xlu0 %991, %v974
        %v993 = vpop.permute.xlu0 %992
        %996 = vset.pattern.permute.xlu0 0
        %997 = vperm.xlu0 %996, %v975
        %v998 = vpop.permute.xlu0 %997
        %1001 = vset.pattern.permute.xlu0 0
        %1002 = vperm.xlu0 %1001, %v976
        %v1003 = vpop.permute.xlu0 %1002
        %1006 = vset.pattern.permute.xlu0 0
        %1007 = vperm.xlu0 %1006, %v977
        %v1008 = vpop.permute.xlu0 %1007
        %1011 = vset.pattern.permute.xlu0 0
        %1012 = vperm.xlu0 %1011, %v978
        %v1013 = vpop.permute.xlu0 %1012
        %1016 = vset.pattern.permute.xlu0 0
        %1017 = vperm.xlu0 %1016, %v979
        %v1018 = vpop.permute.xlu0 %1017
        %1020 = vrot.lane.b32.xlu0 %v457, 96
        %v1021 = vpop.permute.xlu0 %1020
        %1022 = vrot.lane.b32.xlu0 %v458, 96
        %v1023 = vpop.permute.xlu0 %1022
        %1024 = vrot.lane.b32.xlu0 %v459, 96
        %v1025 = vpop.permute.xlu0 %1024
        %1026 = vrot.lane.b32.xlu0 %v460, 96
        %v1027 = vpop.permute.xlu0 %1026
        %1028 = vrot.lane.b32.xlu0 %v461, 96
        %v1029 = vpop.permute.xlu0 %1028
        %1030 = vrot.lane.b32.xlu0 %v462, 96
        %v1031 = vpop.permute.xlu0 %1030
        %1032 = vrot.lane.b32.xlu0 %v463, 96
        %v1033 = vpop.permute.xlu0 %1032
        %1034 = vrot.lane.b32.xlu0 %v464, 96
        %v1035 = vpop.permute.xlu0 %1034
        %v1045 = vsel %vm477, %v963, 0
        %v1048 = vsel %vm477, %v964, 0
        %v1051 = vsel %vm477, %v965, 0
        %v1054 = vsel %vm477, %v966, 0
        %v1057 = vsel %vm477, %v967, 0
        %v1060 = vsel %vm477, %v968, 0
        %v1063 = vsel %vm477, %v969, 0
        %v1066 = vsel %vm477, %v970, 0
        %1068 = vmatpush.msra.mxu0 0.0
        %1069 = vmatpush.msra.mxu0 0.0
        %1070 = vmatpush.msra.mxu0 0.0
        %1071 = vmatpush.msra.mxu0 0.0
        %1072 = vmatpush.msra.mxu0 0.0
        %1073 = vmatpush.msra.mxu0 0.0
        %1074 = vmatpush.msra.mxu0 0.0
        %1075 = vmatpush.msra.mxu0 0.0
        %1076 = vmatpush.msra.mxu0 %v1035
        %1077 = vmatpush.msra.mxu0 %v1033
        %1078 = vmatpush.msra.mxu0 %v1031
        %1079 = vmatpush.msra.mxu0 %v1029
        %1080 = vmatpush.msra.mxu0 %v1027
        %1081 = vmatpush.msra.mxu0 %v1025
        %1082 = vmatpush.msra.mxu0 %v1023
        %1083 = vmatpush.msra.mxu0 %v1021
        %1084 = vmatmul.f32.gmra.mxu0 %v1045
        %v1085 = vpop.f32.mrf.mxu0
        %v1086 = vadd.f32 %v983, %v1085
        %1087 = vmatmul.f32.gmra.mxu0 %v1048
        %v1088 = vpop.f32.mrf.mxu0
        %v1089 = vadd.f32 %v988, %v1088
        %1090 = vmatmul.f32.gmra.mxu0 %v1051
        %v1091 = vpop.f32.mrf.mxu0
        %v1092 = vadd.f32 %v993, %v1091
        %1093 = vmatmul.f32.gmra.mxu0 %v1054
        %v1094 = vpop.f32.mrf.mxu0
        %v1095 = vadd.f32 %v998, %v1094
        %1096 = vmatmul.f32.gmra.mxu0 %v1057
        %v1097 = vpop.f32.mrf.mxu0
        %v1098 = vadd.f32 %v1003, %v1097
        %1099 = vmatmul.f32.gmra.mxu0 %v1060
        %v1100 = vpop.f32.mrf.mxu0
        %v1101 = vadd.f32 %v1008, %v1100
        %1102 = vmatmul.f32.gmra.mxu0 %v1063
        %v1103 = vpop.f32.mrf.mxu0
        %v1104 = vadd.f32 %v1013, %v1103
        %1105 = vmatmul.f32.gmra.mxu0 %v1066
        %v1106 = vpop.f32.mrf.mxu0
        %v1107 = vadd.f32 %v1018, %v1106
        %1108 = vdwg.mxu0
        %v1109 = vld [vmem:[%s4 + $0x20] sm:$0xff]
        %v1110 = vld [vmem:[%s4 + $0x28] sm:$0xff]
        %v1112 = vsel %vm666, %v1086, 0
        %v1115 = vsel %vm666, %v1089, 0
        %v1118 = vsel %vm666, %v1092, 0
        %v1121 = vsel %vm666, %v1095, 0
        %v1124 = vsel %vm666, %v1098, 0
        %v1127 = vsel %vm666, %v1101, 0
        %v1130 = vsel %vm666, %v1104, 0
        %v1133 = vsel %vm666, %v1107, 0
        %1135 = vmatpush.msra.mxu0 0.0
        %1136 = vmatpush.msra.mxu0 0.0
        %1137 = vmatpush.msra.mxu0 0.0
        %1138 = vmatpush.msra.mxu0 0.0
        %1139 = vmatpush.msra.mxu0 0.0
        %1140 = vmatpush.msra.mxu0 0.0
        %1141 = vmatpush.msra.mxu0 0.0
        %1142 = vmatpush.msra.mxu0 0.0
        %1143 = vmatpush.msra.mxu0 0.0
        %1144 = vmatpush.msra.mxu0 0.0
        %1145 = vmatpush.msra.mxu0 0.0
        %1146 = vmatpush.msra.mxu0 0.0
        %1147 = vmatpush.msra.mxu0 0.0
        %1148 = vmatpush.msra.mxu0 0.0
        %1149 = vmatpush.msra.mxu0 %v1110
        %1150 = vmatpush.msra.mxu0 %v1109
        %1151 = vmatmul.f32.gmra.mxu0 %v1112
        %v1152 = vpop.f32.mrf.mxu0
        %v1153 = vadd.f32 0.0, %v1152
        %1154 = vmatmul.f32.gmra.mxu0 %v1115
        %v1155 = vpop.f32.mrf.mxu0
        %v1156 = vadd.f32 0.0, %v1155
        %1157 = vmatmul.f32.gmra.mxu0 %v1118
        %v1158 = vpop.f32.mrf.mxu0
        %v1159 = vadd.f32 0.0, %v1158
        %1160 = vmatmul.f32.gmra.mxu0 %v1121
        %v1161 = vpop.f32.mrf.mxu0
        %v1162 = vadd.f32 0.0, %v1161
        %1163 = vmatmul.f32.gmra.mxu0 %v1124
        %v1164 = vpop.f32.mrf.mxu0
        %v1165 = vadd.f32 0.0, %v1164
        %1166 = vmatmul.f32.gmra.mxu0 %v1127
        %v1167 = vpop.f32.mrf.mxu0
        %v1168 = vadd.f32 0.0, %v1167
        %1169 = vmatmul.f32.gmra.mxu0 %v1130
        %v1170 = vpop.f32.mrf.mxu0
        %v1171 = vadd.f32 0.0, %v1170
        %1172 = vmatmul.f32.gmra.mxu0 %v1133
        %v1173 = vpop.f32.mrf.mxu0
        %v1174 = vadd.f32 0.0, %v1173
        %1175 = vdwg.mxu0
        %v1176 = vadd.f32 %v954, %v1153
        %v1177 = vadd.f32 %v955, %v1156
        %v1178 = vadd.f32 %v956, %v1159
        %v1179 = vadd.f32 %v957, %v1162
        %v1180 = vadd.f32 %v958, %v1165
        %v1181 = vadd.f32 %v959, %v1168
        %v1182 = vadd.f32 %v960, %v1171
        %v1183 = vadd.f32 %v961, %v1174
        %s1184 = scalar_lea.vmem %s2, 192
        %v1185 = vld [vmem:[%s1184] sm:$0xff]
        %v1186 = vld [vmem:[%s1184 + $0x8] sm:$0xff]
        %v1187 = vld [vmem:[%s1184 + $0x10] sm:$0xff]
        %v1188 = vld [vmem:[%s1184 + $0x18] sm:$0xff]
        %v1189 = vld [vmem:[%s1184 + $0x20] sm:$0xff]
        %v1190 = vld [vmem:[%s1184 + $0x28] sm:$0xff]
        %v1191 = vld [vmem:[%s1184 + $0x30] sm:$0xff]
        %v1192 = vld [vmem:[%s1184 + $0x38] sm:$0xff]
        %s1193 = scalar_lea.vmem %s3, 192
        %v1194 = vld [vmem:[%s1193] sm:$0xff]
        %v1195 = vld [vmem:[%s1193 + $0x8] sm:$0xff]
        %v1196 = vld [vmem:[%s1193 + $0x10] sm:$0xff]
        %v1197 = vld [vmem:[%s1193 + $0x18] sm:$0xff]
        %v1198 = vld [vmem:[%s1193 + $0x20] sm:$0xff]
        %v1199 = vld [vmem:[%s1193 + $0x28] sm:$0xff]
        %v1200 = vld [vmem:[%s1193 + $0x30] sm:$0xff]
        %v1201 = vld [vmem:[%s1193 + $0x38] sm:$0xff]
        %1203 = vset.pattern.permute.xlu0 0
        %1204 = vperm.xlu0 %1203, %v1194
        %v1205 = vpop.permute.xlu0 %1204
        %1208 = vset.pattern.permute.xlu0 0
        %1209 = vperm.xlu0 %1208, %v1195
        %v1210 = vpop.permute.xlu0 %1209
        %1213 = vset.pattern.permute.xlu0 0
        %1214 = vperm.xlu0 %1213, %v1196
        %v1215 = vpop.permute.xlu0 %1214
        %1218 = vset.pattern.permute.xlu0 0
        %1219 = vperm.xlu0 %1218, %v1197
        %v1220 = vpop.permute.xlu0 %1219
        %1223 = vset.pattern.permute.xlu0 0
        %1224 = vperm.xlu0 %1223, %v1198
        %v1225 = vpop.permute.xlu0 %1224
        %1228 = vset.pattern.permute.xlu0 0
        %1229 = vperm.xlu0 %1228, %v1199
        %v1230 = vpop.permute.xlu0 %1229
        %1233 = vset.pattern.permute.xlu0 0
        %1234 = vperm.xlu0 %1233, %v1200
        %v1235 = vpop.permute.xlu0 %1234
        %1238 = vset.pattern.permute.xlu0 0
        %1239 = vperm.xlu0 %1238, %v1201
        %v1240 = vpop.permute.xlu0 %1239
        %1242 = vrot.lane.b32.xlu0 %v457, 80
        %v1243 = vpop.permute.xlu0 %1242
        %1244 = vrot.lane.b32.xlu0 %v458, 80
        %v1245 = vpop.permute.xlu0 %1244
        %1246 = vrot.lane.b32.xlu0 %v459, 80
        %v1247 = vpop.permute.xlu0 %1246
        %1248 = vrot.lane.b32.xlu0 %v460, 80
        %v1249 = vpop.permute.xlu0 %1248
        %1250 = vrot.lane.b32.xlu0 %v461, 80
        %v1251 = vpop.permute.xlu0 %1250
        %1252 = vrot.lane.b32.xlu0 %v462, 80
        %v1253 = vpop.permute.xlu0 %1252
        %1254 = vrot.lane.b32.xlu0 %v463, 80
        %v1255 = vpop.permute.xlu0 %1254
        %1256 = vrot.lane.b32.xlu0 %v464, 80
        %v1257 = vpop.permute.xlu0 %1256
        %v1267 = vsel %vm477, %v1185, 0
        %v1270 = vsel %vm477, %v1186, 0
        %v1273 = vsel %vm477, %v1187, 0
        %v1276 = vsel %vm477, %v1188, 0
        %v1279 = vsel %vm477, %v1189, 0
        %v1282 = vsel %vm477, %v1190, 0
        %v1285 = vsel %vm477, %v1191, 0
        %v1288 = vsel %vm477, %v1192, 0
        %1290 = vmatpush.msra.mxu0 0.0
        %1291 = vmatpush.msra.mxu0 0.0
        %1292 = vmatpush.msra.mxu0 0.0
        %1293 = vmatpush.msra.mxu0 0.0
        %1294 = vmatpush.msra.mxu0 0.0
        %1295 = vmatpush.msra.mxu0 0.0
        %1296 = vmatpush.msra.mxu0 0.0
        %1297 = vmatpush.msra.mxu0 0.0
        %1298 = vmatpush.msra.mxu0 %v1257
        %1299 = vmatpush.msra.mxu0 %v1255
        %1300 = vmatpush.msra.mxu0 %v1253
        %1301 = vmatpush.msra.mxu0 %v1251
        %1302 = vmatpush.msra.mxu0 %v1249
        %1303 = vmatpush.msra.mxu0 %v1247
        %1304 = vmatpush.msra.mxu0 %v1245
        %1305 = vmatpush.msra.mxu0 %v1243
        %1306 = vmatmul.f32.gmra.mxu0 %v1267
        %v1307 = vpop.f32.mrf.mxu0
        %v1308 = vadd.f32 %v1205, %v1307
        %1309 = vmatmul.f32.gmra.mxu0 %v1270
        %v1310 = vpop.f32.mrf.mxu0
        %v1311 = vadd.f32 %v1210, %v1310
        %1312 = vmatmul.f32.gmra.mxu0 %v1273
        %v1313 = vpop.f32.mrf.mxu0
        %v1314 = vadd.f32 %v1215, %v1313
        %1315 = vmatmul.f32.gmra.mxu0 %v1276
        %v1316 = vpop.f32.mrf.mxu0
        %v1317 = vadd.f32 %v1220, %v1316
        %1318 = vmatmul.f32.gmra.mxu0 %v1279
        %v1319 = vpop.f32.mrf.mxu0
        %v1320 = vadd.f32 %v1225, %v1319
        %1321 = vmatmul.f32.gmra.mxu0 %v1282
        %v1322 = vpop.f32.mrf.mxu0
        %v1323 = vadd.f32 %v1230, %v1322
        %1324 = vmatmul.f32.gmra.mxu0 %v1285
        %v1325 = vpop.f32.mrf.mxu0
        %v1326 = vadd.f32 %v1235, %v1325
        %1327 = vmatmul.f32.gmra.mxu0 %v1288
        %v1328 = vpop.f32.mrf.mxu0
        %v1329 = vadd.f32 %v1240, %v1328
        %1330 = vdwg.mxu0
        %v1332 = vsel %vm666, %v1308, 0
        %v1335 = vsel %vm666, %v1311, 0
        %v1338 = vsel %vm666, %v1314, 0
        %v1341 = vsel %vm666, %v1317, 0
        %v1344 = vsel %vm666, %v1320, 0
        %v1347 = vsel %vm666, %v1323, 0
        %v1350 = vsel %vm666, %v1326, 0
        %v1353 = vsel %vm666, %v1329, 0
        %1355 = vmatpush.msra.mxu0 0.0
        %1356 = vmatpush.msra.mxu0 0.0
        %1357 = vmatpush.msra.mxu0 0.0
        %1358 = vmatpush.msra.mxu0 0.0
        %1359 = vmatpush.msra.mxu0 0.0
        %1360 = vmatpush.msra.mxu0 0.0
        %1361 = vmatpush.msra.mxu0 0.0
        %1362 = vmatpush.msra.mxu0 0.0
        %1363 = vmatpush.msra.mxu0 0.0
        %1364 = vmatpush.msra.mxu0 0.0
        %1365 = vmatpush.msra.mxu0 0.0
        %1366 = vmatpush.msra.mxu0 0.0
        %1367 = vmatpush.msra.mxu0 0.0
        %1368 = vmatpush.msra.mxu0 0.0
        %1369 = vmatpush.msra.mxu0 %v472
        %1370 = vmatpush.msra.mxu0 %v471
        %1371 = vmatmul.f32.gmra.mxu0 %v1332
        %v1372 = vpop.f32.mrf.mxu0
        %v1373 = vadd.f32 0.0, %v1372
        %1374 = vmatmul.f32.gmra.mxu0 %v1335
        %v1375 = vpop.f32.mrf.mxu0
        %v1376 = vadd.f32 0.0, %v1375
        %1377 = vmatmul.f32.gmra.mxu0 %v1338
        %v1378 = vpop.f32.mrf.mxu0
        %v1379 = vadd.f32 0.0, %v1378
        %1380 = vmatmul.f32.gmra.mxu0 %v1341
        %v1381 = vpop.f32.mrf.mxu0
        %v1382 = vadd.f32 0.0, %v1381
        %1383 = vmatmul.f32.gmra.mxu0 %v1344
        %v1384 = vpop.f32.mrf.mxu0
        %v1385 = vadd.f32 0.0, %v1384
        %1386 = vmatmul.f32.gmra.mxu0 %v1347
        %v1387 = vpop.f32.mrf.mxu0
        %v1388 = vadd.f32 0.0, %v1387
        %1389 = vmatmul.f32.gmra.mxu0 %v1350
        %v1390 = vpop.f32.mrf.mxu0
        %v1391 = vadd.f32 0.0, %v1390
        %1392 = vmatmul.f32.gmra.mxu0 %v1353
        %v1393 = vpop.f32.mrf.mxu0
        %v1394 = vadd.f32 0.0, %v1393
        %1395 = vdwg.mxu0
        %v1396 = vadd.f32 %v1176, %v1373
        %v1397 = vadd.f32 %v1177, %v1376
        %v1398 = vadd.f32 %v1178, %v1379
        %v1399 = vadd.f32 %v1179, %v1382
        %v1400 = vadd.f32 %v1180, %v1385
        %v1401 = vadd.f32 %v1181, %v1388
        %v1402 = vadd.f32 %v1182, %v1391
        %v1403 = vadd.f32 %v1183, %v1394
        %v1404 = vld [vmem:[%s6] sm:$0xff]
        %v1405 = vld [vmem:[%s6 + $0x8] sm:$0xff]
        %v1406 = vld [vmem:[%s6 + $0x10] sm:$0xff]
        %v1407 = vld [vmem:[%s6 + $0x18] sm:$0xff]
        %v1408 = vld [vmem:[%s6 + $0x20] sm:$0xff]
        %v1409 = vld [vmem:[%s6 + $0x28] sm:$0xff]
        %v1410 = vld [vmem:[%s6 + $0x30] sm:$0xff]
        %v1411 = vld [vmem:[%s6 + $0x38] sm:$0xff]
        %v1412 = vld [vmem:[%s7] sm:$0x1]
        %v1414 = vperm.slane %v1412, 0
        %v1417 = vsel %vm477, %v449, 0
        %v1420 = vsel %vm477, %v450, 0
        %v1423 = vsel %vm477, %v451, 0
        %v1426 = vsel %vm477, %v452, 0
        %v1429 = vsel %vm477, %v453, 0
        %v1432 = vsel %vm477, %v454, 0
        %v1435 = vsel %vm477, %v455, 0
        %v1438 = vsel %vm477, %v456, 0
        %1440 = vmatpush.msra.mxu0 0.0
        %1441 = vmatpush.msra.mxu0 0.0
        %1442 = vmatpush.msra.mxu0 0.0
        %1443 = vmatpush.msra.mxu0 0.0
        %1444 = vmatpush.msra.mxu0 0.0
        %1445 = vmatpush.msra.mxu0 0.0
        %1446 = vmatpush.msra.mxu0 0.0
        %1447 = vmatpush.msra.mxu0 0.0
        %1448 = vmatpush.msra.mxu0 %v1411
        %1449 = vmatpush.msra.mxu0 %v1410
        %1450 = vmatpush.msra.mxu0 %v1409
        %1451 = vmatpush.msra.mxu0 %v1408
        %1452 = vmatpush.msra.mxu0 %v1407
        %1453 = vmatpush.msra.mxu0 %v1406
        %1454 = vmatpush.msra.mxu0 %v1405
        %1455 = vmatpush.msra.mxu0 %v1404
        %1456 = vmatmul.f32.gmra.mxu0 %v1417
        %v1457 = vpop.f32.mrf.mxu0
        %v1458 = vadd.f32 %v1414, %v1457
        %1459 = vmatmul.f32.gmra.mxu0 %v1420
        %v1460 = vpop.f32.mrf.mxu0
        %v1461 = vadd.f32 %v1414, %v1460
        %1462 = vmatmul.f32.gmra.mxu0 %v1423
        %v1463 = vpop.f32.mrf.mxu0
        %v1464 = vadd.f32 %v1414, %v1463
        %1465 = vmatmul.f32.gmra.mxu0 %v1426
        %v1466 = vpop.f32.mrf.mxu0
        %v1467 = vadd.f32 %v1414, %v1466
        %1468 = vmatmul.f32.gmra.mxu0 %v1429
        %v1469 = vpop.f32.mrf.mxu0
        %v1470 = vadd.f32 %v1414, %v1469
        %1471 = vmatmul.f32.gmra.mxu0 %v1432
        %v1472 = vpop.f32.mrf.mxu0
        %v1473 = vadd.f32 %v1414, %v1472
        %1474 = vmatmul.f32.gmra.mxu0 %v1435
        %v1475 = vpop.f32.mrf.mxu0
        %v1476 = vadd.f32 %v1414, %v1475
        %1477 = vmatmul.f32.gmra.mxu0 %v1438
        %v1478 = vpop.f32.mrf.mxu0
        %v1479 = vadd.f32 %v1414, %v1478
        %1480 = vdwg.mxu0
        %v1481 = vmul.f32 %v1458, 0.35355338
        %v1482 = vmul.f32 %v1461, 0.35355338
        %v1483 = vmul.f32 %v1464, 0.35355338
        %v1484 = vmul.f32 %v1467, 0.35355338
        %v1485 = vmul.f32 %v1470, 0.35355338
        %v1486 = vmul.f32 %v1473, 0.35355338
        %v1487 = vmul.f32 %v1476, 0.35355338
        %v1488 = vmul.f32 %v1479, 0.35355338
        %1497 = vrot.lane.b32.xlu0 %v1396, 96
        %v1498 = vpop.permute.xlu0 %1497
        %1499 = vrot.lane.b32.xlu0 %v1397, 96
        %v1500 = vpop.permute.xlu0 %1499
        %1501 = vrot.lane.b32.xlu0 %v1398, 96
        %v1502 = vpop.permute.xlu0 %1501
        %1503 = vrot.lane.b32.xlu0 %v1399, 96
        %v1504 = vpop.permute.xlu0 %1503
        %1505 = vrot.lane.b32.xlu0 %v1400, 96
        %v1506 = vpop.permute.xlu0 %1505
        %1507 = vrot.lane.b32.xlu0 %v1401, 96
        %v1508 = vpop.permute.xlu0 %1507
        %1509 = vrot.lane.b32.xlu0 %v1402, 96
        %v1510 = vpop.permute.xlu0 %1509
        %1511 = vrot.lane.b32.xlu0 %v1403, 96
        %v1512 = vpop.permute.xlu0 %1511
        %vm1513 = vcmask 64512
        %v1515 = vsel %vm1513, %v1481, 0
        %v1518 = vsel %vm1513, %v1482, 0
        %v1521 = vsel %vm1513, %v1483, 0
        %v1524 = vsel %vm1513, %v1484, 0
        %v1527 = vsel %vm1513, %v1485, 0
        %v1530 = vsel %vm1513, %v1486, 0
        %v1533 = vsel %vm1513, %v1487, 0
        %v1536 = vsel %vm1513, %v1488, 0
        %v1538 = vsel %vm1513, %v1498, 0
        %v1540 = vsel %vm1513, %v1500, 0
        %v1542 = vsel %vm1513, %v1502, 0
        %v1544 = vsel %vm1513, %v1504, 0
        %v1546 = vsel %vm1513, %v1506, 0
        %v1548 = vsel %vm1513, %v1508, 0
        %v1550 = vsel %vm1513, %v1510, 0
        %v1552 = vsel %vm1513, %v1512, 0
        %1554 = vmatpush.xpose.msra.mxu0 0.0
        %1555 = vmatpush.xpose.msra.mxu0 0.0
        %1556 = vmatpush.xpose.msra.mxu0 0.0
        %1557 = vmatpush.xpose.msra.mxu0 0.0
        %1558 = vmatpush.xpose.msra.mxu0 0.0
        %1559 = vmatpush.xpose.msra.mxu0 0.0
        %1560 = vmatpush.xpose.msra.mxu0 0.0
        %1561 = vmatpush.xpose.msra.mxu0 0.0
        %1562 = vmatpush.xpose.msra.mxu0 %v1552
        %1563 = vmatpush.xpose.msra.mxu0 %v1550
        %1564 = vmatpush.xpose.msra.mxu0 %v1548
        %1565 = vmatpush.xpose.msra.mxu0 %v1546
        %1566 = vmatpush.xpose.msra.mxu0 %v1544
        %1567 = vmatpush.xpose.msra.mxu0 %v1542
        %1568 = vmatpush.xpose.msra.mxu0 %v1540
        %1569 = vmatpush.xpose.msra.mxu0 %v1538
        %1570 = vmatmul.f32.gmra.mxu0 %v1515
        %v1571 = vpop.f32.mrf.mxu0
        %v1572 = vadd.f32 0.0, %v1571
        %1573 = vmatmul.f32.gmra.mxu0 %v1518
        %v1574 = vpop.f32.mrf.mxu0
        %v1575 = vadd.f32 0.0, %v1574
        %1576 = vmatmul.f32.gmra.mxu0 %v1521
        %v1577 = vpop.f32.mrf.mxu0
        %v1578 = vadd.f32 0.0, %v1577
        %1579 = vmatmul.f32.gmra.mxu0 %v1524
        %v1580 = vpop.f32.mrf.mxu0
        %v1581 = vadd.f32 0.0, %v1580
        %1582 = vmatmul.f32.gmra.mxu0 %v1527
        %v1583 = vpop.f32.mrf.mxu0
        %v1584 = vadd.f32 0.0, %v1583
        %1585 = vmatmul.f32.gmra.mxu0 %v1530
        %v1586 = vpop.f32.mrf.mxu0
        %v1587 = vadd.f32 0.0, %v1586
        %1588 = vmatmul.f32.gmra.mxu0 %v1533
        %v1589 = vpop.f32.mrf.mxu0
        %v1590 = vadd.f32 0.0, %v1589
        %1591 = vmatmul.f32.gmra.mxu0 %v1536
        %v1592 = vpop.f32.mrf.mxu0
        %v1593 = vadd.f32 0.0, %v1592
        %1594 = vdwg.mxu0
        %v1595 = vsel %vm477, %v1572, -inf
        %1596 = vmax.xlane.f32.xlu0 %v1595
        %v1597 = vpop.xlane.xlu0 %1596
        %v1598 = vsel %vm477, %v1575, -inf
        %1599 = vmax.xlane.f32.xlu0 %v1598
        %v1600 = vpop.xlane.xlu0 %1599
        %v1601 = vsel %vm477, %v1578, -inf
        %1602 = vmax.xlane.f32.xlu0 %v1601
        %v1603 = vpop.xlane.xlu0 %1602
        %v1604 = vsel %vm477, %v1581, -inf
        %1605 = vmax.xlane.f32.xlu0 %v1604
        %v1606 = vpop.xlane.xlu0 %1605
        %v1607 = vsel %vm477, %v1584, -inf
        %1608 = vmax.xlane.f32.xlu0 %v1607
        %v1609 = vpop.xlane.xlu0 %1608
        %v1610 = vsel %vm477, %v1587, -inf
        %1611 = vmax.xlane.f32.xlu0 %v1610
        %v1612 = vpop.xlane.xlu0 %1611
        %v1613 = vsel %vm477, %v1590, -inf
        %1614 = vmax.xlane.f32.xlu0 %v1613
        %v1615 = vpop.xlane.xlu0 %1614
        %v1616 = vsel %vm477, %v1593, -inf
        %1617 = vmax.xlane.f32.xlu0 %v1616
        %v1618 = vpop.xlane.xlu0 %1617
        %v1619 = vsub.f32 %v1572, %v1597
        %v1620 = vsub.f32 %v1575, %v1600
        %v1621 = vsub.f32 %v1578, %v1603
        %v1622 = vsub.f32 %v1581, %v1606
        %v1623 = vsub.f32 %v1584, %v1609
        %v1624 = vsub.f32 %v1587, %v1612
        %v1625 = vsub.f32 %v1590, %v1615
        %v1626 = vsub.f32 %v1593, %v1618
        %v1627 = vmul.f32 %v1619, 1.442695
        %v1628 = vpow.pop %v1627
        %v1629 = vmul.f32 %v1620, 1.442695
        %v1630 = vpow.pop %v1629
        %v1631 = vmul.f32 %v1621, 1.442695
        %v1632 = vpow.pop %v1631
        %v1633 = vmul.f32 %v1622, 1.442695
        %v1634 = vpow.pop %v1633
        %v1635 = vmul.f32 %v1623, 1.442695
        %v1636 = vpow.pop %v1635
        %v1637 = vmul.f32 %v1624, 1.442695
        %v1638 = vpow.pop %v1637
        %v1639 = vmul.f32 %v1625, 1.442695
        %v1640 = vpow.pop %v1639
        %v1641 = vmul.f32 %v1626, 1.442695
        %v1642 = vpow.pop %v1641
        %v1643 = vsel %vm477, %v1628, 0.0
        %1644 = vadd.xlane.f32.xlu0 %v1643
        %v1645 = vpop.xlane.xlu0 %1644
        %v1646 = vsel %vm477, %v1630, 0.0
        %1647 = vadd.xlane.f32.xlu0 %v1646
        %v1648 = vpop.xlane.xlu0 %1647
        %v1649 = vsel %vm477, %v1632, 0.0
        %1650 = vadd.xlane.f32.xlu0 %v1649
        %v1651 = vpop.xlane.xlu0 %1650
        %v1652 = vsel %vm477, %v1634, 0.0
        %1653 = vadd.xlane.f32.xlu0 %v1652
        %v1654 = vpop.xlane.xlu0 %1653
        %v1655 = vsel %vm477, %v1636, 0.0
        %1656 = vadd.xlane.f32.xlu0 %v1655
        %v1657 = vpop.xlane.xlu0 %1656
        %v1658 = vsel %vm477, %v1638, 0.0
        %1659 = vadd.xlane.f32.xlu0 %v1658
        %v1660 = vpop.xlane.xlu0 %1659
        %v1661 = vsel %vm477, %v1640, 0.0
        %1662 = vadd.xlane.f32.xlu0 %v1661
        %v1663 = vpop.xlane.xlu0 %1662
        %v1664 = vsel %vm477, %v1642, 0.0
        %1665 = vadd.xlane.f32.xlu0 %v1664
        %v1666 = vpop.xlane.xlu0 %1665
        %v1667 = vrcp.pop %v1645
        %v1668 = vmul.f32 %v1645, %v1667
        %v1669 = vsub.f32 1.0, %v1668
        %v1670 = vmul.f32 %v1667, %v1669
        %v1671 = vadd.f32 %v1667, %v1670
        %vm1672 = vweird.f32 %v1645
        %vm1673 = vweird.f32 %v1667
        %vm1674 = vmor %vm1672, %vm1673
        %v1675 = vsel %vm1674, %v1667, %v1671
        %v1676 = vand.u32 2147483647, %v1645
        %vm1677 = vcmp.eq.f32.partialorder %v1676, 8.507059e+37
        %v1678 = vand.u32 %v1645, 2147483648
        %v1679 = vor.u32 1.1754944e-38, %v1678
        %v1680 = vsel %vm1677, %v1679, %v1675
        %v1681 = vmul.f32 1.0, %v1680
        %v1682 = vrcp.pop %v1648
        %v1683 = vmul.f32 %v1648, %v1682
        %v1684 = vsub.f32 1.0, %v1683
        %v1685 = vmul.f32 %v1682, %v1684
        %v1686 = vadd.f32 %v1682, %v1685
        %vm1687 = vweird.f32 %v1648
        %vm1688 = vweird.f32 %v1682
        %vm1689 = vmor %vm1687, %vm1688
        %v1690 = vsel %vm1689, %v1682, %v1686
        %v1691 = vand.u32 2147483647, %v1648
        %vm1692 = vcmp.eq.f32.partialorder %v1691, 8.507059e+37
        %v1693 = vand.u32 %v1648, 2147483648
        %v1694 = vor.u32 1.1754944e-38, %v1693
        %v1695 = vsel %vm1692, %v1694, %v1690
        %v1696 = vmul.f32 1.0, %v1695
        %v1697 = vrcp.pop %v1651
        %v1698 = vmul.f32 %v1651, %v1697
        %v1699 = vsub.f32 1.0, %v1698
        %v1700 = vmul.f32 %v1697, %v1699
        %v1701 = vadd.f32 %v1697, %v1700
        %vm1702 = vweird.f32 %v1651
        %vm1703 = vweird.f32 %v1697
        %vm1704 = vmor %vm1702, %vm1703
        %v1705 = vsel %vm1704, %v1697, %v1701
        %v1706 = vand.u32 2147483647, %v1651
        %vm1707 = vcmp.eq.f32.partialorder %v1706, 8.507059e+37
        %v1708 = vand.u32 %v1651, 2147483648
        %v1709 = vor.u32 1.1754944e-38, %v1708
        %v1710 = vsel %vm1707, %v1709, %v1705
        %v1711 = vmul.f32 1.0, %v1710
        %v1712 = vrcp.pop %v1654
        %v1713 = vmul.f32 %v1654, %v1712
        %v1714 = vsub.f32 1.0, %v1713
        %v1715 = vmul.f32 %v1712, %v1714
        %v1716 = vadd.f32 %v1712, %v1715
        %vm1717 = vweird.f32 %v1654
        %vm1718 = vweird.f32 %v1712
        %vm1719 = vmor %vm1717, %vm1718
        %v1720 = vsel %vm1719, %v1712, %v1716
        %v1721 = vand.u32 2147483647, %v1654
        %vm1722 = vcmp.eq.f32.partialorder %v1721, 8.507059e+37
        %v1723 = vand.u32 %v1654, 2147483648
        %v1724 = vor.u32 1.1754944e-38, %v1723
        %v1725 = vsel %vm1722, %v1724, %v1720
        %v1726 = vmul.f32 1.0, %v1725
        %v1727 = vrcp.pop %v1657
        %v1728 = vmul.f32 %v1657, %v1727
        %v1729 = vsub.f32 1.0, %v1728
        %v1730 = vmul.f32 %v1727, %v1729
        %v1731 = vadd.f32 %v1727, %v1730
        %vm1732 = vweird.f32 %v1657
        %vm1733 = vweird.f32 %v1727
        %vm1734 = vmor %vm1732, %vm1733
        %v1735 = vsel %vm1734, %v1727, %v1731
        %v1736 = vand.u32 2147483647, %v1657
        %vm1737 = vcmp.eq.f32.partialorder %v1736, 8.507059e+37
        %v1738 = vand.u32 %v1657, 2147483648
        %v1739 = vor.u32 1.1754944e-38, %v1738
        %v1740 = vsel %vm1737, %v1739, %v1735
        %v1741 = vmul.f32 1.0, %v1740
        %v1742 = vrcp.pop %v1660
        %v1743 = vmul.f32 %v1660, %v1742
        %v1744 = vsub.f32 1.0, %v1743
        %v1745 = vmul.f32 %v1742, %v1744
        %v1746 = vadd.f32 %v1742, %v1745
        %vm1747 = vweird.f32 %v1660
        %vm1748 = vweird.f32 %v1742
        %vm1749 = vmor %vm1747, %vm1748
        %v1750 = vsel %vm1749, %v1742, %v1746
        %v1751 = vand.u32 2147483647, %v1660
        %vm1752 = vcmp.eq.f32.partialorder %v1751, 8.507059e+37
        %v1753 = vand.u32 %v1660, 2147483648
        %v1754 = vor.u32 1.1754944e-38, %v1753
        %v1755 = vsel %vm1752, %v1754, %v1750
        %v1756 = vmul.f32 1.0, %v1755
        %v1757 = vrcp.pop %v1663
        %v1758 = vmul.f32 %v1663, %v1757
        %v1759 = vsub.f32 1.0, %v1758
        %v1760 = vmul.f32 %v1757, %v1759
        %v1761 = vadd.f32 %v1757, %v1760
        %vm1762 = vweird.f32 %v1663
        %vm1763 = vweird.f32 %v1757
        %vm1764 = vmor %vm1762, %vm1763
        %v1765 = vsel %vm1764, %v1757, %v1761
        %v1766 = vand.u32 2147483647, %v1663
        %vm1767 = vcmp.eq.f32.partialorder %v1766, 8.507059e+37
        %v1768 = vand.u32 %v1663, 2147483648
        %v1769 = vor.u32 1.1754944e-38, %v1768
        %v1770 = vsel %vm1767, %v1769, %v1765
        %v1771 = vmul.f32 1.0, %v1770
        %v1772 = vrcp.pop %v1666
        %v1773 = vmul.f32 %v1666, %v1772
        %v1774 = vsub.f32 1.0, %v1773
        %v1775 = vmul.f32 %v1772, %v1774
        %v1776 = vadd.f32 %v1772, %v1775
        %vm1777 = vweird.f32 %v1666
        %vm1778 = vweird.f32 %v1772
        %vm1779 = vmor %vm1777, %vm1778
        %v1780 = vsel %vm1779, %v1772, %v1776
        %v1781 = vand.u32 2147483647, %v1666
        %vm1782 = vcmp.eq.f32.partialorder %v1781, 8.507059e+37
        %v1783 = vand.u32 %v1666, 2147483648
        %v1784 = vor.u32 1.1754944e-38, %v1783
        %v1785 = vsel %vm1782, %v1784, %v1780
        %v1786 = vmul.f32 1.0, %v1785
        %v1787 = vmul.f32 %v1628, %v1681
        %v1788 = vmul.f32 %v1630, %v1696
        %v1789 = vmul.f32 %v1632, %v1711
        %v1790 = vmul.f32 %v1634, %v1726
        %v1791 = vmul.f32 %v1636, %v1741
        %v1792 = vmul.f32 %v1638, %v1756
        %v1793 = vmul.f32 %v1640, %v1771
        %v1794 = vmul.f32 %v1642, %v1786
        %v1796 = vsel %vm477, %v1787, 0
        %v1799 = vsel %vm477, %v1788, 0
        %v1802 = vsel %vm477, %v1789, 0
        %v1805 = vsel %vm477, %v1790, 0
        %v1808 = vsel %vm477, %v1791, 0
        %v1811 = vsel %vm477, %v1792, 0
        %v1814 = vsel %vm477, %v1793, 0
        %v1817 = vsel %vm477, %v1794, 0
        %1819 = vmatpush.msra.mxu0 0.0
        %1820 = vmatpush.msra.mxu0 0.0
        %1821 = vmatpush.msra.mxu0 0.0
        %1822 = vmatpush.msra.mxu0 0.0
        %1823 = vmatpush.msra.mxu0 0.0
        %1824 = vmatpush.msra.mxu0 0.0
        %1825 = vmatpush.msra.mxu0 0.0
        %1826 = vmatpush.msra.mxu0 0.0
        %1827 = vmatpush.msra.mxu0 %v1403
        %1828 = vmatpush.msra.mxu0 %v1402
        %1829 = vmatpush.msra.mxu0 %v1401
        %1830 = vmatpush.msra.mxu0 %v1400
        %1831 = vmatpush.msra.mxu0 %v1399
        %1832 = vmatpush.msra.mxu0 %v1398
        %1833 = vmatpush.msra.mxu0 %v1397
        %1834 = vmatpush.msra.mxu0 %v1396
        %1835 = vmatmul.f32.gmra.mxu0 %v1796
        %v1836 = vpop.f32.mrf.mxu0
        %v1837 = vadd.f32 0.0, %v1836
        %1838 = vmatmul.f32.gmra.mxu0 %v1799
        %v1839 = vpop.f32.mrf.mxu0
        %v1840 = vadd.f32 0.0, %v1839
        %1841 = vmatmul.f32.gmra.mxu0 %v1802
        %v1842 = vpop.f32.mrf.mxu0
        %v1843 = vadd.f32 0.0, %v1842
        %1844 = vmatmul.f32.gmra.mxu0 %v1805
        %v1845 = vpop.f32.mrf.mxu0
        %v1846 = vadd.f32 0.0, %v1845
        %1847 = vmatmul.f32.gmra.mxu0 %v1808
        %v1848 = vpop.f32.mrf.mxu0
        %v1849 = vadd.f32 0.0, %v1848
        %1850 = vmatmul.f32.gmra.mxu0 %v1811
        %v1851 = vpop.f32.mrf.mxu0
        %v1852 = vadd.f32 0.0, %v1851
        %1853 = vmatmul.f32.gmra.mxu0 %v1814
        %v1854 = vpop.f32.mrf.mxu0
        %v1855 = vadd.f32 0.0, %v1854
        %1856 = vmatmul.f32.gmra.mxu0 %v1817
        %v1857 = vpop.f32.mrf.mxu0
        %v1858 = vadd.f32 0.0, %v1857
        %1859 = vdwg.mxu0
        %v1860 = vld [vmem:[%s8] sm:$0xff]
        %1861 = vrot.lane.b32.xlu0 %v1481, 120
        %v1862 = vpop.permute.xlu0 %1861
        %1863 = vrot.lane.b32.xlu0 %v1482, 120
        %v1864 = vpop.permute.xlu0 %1863
        %1865 = vrot.lane.b32.xlu0 %v1483, 120
        %v1866 = vpop.permute.xlu0 %1865
        %1867 = vrot.lane.b32.xlu0 %v1484, 120
        %v1868 = vpop.permute.xlu0 %1867
        %1869 = vrot.lane.b32.xlu0 %v1485, 120
        %v1870 = vpop.permute.xlu0 %1869
        %1871 = vrot.lane.b32.xlu0 %v1486, 120
        %v1872 = vpop.permute.xlu0 %1871
        %1873 = vrot.lane.b32.xlu0 %v1487, 120
        %v1874 = vpop.permute.xlu0 %1873
        %1875 = vrot.lane.b32.xlu0 %v1488, 120
        %v1876 = vpop.permute.xlu0 %1875
        %1877 = vrot.lane.b32.xlu0 %v1396, 88
        %v1878 = vpop.permute.xlu0 %1877
        %1879 = vrot.lane.b32.xlu0 %v1397, 88
        %v1880 = vpop.permute.xlu0 %1879
        %1881 = vrot.lane.b32.xlu0 %v1398, 88
        %v1882 = vpop.permute.xlu0 %1881
        %1883 = vrot.lane.b32.xlu0 %v1399, 88
        %v1884 = vpop.permute.xlu0 %1883
        %1885 = vrot.lane.b32.xlu0 %v1400, 88
        %v1886 = vpop.permute.xlu0 %1885
        %1887 = vrot.lane.b32.xlu0 %v1401, 88
        %v1888 = vpop.permute.xlu0 %1887
        %1889 = vrot.lane.b32.xlu0 %v1402, 88
        %v1890 = vpop.permute.xlu0 %1889
        %1891 = vrot.lane.b32.xlu0 %v1403, 88
        %v1892 = vpop.permute.xlu0 %1891
        %v1893 = vsel %vm1513, %v1862, 0
        %v1895 = vsel %vm1513, %v1864, 0
        %v1897 = vsel %vm1513, %v1866, 0
        %v1899 = vsel %vm1513, %v1868, 0
        %v1901 = vsel %vm1513, %v1870, 0
        %v1903 = vsel %vm1513, %v1872, 0
        %v1905 = vsel %vm1513, %v1874, 0
        %v1907 = vsel %vm1513, %v1876, 0
        %v1909 = vsel %vm1513, %v1878, 0
        %v1911 = vsel %vm1513, %v1880, 0
        %v1913 = vsel %vm1513, %v1882, 0
        %v1915 = vsel %vm1513, %v1884, 0
        %v1917 = vsel %vm1513, %v1886, 0
        %v1919 = vsel %vm1513, %v1888, 0
        %v1921 = vsel %vm1513, %v1890, 0
        %v1923 = vsel %vm1513, %v1892, 0
        %1925 = vmatpush.xpose.msra.mxu0 0.0
        %1926 = vmatpush.xpose.msra.mxu0 0.0
        %1927 = vmatpush.xpose.msra.mxu0 0.0
        %1928 = vmatpush.xpose.msra.mxu0 0.0
        %1929 = vmatpush.xpose.msra.mxu0 0.0
        %1930 = vmatpush.xpose.msra.mxu0 0.0
        %1931 = vmatpush.xpose.msra.mxu0 0.0
        %1932 = vmatpush.xpose.msra.mxu0 0.0
        %1933 = vmatpush.xpose.msra.mxu0 %v1923
        %1934 = vmatpush.xpose.msra.mxu0 %v1921
        %1935 = vmatpush.xpose.msra.mxu0 %v1919
        %1936 = vmatpush.xpose.msra.mxu0 %v1917
        %1937 = vmatpush.xpose.msra.mxu0 %v1915
        %1938 = vmatpush.xpose.msra.mxu0 %v1913
        %1939 = vmatpush.xpose.msra.mxu0 %v1911
        %1940 = vmatpush.xpose.msra.mxu0 %v1909
        %1941 = vmatmul.f32.gmra.mxu0 %v1893
        %v1942 = vpop.f32.mrf.mxu0
        %v1943 = vadd.f32 0.0, %v1942
        %1944 = vmatmul.f32.gmra.mxu0 %v1895
        %v1945 = vpop.f32.mrf.mxu0
        %v1946 = vadd.f32 0.0, %v1945
        %1947 = vmatmul.f32.gmra.mxu0 %v1897
        %v1948 = vpop.f32.mrf.mxu0
        %v1949 = vadd.f32 0.0, %v1948
        %1950 = vmatmul.f32.gmra.mxu0 %v1899
        %v1951 = vpop.f32.mrf.mxu0
        %v1952 = vadd.f32 0.0, %v1951
        %1953 = vmatmul.f32.gmra.mxu0 %v1901
        %v1954 = vpop.f32.mrf.mxu0
        %v1955 = vadd.f32 0.0, %v1954
        %1956 = vmatmul.f32.gmra.mxu0 %v1903
        %v1957 = vpop.f32.mrf.mxu0
        %v1958 = vadd.f32 0.0, %v1957
        %1959 = vmatmul.f32.gmra.mxu0 %v1905
        %v1960 = vpop.f32.mrf.mxu0
        %v1961 = vadd.f32 0.0, %v1960
        %1962 = vmatmul.f32.gmra.mxu0 %v1907
        %v1963 = vpop.f32.mrf.mxu0
        %v1964 = vadd.f32 0.0, %v1963
        %1965 = vdwg.mxu0
        %v1966 = vsel %vm477, %v1943, -inf
        %1967 = vmax.xlane.f32.xlu0 %v1966
        %v1968 = vpop.xlane.xlu0 %1967
        %v1969 = vsel %vm477, %v1946, -inf
        %1970 = vmax.xlane.f32.xlu0 %v1969
        %v1971 = vpop.xlane.xlu0 %1970
        %v1972 = vsel %vm477, %v1949, -inf
        %1973 = vmax.xlane.f32.xlu0 %v1972
        %v1974 = vpop.xlane.xlu0 %1973
        %v1975 = vsel %vm477, %v1952, -inf
        %1976 = vmax.xlane.f32.xlu0 %v1975
        %v1977 = vpop.xlane.xlu0 %1976
        %v1978 = vsel %vm477, %v1955, -inf
        %1979 = vmax.xlane.f32.xlu0 %v1978
        %v1980 = vpop.xlane.xlu0 %1979
        %v1981 = vsel %vm477, %v1958, -inf
        %1982 = vmax.xlane.f32.xlu0 %v1981
        %v1983 = vpop.xlane.xlu0 %1982
        %v1984 = vsel %vm477, %v1961, -inf
        %1985 = vmax.xlane.f32.xlu0 %v1984
        %v1986 = vpop.xlane.xlu0 %1985
        %v1987 = vsel %vm477, %v1964, -inf
        %1988 = vmax.xlane.f32.xlu0 %v1987
        %v1989 = vpop.xlane.xlu0 %1988
        %v1990 = vsub.f32 %v1943, %v1968
        %v1991 = vsub.f32 %v1946, %v1971
        %v1992 = vsub.f32 %v1949, %v1974
        %v1993 = vsub.f32 %v1952, %v1977
        %v1994 = vsub.f32 %v1955, %v1980
        %v1995 = vsub.f32 %v1958, %v1983
        %v1996 = vsub.f32 %v1961, %v1986
        %v1997 = vsub.f32 %v1964, %v1989
        %v1998 = vmul.f32 %v1990, 1.442695
        %v1999 = vpow.pop %v1998
        %v2000 = vmul.f32 %v1991, 1.442695
        %v2001 = vpow.pop %v2000
        %v2002 = vmul.f32 %v1992, 1.442695
        %v2003 = vpow.pop %v2002
        %v2004 = vmul.f32 %v1993, 1.442695
        %v2005 = vpow.pop %v2004
        %v2006 = vmul.f32 %v1994, 1.442695
        %v2007 = vpow.pop %v2006
        %v2008 = vmul.f32 %v1995, 1.442695
        %v2009 = vpow.pop %v2008
        %v2010 = vmul.f32 %v1996, 1.442695
        %v2011 = vpow.pop %v2010
        %v2012 = vmul.f32 %v1997, 1.442695
        %v2013 = vpow.pop %v2012
        %v2014 = vsel %vm477, %v1999, 0.0
        %2015 = vadd.xlane.f32.xlu0 %v2014
        %v2016 = vpop.xlane.xlu0 %2015
        %v2017 = vsel %vm477, %v2001, 0.0
        %2018 = vadd.xlane.f32.xlu0 %v2017
        %v2019 = vpop.xlane.xlu0 %2018
        %v2020 = vsel %vm477, %v2003, 0.0
        %2021 = vadd.xlane.f32.xlu0 %v2020
        %v2022 = vpop.xlane.xlu0 %2021
        %v2023 = vsel %vm477, %v2005, 0.0
        %2024 = vadd.xlane.f32.xlu0 %v2023
        %v2025 = vpop.xlane.xlu0 %2024
        %v2026 = vsel %vm477, %v2007, 0.0
        %2027 = vadd.xlane.f32.xlu0 %v2026
        %v2028 = vpop.xlane.xlu0 %2027
        %v2029 = vsel %vm477, %v2009, 0.0
        %2030 = vadd.xlane.f32.xlu0 %v2029
        %v2031 = vpop.xlane.xlu0 %2030
        %v2032 = vsel %vm477, %v2011, 0.0
        %2033 = vadd.xlane.f32.xlu0 %v2032
        %v2034 = vpop.xlane.xlu0 %2033
        %v2035 = vsel %vm477, %v2013, 0.0
        %2036 = vadd.xlane.f32.xlu0 %v2035
        %v2037 = vpop.xlane.xlu0 %2036
        %v2038 = vrcp.pop %v2016
        %v2039 = vmul.f32 %v2016, %v2038
        %v2040 = vsub.f32 1.0, %v2039
        %v2041 = vmul.f32 %v2038, %v2040
        %v2042 = vadd.f32 %v2038, %v2041
        %vm2043 = vweird.f32 %v2016
        %vm2044 = vweird.f32 %v2038
        %vm2045 = vmor %vm2043, %vm2044
        %v2046 = vsel %vm2045, %v2038, %v2042
        %v2047 = vand.u32 2147483647, %v2016
        %vm2048 = vcmp.eq.f32.partialorder %v2047, 8.507059e+37
        %v2049 = vand.u32 %v2016, 2147483648
        %v2050 = vor.u32 1.1754944e-38, %v2049
        %v2051 = vsel %vm2048, %v2050, %v2046
        %v2052 = vmul.f32 1.0, %v2051
        %v2053 = vrcp.pop %v2019
        %v2054 = vmul.f32 %v2019, %v2053
        %v2055 = vsub.f32 1.0, %v2054
        %v2056 = vmul.f32 %v2053, %v2055
        %v2057 = vadd.f32 %v2053, %v2056
        %vm2058 = vweird.f32 %v2019
        %vm2059 = vweird.f32 %v2053
        %vm2060 = vmor %vm2058, %vm2059
        %v2061 = vsel %vm2060, %v2053, %v2057
        %v2062 = vand.u32 2147483647, %v2019
        %vm2063 = vcmp.eq.f32.partialorder %v2062, 8.507059e+37
        %v2064 = vand.u32 %v2019, 2147483648
        %v2065 = vor.u32 1.1754944e-38, %v2064
        %v2066 = vsel %vm2063, %v2065, %v2061
        %v2067 = vmul.f32 1.0, %v2066
        %v2068 = vrcp.pop %v2022
        %v2069 = vmul.f32 %v2022, %v2068
        %v2070 = vsub.f32 1.0, %v2069
        %v2071 = vmul.f32 %v2068, %v2070
        %v2072 = vadd.f32 %v2068, %v2071
        %vm2073 = vweird.f32 %v2022
        %vm2074 = vweird.f32 %v2068
        %vm2075 = vmor %vm2073, %vm2074
        %v2076 = vsel %vm2075, %v2068, %v2072
        %v2077 = vand.u32 2147483647, %v2022
        %vm2078 = vcmp.eq.f32.partialorder %v2077, 8.507059e+37
        %v2079 = vand.u32 %v2022, 2147483648
        %v2080 = vor.u32 1.1754944e-38, %v2079
        %v2081 = vsel %vm2078, %v2080, %v2076
        %v2082 = vmul.f32 1.0, %v2081
        %v2083 = vrcp.pop %v2025
        %v2084 = vmul.f32 %v2025, %v2083
        %v2085 = vsub.f32 1.0, %v2084
        %v2086 = vmul.f32 %v2083, %v2085
        %v2087 = vadd.f32 %v2083, %v2086
        %vm2088 = vweird.f32 %v2025
        %vm2089 = vweird.f32 %v2083
        %vm2090 = vmor %vm2088, %vm2089
        %v2091 = vsel %vm2090, %v2083, %v2087
        %v2092 = vand.u32 2147483647, %v2025
        %vm2093 = vcmp.eq.f32.partialorder %v2092, 8.507059e+37
        %v2094 = vand.u32 %v2025, 2147483648
        %v2095 = vor.u32 1.1754944e-38, %v2094
        %v2096 = vsel %vm2093, %v2095, %v2091
        %v2097 = vmul.f32 1.0, %v2096
        %v2098 = vrcp.pop %v2028
        %v2099 = vmul.f32 %v2028, %v2098
        %v2100 = vsub.f32 1.0, %v2099
        %v2101 = vmul.f32 %v2098, %v2100
        %v2102 = vadd.f32 %v2098, %v2101
        %vm2103 = vweird.f32 %v2028
        %vm2104 = vweird.f32 %v2098
        %vm2105 = vmor %vm2103, %vm2104
        %v2106 = vsel %vm2105, %v2098, %v2102
        %v2107 = vand.u32 2147483647, %v2028
        %vm2108 = vcmp.eq.f32.partialorder %v2107, 8.507059e+37
        %v2109 = vand.u32 %v2028, 2147483648
        %v2110 = vor.u32 1.1754944e-38, %v2109
        %v2111 = vsel %vm2108, %v2110, %v2106
        %v2112 = vmul.f32 1.0, %v2111
        %v2113 = vrcp.pop %v2031
        %v2114 = vmul.f32 %v2031, %v2113
        %v2115 = vsub.f32 1.0, %v2114
        %v2116 = vmul.f32 %v2113, %v2115
        %v2117 = vadd.f32 %v2113, %v2116
        %vm2118 = vweird.f32 %v2031
        %vm2119 = vweird.f32 %v2113
        %vm2120 = vmor %vm2118, %vm2119
        %v2121 = vsel %vm2120, %v2113, %v2117
        %v2122 = vand.u32 2147483647, %v2031
        %vm2123 = vcmp.eq.f32.partialorder %v2122, 8.507059e+37
        %v2124 = vand.u32 %v2031, 2147483648
        %v2125 = vor.u32 1.1754944e-38, %v2124
        %v2126 = vsel %vm2123, %v2125, %v2121
        %v2127 = vmul.f32 1.0, %v2126
        %v2128 = vrcp.pop %v2034
        %v2129 = vmul.f32 %v2034, %v2128
        %v2130 = vsub.f32 1.0, %v2129
        %v2131 = vmul.f32 %v2128, %v2130
        %v2132 = vadd.f32 %v2128, %v2131
        %vm2133 = vweird.f32 %v2034
        %vm2134 = vweird.f32 %v2128
        %vm2135 = vmor %vm2133, %vm2134
        %v2136 = vsel %vm2135, %v2128, %v2132
        %v2137 = vand.u32 2147483647, %v2034
        %vm2138 = vcmp.eq.f32.partialorder %v2137, 8.507059e+37
        %v2139 = vand.u32 %v2034, 2147483648
        %v2140 = vor.u32 1.1754944e-38, %v2139
        %v2141 = vsel %vm2138, %v2140, %v2136
        %v2142 = vmul.f32 1.0, %v2141
        %v2143 = vrcp.pop %v2037
        %v2144 = vmul.f32 %v2037, %v2143
        %v2145 = vsub.f32 1.0, %v2144
        %v2146 = vmul.f32 %v2143, %v2145
        %v2147 = vadd.f32 %v2143, %v2146
        %vm2148 = vweird.f32 %v2037
        %vm2149 = vweird.f32 %v2143
        %vm2150 = vmor %vm2148, %vm2149
        %v2151 = vsel %vm2150, %v2143, %v2147
        %v2152 = vand.u32 2147483647, %v2037
        %vm2153 = vcmp.eq.f32.partialorder %v2152, 8.507059e+37
        %v2154 = vand.u32 %v2037, 2147483648
        %v2155 = vor.u32 1.1754944e-38, %v2154
        %v2156 = vsel %vm2153, %v2155, %v2151
        %v2157 = vmul.f32 1.0, %v2156
        %v2158 = vmul.f32 %v1999, %v2052
        %v2159 = vmul.f32 %v2001, %v2067
        %v2160 = vmul.f32 %v2003, %v2082
        %v2161 = vmul.f32 %v2005, %v2097
        %v2162 = vmul.f32 %v2007, %v2112
        %v2163 = vmul.f32 %v2009, %v2127
        %v2164 = vmul.f32 %v2011, %v2142
        %v2165 = vmul.f32 %v2013, %v2157
        %2166 = vrot.lane.b32.xlu0 %v1396, 120
        %v2167 = vpop.permute.xlu0 %2166
        %2168 = vrot.lane.b32.xlu0 %v1397, 120
        %v2169 = vpop.permute.xlu0 %2168
        %2170 = vrot.lane.b32.xlu0 %v1398, 120
        %v2171 = vpop.permute.xlu0 %2170
        %2172 = vrot.lane.b32.xlu0 %v1399, 120
        %v2173 = vpop.permute.xlu0 %2172
        %2174 = vrot.lane.b32.xlu0 %v1400, 120
        %v2175 = vpop.permute.xlu0 %2174
        %2176 = vrot.lane.b32.xlu0 %v1401, 120
        %v2177 = vpop.permute.xlu0 %2176
        %2178 = vrot.lane.b32.xlu0 %v1402, 120
        %v2179 = vpop.permute.xlu0 %2178
        %2180 = vrot.lane.b32.xlu0 %v1403, 120
        %v2181 = vpop.permute.xlu0 %2180
        %v2191 = vsel %vm477, %v2158, 0
        %v2194 = vsel %vm477, %v2159, 0
        %v2197 = vsel %vm477, %v2160, 0
        %v2200 = vsel %vm477, %v2161, 0
        %v2203 = vsel %vm477, %v2162, 0
        %v2206 = vsel %vm477, %v2163, 0
        %v2209 = vsel %vm477, %v2164, 0
        %v2212 = vsel %vm477, %v2165, 0
        %2214 = vmatpush.msra.mxu0 0.0
        %2215 = vmatpush.msra.mxu0 0.0
        %2216 = vmatpush.msra.mxu0 0.0
        %2217 = vmatpush.msra.mxu0 0.0
        %2218 = vmatpush.msra.mxu0 0.0
        %2219 = vmatpush.msra.mxu0 0.0
        %2220 = vmatpush.msra.mxu0 0.0
        %2221 = vmatpush.msra.mxu0 0.0
        %2222 = vmatpush.msra.mxu0 %v2181
        %2223 = vmatpush.msra.mxu0 %v2179
        %2224 = vmatpush.msra.mxu0 %v2177
        %2225 = vmatpush.msra.mxu0 %v2175
        %2226 = vmatpush.msra.mxu0 %v2173
        %2227 = vmatpush.msra.mxu0 %v2171
        %2228 = vmatpush.msra.mxu0 %v2169
        %2229 = vmatpush.msra.mxu0 %v2167
        %2230 = vmatmul.f32.gmra.mxu0 %v2191
        %v2231 = vpop.f32.mrf.mxu0
        %v2232 = vadd.f32 0.0, %v2231
        %2233 = vmatmul.f32.gmra.mxu0 %v2194
        %v2234 = vpop.f32.mrf.mxu0
        %v2235 = vadd.f32 0.0, %v2234
        %2236 = vmatmul.f32.gmra.mxu0 %v2197
        %v2237 = vpop.f32.mrf.mxu0
        %v2238 = vadd.f32 0.0, %v2237
        %2239 = vmatmul.f32.gmra.mxu0 %v2200
        %v2240 = vpop.f32.mrf.mxu0
        %v2241 = vadd.f32 0.0, %v2240
        %2242 = vmatmul.f32.gmra.mxu0 %v2203
        %v2243 = vpop.f32.mrf.mxu0
        %v2244 = vadd.f32 0.0, %v2243
        %2245 = vmatmul.f32.gmra.mxu0 %v2206
        %v2246 = vpop.f32.mrf.mxu0
        %v2247 = vadd.f32 0.0, %v2246
        %2248 = vmatmul.f32.gmra.mxu0 %v2209
        %v2249 = vpop.f32.mrf.mxu0
        %v2250 = vadd.f32 0.0, %v2249
        %2251 = vmatmul.f32.gmra.mxu0 %v2212
        %v2252 = vpop.f32.mrf.mxu0
        %v2253 = vadd.f32 0.0, %v2252
        %2254 = vdwg.mxu0
        %v2255 = vld [vmem:[%s8 + $0x8] sm:$0xff]
        %v2257 = vsel %vm1513, %v2232, 0
        %v2260 = vsel %vm1513, %v2235, 0
        %v2263 = vsel %vm1513, %v2238, 0
        %v2266 = vsel %vm1513, %v2241, 0
        %v2269 = vsel %vm1513, %v2244, 0
        %v2272 = vsel %vm1513, %v2247, 0
        %v2275 = vsel %vm1513, %v2250, 0
        %v2278 = vsel %vm1513, %v2253, 0
        %2280 = vmatpush.msra.mxu0 0.0
        %2281 = vmatpush.msra.mxu0 0.0
        %2282 = vmatpush.msra.mxu0 0.0
        %2283 = vmatpush.msra.mxu0 0.0
        %2284 = vmatpush.msra.mxu0 0.0
        %2285 = vmatpush.msra.mxu0 0.0
        %2286 = vmatpush.msra.mxu0 0.0
        %2287 = vmatpush.msra.mxu0 0.0
        %2288 = vmatpush.msra.mxu0 0.0
        %2289 = vmatpush.msra.mxu0 0.0
        %2290 = vmatpush.msra.mxu0 0.0
        %2291 = vmatpush.msra.mxu0 0.0
        %2292 = vmatpush.msra.mxu0 0.0
        %2293 = vmatpush.msra.mxu0 0.0
        %2294 = vmatpush.msra.mxu0 0.0
        %2295 = vmatpush.msra.mxu0 %v2255
        %2296 = vmatmul.f32.gmra.mxu0 %v2257
        %v2297 = vpop.f32.mrf.mxu0
        %v2298 = vadd.f32 0.0, %v2297
        %2299 = vmatmul.f32.gmra.mxu0 %v2260
        %v2300 = vpop.f32.mrf.mxu0
        %v2301 = vadd.f32 0.0, %v2300
        %2302 = vmatmul.f32.gmra.mxu0 %v2263
        %v2303 = vpop.f32.mrf.mxu0
        %v2304 = vadd.f32 0.0, %v2303
        %2305 = vmatmul.f32.gmra.mxu0 %v2266
        %v2306 = vpop.f32.mrf.mxu0
        %v2307 = vadd.f32 0.0, %v2306
        %2308 = vmatmul.f32.gmra.mxu0 %v2269
        %v2309 = vpop.f32.mrf.mxu0
        %v2310 = vadd.f32 0.0, %v2309
        %2311 = vmatmul.f32.gmra.mxu0 %v2272
        %v2312 = vpop.f32.mrf.mxu0
        %v2313 = vadd.f32 0.0, %v2312
        %2314 = vmatmul.f32.gmra.mxu0 %v2275
        %v2315 = vpop.f32.mrf.mxu0
        %v2316 = vadd.f32 0.0, %v2315
        %2317 = vmatmul.f32.gmra.mxu0 %v2278
        %v2318 = vpop.f32.mrf.mxu0
        %v2319 = vadd.f32 0.0, %v2318
        %2320 = vdwg.mxu0
        %v2322 = vsel %vm1513, %v1837, 0
        %v2325 = vsel %vm1513, %v1840, 0
        %v2328 = vsel %vm1513, %v1843, 0
        %v2331 = vsel %vm1513, %v1846, 0
        %v2334 = vsel %vm1513, %v1849, 0
        %v2337 = vsel %vm1513, %v1852, 0
        %v2340 = vsel %vm1513, %v1855, 0
        %v2343 = vsel %vm1513, %v1858, 0
        %2345 = vmatpush.msra.mxu0 0.0
        %2346 = vmatpush.msra.mxu0 0.0
        %2347 = vmatpush.msra.mxu0 0.0
        %2348 = vmatpush.msra.mxu0 0.0
        %2349 = vmatpush.msra.mxu0 0.0
        %2350 = vmatpush.msra.mxu0 0.0
        %2351 = vmatpush.msra.mxu0 0.0
        %2352 = vmatpush.msra.mxu0 0.0
        %2353 = vmatpush.msra.mxu0 0.0
        %2354 = vmatpush.msra.mxu0 0.0
        %2355 = vmatpush.msra.mxu0 0.0
        %2356 = vmatpush.msra.mxu0 0.0
        %2357 = vmatpush.msra.mxu0 0.0
        %2358 = vmatpush.msra.mxu0 0.0
        %2359 = vmatpush.msra.mxu0 0.0
        %2360 = vmatpush.msra.mxu0 %v1860
        %2361 = vmatmul.f32.gmra.mxu0 %v2322
        %v2362 = vpop.f32.mrf.mxu0
        %v2363 = vadd.f32 %v2298, %v2362
        %2364 = vmatmul.f32.gmra.mxu0 %v2325
        %v2365 = vpop.f32.mrf.mxu0
        %v2366 = vadd.f32 %v2301, %v2365
        %2367 = vmatmul.f32.gmra.mxu0 %v2328
        %v2368 = vpop.f32.mrf.mxu0
        %v2369 = vadd.f32 %v2304, %v2368
        %2370 = vmatmul.f32.gmra.mxu0 %v2331
        %v2371 = vpop.f32.mrf.mxu0
        %v2372 = vadd.f32 %v2307, %v2371
        %2373 = vmatmul.f32.gmra.mxu0 %v2334
        %v2374 = vpop.f32.mrf.mxu0
        %v2375 = vadd.f32 %v2310, %v2374
        %2376 = vmatmul.f32.gmra.mxu0 %v2337
        %v2377 = vpop.f32.mrf.mxu0
        %v2378 = vadd.f32 %v2313, %v2377
        %2379 = vmatmul.f32.gmra.mxu0 %v2340
        %v2380 = vpop.f32.mrf.mxu0
        %v2381 = vadd.f32 %v2316, %v2380
        %2382 = vmatmul.f32.gmra.mxu0 %v2343
        %v2383 = vpop.f32.mrf.mxu0
        %v2384 = vadd.f32 %v2319, %v2383
        %2385 = vdwg.mxu0
        %2386 = vrot.lane.b32.xlu0 %v1481, 112
        %v2387 = vpop.permute.xlu0 %2386
        %2388 = vrot.lane.b32.xlu0 %v1482, 112
        %v2389 = vpop.permute.xlu0 %2388
        %2390 = vrot.lane.b32.xlu0 %v1483, 112
        %v2391 = vpop.permute.xlu0 %2390
        %2392 = vrot.lane.b32.xlu0 %v1484, 112
        %v2393 = vpop.permute.xlu0 %2392
        %2394 = vrot.lane.b32.xlu0 %v1485, 112
        %v2395 = vpop.permute.xlu0 %2394
        %2396 = vrot.lane.b32.xlu0 %v1486, 112
        %v2397 = vpop.permute.xlu0 %2396
        %2398 = vrot.lane.b32.xlu0 %v1487, 112
        %v2399 = vpop.permute.xlu0 %2398
        %2400 = vrot.lane.b32.xlu0 %v1488, 112
        %v2401 = vpop.permute.xlu0 %2400
        %2402 = vrot.lane.b32.xlu0 %v1396, 80
        %v2403 = vpop.permute.xlu0 %2402
        %2404 = vrot.lane.b32.xlu0 %v1397, 80
        %v2405 = vpop.permute.xlu0 %2404
        %2406 = vrot.lane.b32.xlu0 %v1398, 80
        %v2407 = vpop.permute.xlu0 %2406
        %2408 = vrot.lane.b32.xlu0 %v1399, 80
        %v2409 = vpop.permute.xlu0 %2408
        %2410 = vrot.lane.b32.xlu0 %v1400, 80
        %v2411 = vpop.permute.xlu0 %2410
        %2412 = vrot.lane.b32.xlu0 %v1401, 80
        %v2413 = vpop.permute.xlu0 %2412
        %2414 = vrot.lane.b32.xlu0 %v1402, 80
        %v2415 = vpop.permute.xlu0 %2414
        %2416 = vrot.lane.b32.xlu0 %v1403, 80
        %v2417 = vpop.permute.xlu0 %2416
        %v2418 = vsel %vm1513, %v2387, 0
        %v2420 = vsel %vm1513, %v2389, 0
        %v2422 = vsel %vm1513, %v2391, 0
        %v2424 = vsel %vm1513, %v2393, 0
        %v2426 = vsel %vm1513, %v2395, 0
        %v2428 = vsel %vm1513, %v2397, 0
        %v2430 = vsel %vm1513, %v2399, 0
        %v2432 = vsel %vm1513, %v2401, 0
        %v2434 = vsel %vm1513, %v2403, 0
        %v2436 = vsel %vm1513, %v2405, 0
        %v2438 = vsel %vm1513, %v2407, 0
        %v2440 = vsel %vm1513, %v2409, 0
        %v2442 = vsel %vm1513, %v2411, 0
        %v2444 = vsel %vm1513, %v2413, 0
        %v2446 = vsel %vm1513, %v2415, 0
        %v2448 = vsel %vm1513, %v2417, 0
        %2450 = vmatpush.xpose.msra.mxu0 0.0
        %2451 = vmatpush.xpose.msra.mxu0 0.0
        %2452 = vmatpush.xpose.msra.mxu0 0.0
        %2453 = vmatpush.xpose.msra.mxu0 0.0
        %2454 = vmatpush.xpose.msra.mxu0 0.0
        %2455 = vmatpush.xpose.msra.mxu0 0.0
        %2456 = vmatpush.xpose.msra.mxu0 0.0
        %2457 = vmatpush.xpose.msra.mxu0 0.0
        %2458 = vmatpush.xpose.msra.mxu0 %v2448
        %2459 = vmatpush.xpose.msra.mxu0 %v2446
        %2460 = vmatpush.xpose.msra.mxu0 %v2444
        %2461 = vmatpush.xpose.msra.mxu0 %v2442
        %2462 = vmatpush.xpose.msra.mxu0 %v2440
        %2463 = vmatpush.xpose.msra.mxu0 %v2438
        %2464 = vmatpush.xpose.msra.mxu0 %v2436
        %2465 = vmatpush.xpose.msra.mxu0 %v2434
        %2466 = vmatmul.f32.gmra.mxu0 %v2418
        %v2467 = vpop.f32.mrf.mxu0
        %v2468 = vadd.f32 0.0, %v2467
        %2469 = vmatmul.f32.gmra.mxu0 %v2420
        %v2470 = vpop.f32.mrf.mxu0
        %v2471 = vadd.f32 0.0, %v2470
        %2472 = vmatmul.f32.gmra.mxu0 %v2422
        %v2473 = vpop.f32.mrf.mxu0
        %v2474 = vadd.f32 0.0, %v2473
        %2475 = vmatmul.f32.gmra.mxu0 %v2424
        %v2476 = vpop.f32.mrf.mxu0
        %v2477 = vadd.f32 0.0, %v2476
        %2478 = vmatmul.f32.gmra.mxu0 %v2426
        %v2479 = vpop.f32.mrf.mxu0
        %v2480 = vadd.f32 0.0, %v2479
        %2481 = vmatmul.f32.gmra.mxu0 %v2428
        %v2482 = vpop.f32.mrf.mxu0
        %v2483 = vadd.f32 0.0, %v2482
        %2484 = vmatmul.f32.gmra.mxu0 %v2430
        %v2485 = vpop.f32.mrf.mxu0
        %v2486 = vadd.f32 0.0, %v2485
        %2487 = vmatmul.f32.gmra.mxu0 %v2432
        %v2488 = vpop.f32.mrf.mxu0
        %v2489 = vadd.f32 0.0, %v2488
        %2490 = vdwg.mxu0
        %v2491 = vsel %vm477, %v2468, -inf
        %2492 = vmax.xlane.f32.xlu0 %v2491
        %v2493 = vpop.xlane.xlu0 %2492
        %v2494 = vsel %vm477, %v2471, -inf
        %2495 = vmax.xlane.f32.xlu0 %v2494
        %v2496 = vpop.xlane.xlu0 %2495
        %v2497 = vsel %vm477, %v2474, -inf
        %2498 = vmax.xlane.f32.xlu0 %v2497
        %v2499 = vpop.xlane.xlu0 %2498
        %v2500 = vsel %vm477, %v2477, -inf
        %2501 = vmax.xlane.f32.xlu0 %v2500
        %v2502 = vpop.xlane.xlu0 %2501
        %v2503 = vsel %vm477, %v2480, -inf
        %2504 = vmax.xlane.f32.xlu0 %v2503
        %v2505 = vpop.xlane.xlu0 %2504
        %v2506 = vsel %vm477, %v2483, -inf
        %2507 = vmax.xlane.f32.xlu0 %v2506
        %v2508 = vpop.xlane.xlu0 %2507
        %v2509 = vsel %vm477, %v2486, -inf
        %2510 = vmax.xlane.f32.xlu0 %v2509
        %v2511 = vpop.xlane.xlu0 %2510
        %v2512 = vsel %vm477, %v2489, -inf
        %2513 = vmax.xlane.f32.xlu0 %v2512
        %v2514 = vpop.xlane.xlu0 %2513
        %v2515 = vsub.f32 %v2468, %v2493
        %v2516 = vsub.f32 %v2471, %v2496
        %v2517 = vsub.f32 %v2474, %v2499
        %v2518 = vsub.f32 %v2477, %v2502
        %v2519 = vsub.f32 %v2480, %v2505
        %v2520 = vsub.f32 %v2483, %v2508
        %v2521 = vsub.f32 %v2486, %v2511
        %v2522 = vsub.f32 %v2489, %v2514
        %v2523 = vmul.f32 %v2515, 1.442695
        %v2524 = vpow.pop %v2523
        %v2525 = vmul.f32 %v2516, 1.442695
        %v2526 = vpow.pop %v2525
        %v2527 = vmul.f32 %v2517, 1.442695
        %v2528 = vpow.pop %v2527
        %v2529 = vmul.f32 %v2518, 1.442695
        %v2530 = vpow.pop %v2529
        %v2531 = vmul.f32 %v2519, 1.442695
        %v2532 = vpow.pop %v2531
        %v2533 = vmul.f32 %v2520, 1.442695
        %v2534 = vpow.pop %v2533
        %v2535 = vmul.f32 %v2521, 1.442695
        %v2536 = vpow.pop %v2535
        %v2537 = vmul.f32 %v2522, 1.442695
        %v2538 = vpow.pop %v2537
        %v2539 = vsel %vm477, %v2524, 0.0
        %2540 = vadd.xlane.f32.xlu0 %v2539
        %v2541 = vpop.xlane.xlu0 %2540
        %v2542 = vsel %vm477, %v2526, 0.0
        %2543 = vadd.xlane.f32.xlu0 %v2542
        %v2544 = vpop.xlane.xlu0 %2543
        %v2545 = vsel %vm477, %v2528, 0.0
        %2546 = vadd.xlane.f32.xlu0 %v2545
        %v2547 = vpop.xlane.xlu0 %2546
        %v2548 = vsel %vm477, %v2530, 0.0
        %2549 = vadd.xlane.f32.xlu0 %v2548
        %v2550 = vpop.xlane.xlu0 %2549
        %v2551 = vsel %vm477, %v2532, 0.0
        %2552 = vadd.xlane.f32.xlu0 %v2551
        %v2553 = vpop.xlane.xlu0 %2552
        %v2554 = vsel %vm477, %v2534, 0.0
        %2555 = vadd.xlane.f32.xlu0 %v2554
        %v2556 = vpop.xlane.xlu0 %2555
        %v2557 = vsel %vm477, %v2536, 0.0
        %2558 = vadd.xlane.f32.xlu0 %v2557
        %v2559 = vpop.xlane.xlu0 %2558
        %v2560 = vsel %vm477, %v2538, 0.0
        %2561 = vadd.xlane.f32.xlu0 %v2560
        %v2562 = vpop.xlane.xlu0 %2561
        %v2563 = vrcp.pop %v2541
        %v2564 = vmul.f32 %v2541, %v2563
        %v2565 = vsub.f32 1.0, %v2564
        %v2566 = vmul.f32 %v2563, %v2565
        %v2567 = vadd.f32 %v2563, %v2566
        %vm2568 = vweird.f32 %v2541
        %vm2569 = vweird.f32 %v2563
        %vm2570 = vmor %vm2568, %vm2569
        %v2571 = vsel %vm2570, %v2563, %v2567
        %v2572 = vand.u32 2147483647, %v2541
        %vm2573 = vcmp.eq.f32.partialorder %v2572, 8.507059e+37
        %v2574 = vand.u32 %v2541, 2147483648
        %v2575 = vor.u32 1.1754944e-38, %v2574
        %v2576 = vsel %vm2573, %v2575, %v2571
        %v2577 = vmul.f32 1.0, %v2576
        %v2578 = vrcp.pop %v2544
        %v2579 = vmul.f32 %v2544, %v2578
        %v2580 = vsub.f32 1.0, %v2579
        %v2581 = vmul.f32 %v2578, %v2580
        %v2582 = vadd.f32 %v2578, %v2581
        %vm2583 = vweird.f32 %v2544
        %vm2584 = vweird.f32 %v2578
        %vm2585 = vmor %vm2583, %vm2584
        %v2586 = vsel %vm2585, %v2578, %v2582
        %v2587 = vand.u32 2147483647, %v2544
        %vm2588 = vcmp.eq.f32.partialorder %v2587, 8.507059e+37
        %v2589 = vand.u32 %v2544, 2147483648
        %v2590 = vor.u32 1.1754944e-38, %v2589
        %v2591 = vsel %vm2588, %v2590, %v2586
        %v2592 = vmul.f32 1.0, %v2591
        %v2593 = vrcp.pop %v2547
        %v2594 = vmul.f32 %v2547, %v2593
        %v2595 = vsub.f32 1.0, %v2594
        %v2596 = vmul.f32 %v2593, %v2595
        %v2597 = vadd.f32 %v2593, %v2596
        %vm2598 = vweird.f32 %v2547
        %vm2599 = vweird.f32 %v2593
        %vm2600 = vmor %vm2598, %vm2599
        %v2601 = vsel %vm2600, %v2593, %v2597
        %v2602 = vand.u32 2147483647, %v2547
        %vm2603 = vcmp.eq.f32.partialorder %v2602, 8.507059e+37
        %v2604 = vand.u32 %v2547, 2147483648
        %v2605 = vor.u32 1.1754944e-38, %v2604
        %v2606 = vsel %vm2603, %v2605, %v2601
        %v2607 = vmul.f32 1.0, %v2606
        %v2608 = vrcp.pop %v2550
        %v2609 = vmul.f32 %v2550, %v2608
        %v2610 = vsub.f32 1.0, %v2609
        %v2611 = vmul.f32 %v2608, %v2610
        %v2612 = vadd.f32 %v2608, %v2611
        %vm2613 = vweird.f32 %v2550
        %vm2614 = vweird.f32 %v2608
        %vm2615 = vmor %vm2613, %vm2614
        %v2616 = vsel %vm2615, %v2608, %v2612
        %v2617 = vand.u32 2147483647, %v2550
        %vm2618 = vcmp.eq.f32.partialorder %v2617, 8.507059e+37
        %v2619 = vand.u32 %v2550, 2147483648
        %v2620 = vor.u32 1.1754944e-38, %v2619
        %v2621 = vsel %vm2618, %v2620, %v2616
        %v2622 = vmul.f32 1.0, %v2621
        %v2623 = vrcp.pop %v2553
        %v2624 = vmul.f32 %v2553, %v2623
        %v2625 = vsub.f32 1.0, %v2624
        %v2626 = vmul.f32 %v2623, %v2625
        %v2627 = vadd.f32 %v2623, %v2626
        %vm2628 = vweird.f32 %v2553
        %vm2629 = vweird.f32 %v2623
        %vm2630 = vmor %vm2628, %vm2629
        %v2631 = vsel %vm2630, %v2623, %v2627
        %v2632 = vand.u32 2147483647, %v2553
        %vm2633 = vcmp.eq.f32.partialorder %v2632, 8.507059e+37
        %v2634 = vand.u32 %v2553, 2147483648
        %v2635 = vor.u32 1.1754944e-38, %v2634
        %v2636 = vsel %vm2633, %v2635, %v2631
        %v2637 = vmul.f32 1.0, %v2636
        %v2638 = vrcp.pop %v2556
        %v2639 = vmul.f32 %v2556, %v2638
        %v2640 = vsub.f32 1.0, %v2639
        %v2641 = vmul.f32 %v2638, %v2640
        %v2642 = vadd.f32 %v2638, %v2641
        %vm2643 = vweird.f32 %v2556
        %vm2644 = vweird.f32 %v2638
        %vm2645 = vmor %vm2643, %vm2644
        %v2646 = vsel %vm2645, %v2638, %v2642
        %v2647 = vand.u32 2147483647, %v2556
        %vm2648 = vcmp.eq.f32.partialorder %v2647, 8.507059e+37
        %v2649 = vand.u32 %v2556, 2147483648
        %v2650 = vor.u32 1.1754944e-38, %v2649
        %v2651 = vsel %vm2648, %v2650, %v2646
        %v2652 = vmul.f32 1.0, %v2651
        %v2653 = vrcp.pop %v2559
        %v2654 = vmul.f32 %v2559, %v2653
        %v2655 = vsub.f32 1.0, %v2654
        %v2656 = vmul.f32 %v2653, %v2655
        %v2657 = vadd.f32 %v2653, %v2656
        %vm2658 = vweird.f32 %v2559
        %vm2659 = vweird.f32 %v2653
        %vm2660 = vmor %vm2658, %vm2659
        %v2661 = vsel %vm2660, %v2653, %v2657
        %v2662 = vand.u32 2147483647, %v2559
        %vm2663 = vcmp.eq.f32.partialorder %v2662, 8.507059e+37
        %v2664 = vand.u32 %v2559, 2147483648
        %v2665 = vor.u32 1.1754944e-38, %v2664
        %v2666 = vsel %vm2663, %v2665, %v2661
        %v2667 = vmul.f32 1.0, %v2666
        %v2668 = vrcp.pop %v2562
        %v2669 = vmul.f32 %v2562, %v2668
        %v2670 = vsub.f32 1.0, %v2669
        %v2671 = vmul.f32 %v2668, %v2670
        %v2672 = vadd.f32 %v2668, %v2671
        %vm2673 = vweird.f32 %v2562
        %vm2674 = vweird.f32 %v2668
        %vm2675 = vmor %vm2673, %vm2674
        %v2676 = vsel %vm2675, %v2668, %v2672
        %v2677 = vand.u32 2147483647, %v2562
        %vm2678 = vcmp.eq.f32.partialorder %v2677, 8.507059e+37
        %v2679 = vand.u32 %v2562, 2147483648
        %v2680 = vor.u32 1.1754944e-38, %v2679
        %v2681 = vsel %vm2678, %v2680, %v2676
        %v2682 = vmul.f32 1.0, %v2681
        %v2683 = vmul.f32 %v2524, %v2577
        %v2684 = vmul.f32 %v2526, %v2592
        %v2685 = vmul.f32 %v2528, %v2607
        %v2686 = vmul.f32 %v2530, %v2622
        %v2687 = vmul.f32 %v2532, %v2637
        %v2688 = vmul.f32 %v2534, %v2652
        %v2689 = vmul.f32 %v2536, %v2667
        %v2690 = vmul.f32 %v2538, %v2682
        %2691 = vrot.lane.b32.xlu0 %v1396, 112
        %v2692 = vpop.permute.xlu0 %2691
        %2693 = vrot.lane.b32.xlu0 %v1397, 112
        %v2694 = vpop.permute.xlu0 %2693
        %2695 = vrot.lane.b32.xlu0 %v1398, 112
        %v2696 = vpop.permute.xlu0 %2695
        %2697 = vrot.lane.b32.xlu0 %v1399, 112
        %v2698 = vpop.permute.xlu0 %2697
        %2699 = vrot.lane.b32.xlu0 %v1400, 112
        %v2700 = vpop.permute.xlu0 %2699
        %2701 = vrot.lane.b32.xlu0 %v1401, 112
        %v2702 = vpop.permute.xlu0 %2701
        %2703 = vrot.lane.b32.xlu0 %v1402, 112
        %v2704 = vpop.permute.xlu0 %2703
        %2705 = vrot.lane.b32.xlu0 %v1403, 112
        %v2706 = vpop.permute.xlu0 %2705
        %v2716 = vsel %vm477, %v2683, 0
        %v2719 = vsel %vm477, %v2684, 0
        %v2722 = vsel %vm477, %v2685, 0
        %v2725 = vsel %vm477, %v2686, 0
        %v2728 = vsel %vm477, %v2687, 0
        %v2731 = vsel %vm477, %v2688, 0
        %v2734 = vsel %vm477, %v2689, 0
        %v2737 = vsel %vm477, %v2690, 0
        %2739 = vmatpush.msra.mxu0 0.0
        %2740 = vmatpush.msra.mxu0 0.0
        %2741 = vmatpush.msra.mxu0 0.0
        %2742 = vmatpush.msra.mxu0 0.0
        %2743 = vmatpush.msra.mxu0 0.0
        %2744 = vmatpush.msra.mxu0 0.0
        %2745 = vmatpush.msra.mxu0 0.0
        %2746 = vmatpush.msra.mxu0 0.0
        %2747 = vmatpush.msra.mxu0 %v2706
        %2748 = vmatpush.msra.mxu0 %v2704
        %2749 = vmatpush.msra.mxu0 %v2702
        %2750 = vmatpush.msra.mxu0 %v2700
        %2751 = vmatpush.msra.mxu0 %v2698
        %2752 = vmatpush.msra.mxu0 %v2696
        %2753 = vmatpush.msra.mxu0 %v2694
        %2754 = vmatpush.msra.mxu0 %v2692
        %2755 = vmatmul.f32.gmra.mxu0 %v2716
        %v2756 = vpop.f32.mrf.mxu0
        %v2757 = vadd.f32 0.0, %v2756
        %2758 = vmatmul.f32.gmra.mxu0 %v2719
        %v2759 = vpop.f32.mrf.mxu0
        %v2760 = vadd.f32 0.0, %v2759
        %2761 = vmatmul.f32.gmra.mxu0 %v2722
        %v2762 = vpop.f32.mrf.mxu0
        %v2763 = vadd.f32 0.0, %v2762
        %2764 = vmatmul.f32.gmra.mxu0 %v2725
        %v2765 = vpop.f32.mrf.mxu0
        %v2766 = vadd.f32 0.0, %v2765
        %2767 = vmatmul.f32.gmra.mxu0 %v2728
        %v2768 = vpop.f32.mrf.mxu0
        %v2769 = vadd.f32 0.0, %v2768
        %2770 = vmatmul.f32.gmra.mxu0 %v2731
        %v2771 = vpop.f32.mrf.mxu0
        %v2772 = vadd.f32 0.0, %v2771
        %2773 = vmatmul.f32.gmra.mxu0 %v2734
        %v2774 = vpop.f32.mrf.mxu0
        %v2775 = vadd.f32 0.0, %v2774
        %2776 = vmatmul.f32.gmra.mxu0 %v2737
        %v2777 = vpop.f32.mrf.mxu0
        %v2778 = vadd.f32 0.0, %v2777
        %2779 = vdwg.mxu0
        %v2780 = vld [vmem:[%s8 + $0x10] sm:$0xff]
        %v2782 = vsel %vm1513, %v2757, 0
        %v2785 = vsel %vm1513, %v2760, 0
        %v2788 = vsel %vm1513, %v2763, 0
        %v2791 = vsel %vm1513, %v2766, 0
        %v2794 = vsel %vm1513, %v2769, 0
        %v2797 = vsel %vm1513, %v2772, 0
        %v2800 = vsel %vm1513, %v2775, 0
        %v2803 = vsel %vm1513, %v2778, 0
        %2805 = vmatpush.msra.mxu0 0.0
        %2806 = vmatpush.msra.mxu0 0.0
        %2807 = vmatpush.msra.mxu0 0.0
        %2808 = vmatpush.msra.mxu0 0.0
        %2809 = vmatpush.msra.mxu0 0.0
        %2810 = vmatpush.msra.mxu0 0.0
        %2811 = vmatpush.msra.mxu0 0.0
        %2812 = vmatpush.msra.mxu0 0.0
        %2813 = vmatpush.msra.mxu0 0.0
        %2814 = vmatpush.msra.mxu0 0.0
        %2815 = vmatpush.msra.mxu0 0.0
        %2816 = vmatpush.msra.mxu0 0.0
        %2817 = vmatpush.msra.mxu0 0.0
        %2818 = vmatpush.msra.mxu0 0.0
        %2819 = vmatpush.msra.mxu0 0.0
        %2820 = vmatpush.msra.mxu0 %v2780
        %2821 = vmatmul.f32.gmra.mxu0 %v2782
        %v2822 = vpop.f32.mrf.mxu0
        %v2823 = vadd.f32 0.0, %v2822
        %2824 = vmatmul.f32.gmra.mxu0 %v2785
        %v2825 = vpop.f32.mrf.mxu0
        %v2826 = vadd.f32 0.0, %v2825
        %2827 = vmatmul.f32.gmra.mxu0 %v2788
        %v2828 = vpop.f32.mrf.mxu0
        %v2829 = vadd.f32 0.0, %v2828
        %2830 = vmatmul.f32.gmra.mxu0 %v2791
        %v2831 = vpop.f32.mrf.mxu0
        %v2832 = vadd.f32 0.0, %v2831
        %2833 = vmatmul.f32.gmra.mxu0 %v2794
        %v2834 = vpop.f32.mrf.mxu0
        %v2835 = vadd.f32 0.0, %v2834
        %2836 = vmatmul.f32.gmra.mxu0 %v2797
        %v2837 = vpop.f32.mrf.mxu0
        %v2838 = vadd.f32 0.0, %v2837
        %2839 = vmatmul.f32.gmra.mxu0 %v2800
        %v2840 = vpop.f32.mrf.mxu0
        %v2841 = vadd.f32 0.0, %v2840
        %2842 = vmatmul.f32.gmra.mxu0 %v2803
        %v2843 = vpop.f32.mrf.mxu0
        %v2844 = vadd.f32 0.0, %v2843
        %2845 = vdwg.mxu0
        %v2846 = vadd.f32 %v2363, %v2823
        %v2847 = vadd.f32 %v2366, %v2826
        %v2848 = vadd.f32 %v2369, %v2829
        %v2849 = vadd.f32 %v2372, %v2832
        %v2850 = vadd.f32 %v2375, %v2835
        %v2851 = vadd.f32 %v2378, %v2838
        %v2852 = vadd.f32 %v2381, %v2841
        %v2853 = vadd.f32 %v2384, %v2844
        %2854 = vrot.lane.b32.xlu0 %v1481, 104
        %v2855 = vpop.permute.xlu0 %2854
        %2856 = vrot.lane.b32.xlu0 %v1482, 104
        %v2857 = vpop.permute.xlu0 %2856
        %2858 = vrot.lane.b32.xlu0 %v1483, 104
        %v2859 = vpop.permute.xlu0 %2858
        %2860 = vrot.lane.b32.xlu0 %v1484, 104
        %v2861 = vpop.permute.xlu0 %2860
        %2862 = vrot.lane.b32.xlu0 %v1485, 104
        %v2863 = vpop.permute.xlu0 %2862
        %2864 = vrot.lane.b32.xlu0 %v1486, 104
        %v2865 = vpop.permute.xlu0 %2864
        %2866 = vrot.lane.b32.xlu0 %v1487, 104
        %v2867 = vpop.permute.xlu0 %2866
        %2868 = vrot.lane.b32.xlu0 %v1488, 104
        %v2869 = vpop.permute.xlu0 %2868
        %2870 = vrot.lane.b32.xlu0 %v1396, 72
        %v2871 = vpop.permute.xlu0 %2870
        %2872 = vrot.lane.b32.xlu0 %v1397, 72
        %v2873 = vpop.permute.xlu0 %2872
        %2874 = vrot.lane.b32.xlu0 %v1398, 72
        %v2875 = vpop.permute.xlu0 %2874
        %2876 = vrot.lane.b32.xlu0 %v1399, 72
        %v2877 = vpop.permute.xlu0 %2876
        %2878 = vrot.lane.b32.xlu0 %v1400, 72
        %v2879 = vpop.permute.xlu0 %2878
        %2880 = vrot.lane.b32.xlu0 %v1401, 72
        %v2881 = vpop.permute.xlu0 %2880
        %2882 = vrot.lane.b32.xlu0 %v1402, 72
        %v2883 = vpop.permute.xlu0 %2882
        %2884 = vrot.lane.b32.xlu0 %v1403, 72
        %v2885 = vpop.permute.xlu0 %2884
        %v2886 = vsel %vm1513, %v2855, 0
        %v2888 = vsel %vm1513, %v2857, 0
        %v2890 = vsel %vm1513, %v2859, 0
        %v2892 = vsel %vm1513, %v2861, 0
        %v2894 = vsel %vm1513, %v2863, 0
        %v2896 = vsel %vm1513, %v2865, 0
        %v2898 = vsel %vm1513, %v2867, 0
        %v2900 = vsel %vm1513, %v2869, 0
        %v2902 = vsel %vm1513, %v2871, 0
        %v2904 = vsel %vm1513, %v2873, 0
        %v2906 = vsel %vm1513, %v2875, 0
        %v2908 = vsel %vm1513, %v2877, 0
        %v2910 = vsel %vm1513, %v2879, 0
        %v2912 = vsel %vm1513, %v2881, 0
        %v2914 = vsel %vm1513, %v2883, 0
        %v2916 = vsel %vm1513, %v2885, 0
        %2918 = vmatpush.xpose.msra.mxu0 0.0
        %2919 = vmatpush.xpose.msra.mxu0 0.0
        %2920 = vmatpush.xpose.msra.mxu0 0.0
        %2921 = vmatpush.xpose.msra.mxu0 0.0
        %2922 = vmatpush.xpose.msra.mxu0 0.0
        %2923 = vmatpush.xpose.msra.mxu0 0.0
        %2924 = vmatpush.xpose.msra.mxu0 0.0
        %2925 = vmatpush.xpose.msra.mxu0 0.0
        %2926 = vmatpush.xpose.msra.mxu0 %v2916
        %2927 = vmatpush.xpose.msra.mxu0 %v2914
        %2928 = vmatpush.xpose.msra.mxu0 %v2912
        %2929 = vmatpush.xpose.msra.mxu0 %v2910
        %2930 = vmatpush.xpose.msra.mxu0 %v2908
        %2931 = vmatpush.xpose.msra.mxu0 %v2906
        %2932 = vmatpush.xpose.msra.mxu0 %v2904
        %2933 = vmatpush.xpose.msra.mxu0 %v2902
        %2934 = vmatmul.f32.gmra.mxu0 %v2886
        %v2935 = vpop.f32.mrf.mxu0
        %v2936 = vadd.f32 0.0, %v2935
        %2937 = vmatmul.f32.gmra.mxu0 %v2888
        %v2938 = vpop.f32.mrf.mxu0
        %v2939 = vadd.f32 0.0, %v2938
        %2940 = vmatmul.f32.gmra.mxu0 %v2890
        %v2941 = vpop.f32.mrf.mxu0
        %v2942 = vadd.f32 0.0, %v2941
        %2943 = vmatmul.f32.gmra.mxu0 %v2892
        %v2944 = vpop.f32.mrf.mxu0
        %v2945 = vadd.f32 0.0, %v2944
        %2946 = vmatmul.f32.gmra.mxu0 %v2894
        %v2947 = vpop.f32.mrf.mxu0
        %v2948 = vadd.f32 0.0, %v2947
        %2949 = vmatmul.f32.gmra.mxu0 %v2896
        %v2950 = vpop.f32.mrf.mxu0
        %v2951 = vadd.f32 0.0, %v2950
        %2952 = vmatmul.f32.gmra.mxu0 %v2898
        %v2953 = vpop.f32.mrf.mxu0
        %v2954 = vadd.f32 0.0, %v2953
        %2955 = vmatmul.f32.gmra.mxu0 %v2900
        %v2956 = vpop.f32.mrf.mxu0
        %v2957 = vadd.f32 0.0, %v2956
        %2958 = vdwg.mxu0
        %v2959 = vsel %vm477, %v2936, -inf
        %2960 = vmax.xlane.f32.xlu0 %v2959
        %v2961 = vpop.xlane.xlu0 %2960
        %v2962 = vsel %vm477, %v2939, -inf
        %2963 = vmax.xlane.f32.xlu0 %v2962
        %v2964 = vpop.xlane.xlu0 %2963
        %v2965 = vsel %vm477, %v2942, -inf
        %2966 = vmax.xlane.f32.xlu0 %v2965
        %v2967 = vpop.xlane.xlu0 %2966
        %v2968 = vsel %vm477, %v2945, -inf
        %2969 = vmax.xlane.f32.xlu0 %v2968
        %v2970 = vpop.xlane.xlu0 %2969
        %v2971 = vsel %vm477, %v2948, -inf
        %2972 = vmax.xlane.f32.xlu0 %v2971
        %v2973 = vpop.xlane.xlu0 %2972
        %v2974 = vsel %vm477, %v2951, -inf
        %2975 = vmax.xlane.f32.xlu0 %v2974
        %v2976 = vpop.xlane.xlu0 %2975
        %v2977 = vsel %vm477, %v2954, -inf
        %2978 = vmax.xlane.f32.xlu0 %v2977
        %v2979 = vpop.xlane.xlu0 %2978
        %v2980 = vsel %vm477, %v2957, -inf
        %2981 = vmax.xlane.f32.xlu0 %v2980
        %v2982 = vpop.xlane.xlu0 %2981
        %v2983 = vsub.f32 %v2936, %v2961
        %v2984 = vsub.f32 %v2939, %v2964
        %v2985 = vsub.f32 %v2942, %v2967
        %v2986 = vsub.f32 %v2945, %v2970
        %v2987 = vsub.f32 %v2948, %v2973
        %v2988 = vsub.f32 %v2951, %v2976
        %v2989 = vsub.f32 %v2954, %v2979
        %v2990 = vsub.f32 %v2957, %v2982
        %v2991 = vmul.f32 %v2983, 1.442695
        %v2992 = vpow.pop %v2991
        %v2993 = vmul.f32 %v2984, 1.442695
        %v2994 = vpow.pop %v2993
        %v2995 = vmul.f32 %v2985, 1.442695
        %v2996 = vpow.pop %v2995
        %v2997 = vmul.f32 %v2986, 1.442695
        %v2998 = vpow.pop %v2997
        %v2999 = vmul.f32 %v2987, 1.442695
        %v3000 = vpow.pop %v2999
        %v3001 = vmul.f32 %v2988, 1.442695
        %v3002 = vpow.pop %v3001
        %v3003 = vmul.f32 %v2989, 1.442695
        %v3004 = vpow.pop %v3003
        %v3005 = vmul.f32 %v2990, 1.442695
        %v3006 = vpow.pop %v3005
        %v3007 = vsel %vm477, %v2992, 0.0
        %3008 = vadd.xlane.f32.xlu0 %v3007
        %v3009 = vpop.xlane.xlu0 %3008
        %v3010 = vsel %vm477, %v2994, 0.0
        %3011 = vadd.xlane.f32.xlu0 %v3010
        %v3012 = vpop.xlane.xlu0 %3011
        %v3013 = vsel %vm477, %v2996, 0.0
        %3014 = vadd.xlane.f32.xlu0 %v3013
        %v3015 = vpop.xlane.xlu0 %3014
        %v3016 = vsel %vm477, %v2998, 0.0
        %3017 = vadd.xlane.f32.xlu0 %v3016
        %v3018 = vpop.xlane.xlu0 %3017
        %v3019 = vsel %vm477, %v3000, 0.0
        %3020 = vadd.xlane.f32.xlu0 %v3019
        %v3021 = vpop.xlane.xlu0 %3020
        %v3022 = vsel %vm477, %v3002, 0.0
        %3023 = vadd.xlane.f32.xlu0 %v3022
        %v3024 = vpop.xlane.xlu0 %3023
        %v3025 = vsel %vm477, %v3004, 0.0
        %3026 = vadd.xlane.f32.xlu0 %v3025
        %v3027 = vpop.xlane.xlu0 %3026
        %v3028 = vsel %vm477, %v3006, 0.0
        %3029 = vadd.xlane.f32.xlu0 %v3028
        %v3030 = vpop.xlane.xlu0 %3029
        %v3031 = vrcp.pop %v3009
        %v3032 = vmul.f32 %v3009, %v3031
        %v3033 = vsub.f32 1.0, %v3032
        %v3034 = vmul.f32 %v3031, %v3033
        %v3035 = vadd.f32 %v3031, %v3034
        %vm3036 = vweird.f32 %v3009
        %vm3037 = vweird.f32 %v3031
        %vm3038 = vmor %vm3036, %vm3037
        %v3039 = vsel %vm3038, %v3031, %v3035
        %v3040 = vand.u32 2147483647, %v3009
        %vm3041 = vcmp.eq.f32.partialorder %v3040, 8.507059e+37
        %v3042 = vand.u32 %v3009, 2147483648
        %v3043 = vor.u32 1.1754944e-38, %v3042
        %v3044 = vsel %vm3041, %v3043, %v3039
        %v3045 = vmul.f32 1.0, %v3044
        %v3046 = vrcp.pop %v3012
        %v3047 = vmul.f32 %v3012, %v3046
        %v3048 = vsub.f32 1.0, %v3047
        %v3049 = vmul.f32 %v3046, %v3048
        %v3050 = vadd.f32 %v3046, %v3049
        %vm3051 = vweird.f32 %v3012
        %vm3052 = vweird.f32 %v3046
        %vm3053 = vmor %vm3051, %vm3052
        %v3054 = vsel %vm3053, %v3046, %v3050
        %v3055 = vand.u32 2147483647, %v3012
        %vm3056 = vcmp.eq.f32.partialorder %v3055, 8.507059e+37
        %v3057 = vand.u32 %v3012, 2147483648
        %v3058 = vor.u32 1.1754944e-38, %v3057
        %v3059 = vsel %vm3056, %v3058, %v3054
        %v3060 = vmul.f32 1.0, %v3059
        %v3061 = vrcp.pop %v3015
        %v3062 = vmul.f32 %v3015, %v3061
        %v3063 = vsub.f32 1.0, %v3062
        %v3064 = vmul.f32 %v3061, %v3063
        %v3065 = vadd.f32 %v3061, %v3064
        %vm3066 = vweird.f32 %v3015
        %vm3067 = vweird.f32 %v3061
        %vm3068 = vmor %vm3066, %vm3067
        %v3069 = vsel %vm3068, %v3061, %v3065
        %v3070 = vand.u32 2147483647, %v3015
        %vm3071 = vcmp.eq.f32.partialorder %v3070, 8.507059e+37
        %v3072 = vand.u32 %v3015, 2147483648
        %v3073 = vor.u32 1.1754944e-38, %v3072
        %v3074 = vsel %vm3071, %v3073, %v3069
        %v3075 = vmul.f32 1.0, %v3074
        %v3076 = vrcp.pop %v3018
        %v3077 = vmul.f32 %v3018, %v3076
        %v3078 = vsub.f32 1.0, %v3077
        %v3079 = vmul.f32 %v3076, %v3078
        %v3080 = vadd.f32 %v3076, %v3079
        %vm3081 = vweird.f32 %v3018
        %vm3082 = vweird.f32 %v3076
        %vm3083 = vmor %vm3081, %vm3082
        %v3084 = vsel %vm3083, %v3076, %v3080
        %v3085 = vand.u32 2147483647, %v3018
        %vm3086 = vcmp.eq.f32.partialorder %v3085, 8.507059e+37
        %v3087 = vand.u32 %v3018, 2147483648
        %v3088 = vor.u32 1.1754944e-38, %v3087
        %v3089 = vsel %vm3086, %v3088, %v3084
        %v3090 = vmul.f32 1.0, %v3089
        %v3091 = vrcp.pop %v3021
        %v3092 = vmul.f32 %v3021, %v3091
        %v3093 = vsub.f32 1.0, %v3092
        %v3094 = vmul.f32 %v3091, %v3093
        %v3095 = vadd.f32 %v3091, %v3094
        %vm3096 = vweird.f32 %v3021
        %vm3097 = vweird.f32 %v3091
        %vm3098 = vmor %vm3096, %vm3097
        %v3099 = vsel %vm3098, %v3091, %v3095
        %v3100 = vand.u32 2147483647, %v3021
        %vm3101 = vcmp.eq.f32.partialorder %v3100, 8.507059e+37
        %v3102 = vand.u32 %v3021, 2147483648
        %v3103 = vor.u32 1.1754944e-38, %v3102
        %v3104 = vsel %vm3101, %v3103, %v3099
        %v3105 = vmul.f32 1.0, %v3104
        %v3106 = vrcp.pop %v3024
        %v3107 = vmul.f32 %v3024, %v3106
        %v3108 = vsub.f32 1.0, %v3107
        %v3109 = vmul.f32 %v3106, %v3108
        %v3110 = vadd.f32 %v3106, %v3109
        %vm3111 = vweird.f32 %v3024
        %vm3112 = vweird.f32 %v3106
        %vm3113 = vmor %vm3111, %vm3112
        %v3114 = vsel %vm3113, %v3106, %v3110
        %v3115 = vand.u32 2147483647, %v3024
        %vm3116 = vcmp.eq.f32.partialorder %v3115, 8.507059e+37
        %v3117 = vand.u32 %v3024, 2147483648
        %v3118 = vor.u32 1.1754944e-38, %v3117
        %v3119 = vsel %vm3116, %v3118, %v3114
        %v3120 = vmul.f32 1.0, %v3119
        %v3121 = vrcp.pop %v3027
        %v3122 = vmul.f32 %v3027, %v3121
        %v3123 = vsub.f32 1.0, %v3122
        %v3124 = vmul.f32 %v3121, %v3123
        %v3125 = vadd.f32 %v3121, %v3124
        %vm3126 = vweird.f32 %v3027
        %vm3127 = vweird.f32 %v3121
        %vm3128 = vmor %vm3126, %vm3127
        %v3129 = vsel %vm3128, %v3121, %v3125
        %v3130 = vand.u32 2147483647, %v3027
        %vm3131 = vcmp.eq.f32.partialorder %v3130, 8.507059e+37
        %v3132 = vand.u32 %v3027, 2147483648
        %v3133 = vor.u32 1.1754944e-38, %v3132
        %v3134 = vsel %vm3131, %v3133, %v3129
        %v3135 = vmul.f32 1.0, %v3134
        %v3136 = vrcp.pop %v3030
        %v3137 = vmul.f32 %v3030, %v3136
        %v3138 = vsub.f32 1.0, %v3137
        %v3139 = vmul.f32 %v3136, %v3138
        %v3140 = vadd.f32 %v3136, %v3139
        %vm3141 = vweird.f32 %v3030
        %vm3142 = vweird.f32 %v3136
        %vm3143 = vmor %vm3141, %vm3142
        %v3144 = vsel %vm3143, %v3136, %v3140
        %v3145 = vand.u32 2147483647, %v3030
        %vm3146 = vcmp.eq.f32.partialorder %v3145, 8.507059e+37
        %v3147 = vand.u32 %v3030, 2147483648
        %v3148 = vor.u32 1.1754944e-38, %v3147
        %v3149 = vsel %vm3146, %v3148, %v3144
        %v3150 = vmul.f32 1.0, %v3149
        %v3151 = vmul.f32 %v2992, %v3045
        %v3152 = vmul.f32 %v2994, %v3060
        %v3153 = vmul.f32 %v2996, %v3075
        %v3154 = vmul.f32 %v2998, %v3090
        %v3155 = vmul.f32 %v3000, %v3105
        %v3156 = vmul.f32 %v3002, %v3120
        %v3157 = vmul.f32 %v3004, %v3135
        %v3158 = vmul.f32 %v3006, %v3150
        %3159 = vrot.lane.b32.xlu0 %v1396, 104
        %v3160 = vpop.permute.xlu0 %3159
        %3161 = vrot.lane.b32.xlu0 %v1397, 104
        %v3162 = vpop.permute.xlu0 %3161
        %3163 = vrot.lane.b32.xlu0 %v1398, 104
        %v3164 = vpop.permute.xlu0 %3163
        %3165 = vrot.lane.b32.xlu0 %v1399, 104
        %v3166 = vpop.permute.xlu0 %3165
        %3167 = vrot.lane.b32.xlu0 %v1400, 104
        %v3168 = vpop.permute.xlu0 %3167
        %3169 = vrot.lane.b32.xlu0 %v1401, 104
        %v3170 = vpop.permute.xlu0 %3169
        %3171 = vrot.lane.b32.xlu0 %v1402, 104
        %v3172 = vpop.permute.xlu0 %3171
        %3173 = vrot.lane.b32.xlu0 %v1403, 104
        %v3174 = vpop.permute.xlu0 %3173
        %v3184 = vsel %vm477, %v3151, 0
        %v3187 = vsel %vm477, %v3152, 0
        %v3190 = vsel %vm477, %v3153, 0
        %v3193 = vsel %vm477, %v3154, 0
        %v3196 = vsel %vm477, %v3155, 0
        %v3199 = vsel %vm477, %v3156, 0
        %v3202 = vsel %vm477, %v3157, 0
        %v3205 = vsel %vm477, %v3158, 0
        %3207 = vmatpush.msra.mxu0 0.0
        %3208 = vmatpush.msra.mxu0 0.0
        %3209 = vmatpush.msra.mxu0 0.0
        %3210 = vmatpush.msra.mxu0 0.0
        %3211 = vmatpush.msra.mxu0 0.0
        %3212 = vmatpush.msra.mxu0 0.0
        %3213 = vmatpush.msra.mxu0 0.0
        %3214 = vmatpush.msra.mxu0 0.0
        %3215 = vmatpush.msra.mxu0 %v3174
        %3216 = vmatpush.msra.mxu0 %v3172
        %3217 = vmatpush.msra.mxu0 %v3170
        %3218 = vmatpush.msra.mxu0 %v3168
        %3219 = vmatpush.msra.mxu0 %v3166
        %3220 = vmatpush.msra.mxu0 %v3164
        %3221 = vmatpush.msra.mxu0 %v3162
        %3222 = vmatpush.msra.mxu0 %v3160
        %3223 = vmatmul.f32.gmra.mxu0 %v3184
        %v3224 = vpop.f32.mrf.mxu0
        %v3225 = vadd.f32 0.0, %v3224
        %3226 = vmatmul.f32.gmra.mxu0 %v3187
        %v3227 = vpop.f32.mrf.mxu0
        %v3228 = vadd.f32 0.0, %v3227
        %3229 = vmatmul.f32.gmra.mxu0 %v3190
        %v3230 = vpop.f32.mrf.mxu0
        %v3231 = vadd.f32 0.0, %v3230
        %3232 = vmatmul.f32.gmra.mxu0 %v3193
        %v3233 = vpop.f32.mrf.mxu0
        %v3234 = vadd.f32 0.0, %v3233
        %3235 = vmatmul.f32.gmra.mxu0 %v3196
        %v3236 = vpop.f32.mrf.mxu0
        %v3237 = vadd.f32 0.0, %v3236
        %3238 = vmatmul.f32.gmra.mxu0 %v3199
        %v3239 = vpop.f32.mrf.mxu0
        %v3240 = vadd.f32 0.0, %v3239
        %3241 = vmatmul.f32.gmra.mxu0 %v3202
        %v3242 = vpop.f32.mrf.mxu0
        %v3243 = vadd.f32 0.0, %v3242
        %3244 = vmatmul.f32.gmra.mxu0 %v3205
        %v3245 = vpop.f32.mrf.mxu0
        %v3246 = vadd.f32 0.0, %v3245
        %3247 = vdwg.mxu0
        %v3248 = vld [vmem:[%s8 + $0x18] sm:$0xff]
        %v3250 = vsel %vm1513, %v3225, 0
        %v3253 = vsel %vm1513, %v3228, 0
        %v3256 = vsel %vm1513, %v3231, 0
        %v3259 = vsel %vm1513, %v3234, 0
        %v3262 = vsel %vm1513, %v3237, 0
        %v3265 = vsel %vm1513, %v3240, 0
        %v3268 = vsel %vm1513, %v3243, 0
        %v3271 = vsel %vm1513, %v3246, 0
        %3273 = vmatpush.msra.mxu0 0.0
        %3274 = vmatpush.msra.mxu0 0.0
        %3275 = vmatpush.msra.mxu0 0.0
        %3276 = vmatpush.msra.mxu0 0.0
        %3277 = vmatpush.msra.mxu0 0.0
        %3278 = vmatpush.msra.mxu0 0.0
        %3279 = vmatpush.msra.mxu0 0.0
        %3280 = vmatpush.msra.mxu0 0.0
        %3281 = vmatpush.msra.mxu0 0.0
        %3282 = vmatpush.msra.mxu0 0.0
        %3283 = vmatpush.msra.mxu0 0.0
        %3284 = vmatpush.msra.mxu0 0.0
        %3285 = vmatpush.msra.mxu0 0.0
        %3286 = vmatpush.msra.mxu0 0.0
        %3287 = vmatpush.msra.mxu0 0.0
        %3288 = vmatpush.msra.mxu0 %v3248
        %3289 = vmatmul.f32.gmra.mxu0 %v3250
        %v3290 = vpop.f32.mrf.mxu0
        %v3291 = vadd.f32 0.0, %v3290
        %3292 = vmatmul.f32.gmra.mxu0 %v3253
        %v3293 = vpop.f32.mrf.mxu0
        %v3294 = vadd.f32 0.0, %v3293
        %3295 = vmatmul.f32.gmra.mxu0 %v3256
        %v3296 = vpop.f32.mrf.mxu0
        %v3297 = vadd.f32 0.0, %v3296
        %3298 = vmatmul.f32.gmra.mxu0 %v3259
        %v3299 = vpop.f32.mrf.mxu0
        %v3300 = vadd.f32 0.0, %v3299
        %3301 = vmatmul.f32.gmra.mxu0 %v3262
        %v3302 = vpop.f32.mrf.mxu0
        %v3303 = vadd.f32 0.0, %v3302
        %3304 = vmatmul.f32.gmra.mxu0 %v3265
        %v3305 = vpop.f32.mrf.mxu0
        %v3306 = vadd.f32 0.0, %v3305
        %3307 = vmatmul.f32.gmra.mxu0 %v3268
        %v3308 = vpop.f32.mrf.mxu0
        %v3309 = vadd.f32 0.0, %v3308
        %3310 = vmatmul.f32.gmra.mxu0 %v3271
        %v3311 = vpop.f32.mrf.mxu0
        %v3312 = vadd.f32 0.0, %v3311
        %3313 = vdwg.mxu0
        %v3314 = vadd.f32 %v2846, %v3291
        %v3315 = vadd.f32 %v2847, %v3294
        %v3316 = vadd.f32 %v2848, %v3297
        %v3317 = vadd.f32 %v2849, %v3300
        %v3318 = vadd.f32 %v2850, %v3303
        %v3319 = vadd.f32 %v2851, %v3306
        %v3320 = vadd.f32 %v2852, %v3309
        %v3321 = vadd.f32 %v2853, %v3312
        %v3322 = vld [vmem:[%s9] sm:$0x1]
        %v3324 = vperm.slane %v3322, 0
        %v3326 = vmul.f32 %v3314, %v3324
        %v3327 = vmul.f32 %v3315, %v3324
        %v3328 = vmul.f32 %v3316, %v3324
        %v3329 = vmul.f32 %v3317, %v3324
        %v3330 = vmul.f32 %v3318, %v3324
        %v3331 = vmul.f32 %v3319, %v3324
        %v3332 = vmul.f32 %v3320, %v3324
        %v3333 = vmul.f32 %v3321, %v3324
        %v3334 = vadd.f32 %v449, %v3326
        %v3335 = vadd.f32 %v450, %v3327
        %v3336 = vadd.f32 %v451, %v3328
        %v3337 = vadd.f32 %v452, %v3329
        %v3338 = vadd.f32 %v453, %v3330
        %v3339 = vadd.f32 %v454, %v3331
        %v3340 = vadd.f32 %v455, %v3332
        %v3341 = vadd.f32 %v456, %v3333
        %v3342 = vld [vmem:[%s10] sm:$0x1]
        %v3344 = vperm.slane %v3342, 0
        %v3346 = vadd.f32 %v3334, %v3344
        %v3347 = vadd.f32 %v3335, %v3344
        %v3348 = vadd.f32 %v3336, %v3344
        %v3349 = vadd.f32 %v3337, %v3344
        %v3350 = vadd.f32 %v3338, %v3344
        %v3351 = vadd.f32 %v3339, %v3344
        %v3352 = vadd.f32 %v3340, %v3344
        %v3353 = vadd.f32 %v3341, %v3344
        %3354 = vst.msk [vmem:[%s448] sm:$0xff] %vm477, %v3346
        %3355 = vst.msk [vmem:[%s448 + $0x8] sm:$0xff] %vm477, %v3347
        %3356 = vst.msk [vmem:[%s448 + $0x10] sm:$0xff] %vm477, %v3348
        %3357 = vst.msk [vmem:[%s448 + $0x18] sm:$0xff] %vm477, %v3349
        %3358 = vst.msk [vmem:[%s448 + $0x20] sm:$0xff] %vm477, %v3350
        %3359 = vst.msk [vmem:[%s448 + $0x28] sm:$0xff] %vm477, %v3351
        %3360 = vst.msk [vmem:[%s448 + $0x30] sm:$0xff] %vm477, %v3352
        %3361 = vst.msk [vmem:[%s448 + $0x38] sm:$0xff] %vm477, %v3353
        %s3362 = sand.u32 %s280, 1
        %s3363 = scalar_lea.sflag [#allocation4], %s3362
        %s3364 = sand.u32 %s280, 1
        %s3365 = smul.addr %s3364, 64
        %s3366 = scalar_lea.vmem [#allocation7], %s3365
        // Predicated region
        $region73: #{tpu_custom_call.1} parent=63 // pred_check
          %p3367 = pneg %p290
        $region74: #{tpu_custom_call.1} parent=63 // pred_check_branch
          %3369 = sbr.rel (%p3367) target = $region76
        $region75: #{tpu_custom_call.1} parent=63 // pred_region
          %3371 = vsyncadd %s3363, 0
          %s3372 = smul.addr %s31, 8
          %s3373 = smul.addr %s3372, 8
          %s3374 = scalar_lea.hbm %s11, %s3373
          %s3375 = sshll.u32 %s3366, 4
          %s3376 = int_to_ptr.vmem [resolvable:$true] %s3375
          %s3377 = sshll.u32 %s3374, 4
          %s3378 = int_to_ptr.hbm [resolvable:$true] %s3377
          %3383 = dma.vmem_to_hbm [thread:$0]  %s3376, 1024, %s3378, %s3363, 128, 128, 8
        $region76: #{tpu_custom_call.1} parent=63 // pred_fallthru
          _
      $region64: #{tpu_custom_call.1} parent=5 // pred_fallthru
        _
      %p3384 = scmp.le.s32.totalorder 2, %s26
      // Predicated region
      $region77: #{tpu_custom_call.1} parent=5 // pred_check
        %p3385 = pneg %p3384
      $region78: #{tpu_custom_call.1} parent=5 // pred_check_branch
        %3387 = sbr.rel (%p3385) target = $region80
      $region79: #{tpu_custom_call.1} parent=5 // pred_region
        %s3388 = ssub.s32 %s26, 2
        // Predicated region
        $region81: #{tpu_custom_call.1} parent=79 // pred_check
          %p3389 = pneg %p296
        $region82: #{tpu_custom_call.1} parent=79 // pred_check_branch
          %3391 = sbr.rel (%p3389) target = $region84
        $region83: #{tpu_custom_call.1} parent=79 // pred_region
          %s3392 = sand.u32 %s281, 1
          %s3393 = scalar_lea.sflag [#allocation4], %s3392
          %s3394 = sand.u32 %s281, 1
          %s3395 = smul.addr %s3394, 64
          %s3396 = scalar_lea.vmem [#allocation7], %s3395
          %3398 = dma.done %s3393, 1024
        $region84: #{tpu_custom_call.1} parent=79 // pred_fallthru
          _
      $region80: #{tpu_custom_call.1} parent=5 // pred_fallthru
        _
    $region6: #{tpu_custom_call.1} parent=1 // loop_footer
      %s30 = sadd.s32 1, %s26
    $region7: #{tpu_custom_call.1} parent=1 // loop_footer_branch
      %25 = sbr.rel target = $region3
    $region8: #{tpu_custom_call.1} parent=1 // loop_exit
      _
    %3399 = vsyncpa [#allocation3], 1
    %s3400 = scalar_lea.sflag [#allocation3], 1
    %3401 = vsyncpa %s3400, 1
    %3402 = vsyncpa [#allocation6], 1
    %s3403 = scalar_lea.sflag [#allocation6], 1
    %3404 = vsyncpa %s3403, 1
    %3405 = vsyncpa [#allocation4], 1
    %s3406 = scalar_lea.sflag [#allocation4], 1
    %3407 = vsyncpa %s3406, 1

</llo_original>
